<compile_context>
chip_gen: v5e
topology: v5e:2x2
jax: 0.10.0
libtpu: 0.0.40
codegen_flags: <defaults>
</compile_context>

<pallas_src>
import functools

import numpy as np
import jax
import jax.numpy as jnp
from jax.experimental import pallas as pl
from jax.experimental.pallas import tpu as pltpu

_NEG = -1.0e30    # finite "-inf": exp(_NEG + anything reasonable) == 0, no NaN hazard
_TINY = 1.0e-30   # clamp before log so pix_val == 0 (or -eps from rounding) stays finite


# ----------------------------------------------------------------------------
# Glue helpers (rotations & pixel grid) — deterministic, numpy only.
# ----------------------------------------------------------------------------
def _eulers(view):
    if view == "muti":
        return [
            np.array([0.0, 0.0, 0.0]),
            np.array([0.0, np.pi / 2, 0.0]),
            np.array([0.0, np.pi, 0.0]),
            np.array([0.0, np.pi * 3 / 2, 0.0]),
            np.array([0.0, 0.0, np.pi / 2]),
            np.array([0.0, 0.0, np.pi * 3 / 2]),
        ]
    return [np.array([0.0, 0.0, 0.0])]


def _rot_from_euler_zyx(euler):
    # scipy Rotation.from_euler('zyx', [a, b, c]) — lowercase => extrinsic:
    # rotate about fixed z by a, then fixed y by b, then fixed x by c.
    a, b, c = float(euler[0]), float(euler[1]), float(euler[2])
    ca, sa = np.cos(a), np.sin(a)
    cb, sb = np.cos(b), np.sin(b)
    cc, sc = np.cos(c), np.sin(c)
    Rz = np.array([[ca, -sa, 0.0], [sa, ca, 0.0], [0.0, 0.0, 1.0]])
    Ry = np.array([[cb, 0.0, sb], [0.0, 1.0, 0.0], [-sb, 0.0, cb]])
    Rx = np.array([[1.0, 0.0, 0.0], [0.0, cc, -sc], [0.0, sc, cc]])
    return (Rx @ Ry @ Rz).astype(np.float32)


def _pixel_grid(w):
    idx = np.arange(w * w)
    i, j = idx // w, idx % w
    pix = np.stack([j, i], axis=1).astype(np.float32)            # (W2, 2) = (x, y)
    pix = (pix - w // 2 + 0.5) / (w // 2)
    return pix


# ----------------------------------------------------------------------------
# Pallas kernel + wrapper
# ----------------------------------------------------------------------------
@functools.partial(jax.jit, static_argnames=("rho", "w", "view", "pblk"))
def registration_render(src_pred, tgt_pcd, *, rho, w, view="muti", pblk=None):
    assert w % 64 == 0, "module assumes w is a multiple of 64"
    w2 = w * w
    if pblk is None:
        pblk = min(w2, 4096)       # full image in one block at w = 64
    assert w2 % pblk == 0 and pblk % 128 == 0

    eulers = _eulers(view)
    rots = jnp.asarray(np.stack([_rot_from_euler_zyx(e) for e in eulers]))   # (V,3,3)
    V = rots.shape[0]

    reg = jnp.concatenate([src_pred, tgt_pcd], axis=0).astype(jnp.float32)   # (N,3)
    src_n = int(src_pred.shape[0])
    N = int(reg.shape[0])

    # Rotate all points for every view: x = (R @ reg.T).T   (tiny 3x3 glue matmul)
    x = jnp.einsum("vij,nj->vni", rots, reg,
                   precision=jax.lax.Precision.HIGHEST)                      # (V,N,3)

    depth = x[..., 2]                                                        # (V,N)
    dmin = jnp.min(depth, axis=1, keepdims=True)
    dmax = jnp.max(depth, axis=1, keepdims=True)
    # NOTE: matches the reference exactly; dmax == dmin would NaN in both.
    pix_val = 1.0 - (depth - dmin) / (dmax - dmin)                           # (V,N)

    # log-domain per-point value; mask other-group / padded points with a large
    # finite negative so they never win the max (no inf arithmetic anywhere).
    lpv = jnp.log(jnp.maximum(pix_val, _TINY))                               # (V,N)
    is_src = (jnp.arange(N) < src_n)[None, :]
    lpv_s = jnp.where(is_src, lpv, _NEG)
    lpv_t = jnp.where(is_src, _NEG, lpv)

    n_pad = ((N + 7) // 8) * 8
    pad = n_pad - N

    def _pad2(a, fill):
        return jnp.pad(a, ((0, 0), (0, pad)), constant_values=fill)

    # Pack the four per-point channels into one (V, n_pad, 4) tensor:
    #   [:, :, 0] = x,  [:, :, 1] = y,  [:, :, 2] = log pv (src),  [:, :, 3] = log pv (tgt)
    pts = jnp.stack(
        [_pad2(x[..., 0], 0.0), _pad2(x[..., 1], 0.0),
         _pad2(lpv_s, _NEG), _pad2(lpv_t, _NEG)],
        axis=-1).astype(jnp.float32)                                         # (V, n_pad, 4)

    pix = _pixel_grid(w)                                                     # (W2, 2)
    gxy = jnp.asarray(np.ascontiguousarray(pix.T))                           # (2, W2)

    coef = float(rho) ** 2 / 2.0
    npb = w2 // pblk

    def kernel(pts_ref, g_ref, out_ref):
        # pts_ref: (1, n_pad, 4); g_ref: (2, pblk); out_ref: (1, 2, pblk)
        p = pts_ref[0]                               # (n_pad, 4)
        px = p[:, 0:1]                               # (n_pad, 1)
        py = p[:, 1:2]
        ls = p[:, 2:3]                               # log pix_val, src-masked
        lt = p[:, 3:4]                               # log pix_val, tgt-masked
        gx = g_ref[0:1, :]                           # (1, pblk)
        gy = g_ref[1:2, :]

        dx = px - gx                                 # (n_pad, pblk)
        dy = py - gy
        base = (dx * dx + dy * dy) * (-coef)         # -d^2/2 * rho^2

        s = jnp.max(base + ls, axis=0, keepdims=True)    # (1, pblk)
        t = jnp.max(base + lt, axis=0, keepdims=True)

        # single exp per (pixel, channel) + single store of the whole block
        img = jnp.exp(jnp.concatenate([s, t], axis=0))   # (2, pblk)
        out_ref[0] = img * 2.0 - 1.0                     # (v - 0.5) / 0.5

    pts_spec = pl.BlockSpec((1, n_pad, 4), lambda v, b: (v, 0, 0))
    g_spec = pl.BlockSpec((2, pblk), lambda v, b: (0, b))
    out_spec = pl.BlockSpec((1, 2, pblk), lambda v, b: (v, 0, b))

    out = pl.pallas_call(
        kernel,
        out_shape=jax.ShapeDtypeStruct((V, 2, w2), jnp.float32),
        grid_spec=pltpu.PrefetchScalarGridSpec(
            num_scalar_prefetch=0,
            grid=(V, npb),                    # (6, 1) at w = 64
            in_specs=[pts_spec, g_spec],
            out_specs=out_spec,
        ),
        compiler_params=pltpu.CompilerParams(
            dimension_semantics=("parallel", "parallel")),
    )(pts, gxy)

    return out.reshape(V, 2, w, w)


# ----------------------------------------------------------------------------
# Pure numpy reference (mirrors the PyTorch forward exactly)
# ----------------------------------------------------------------------------
def reference_np(src, tgt, rho, w, view="muti"):
    eulers = _eulers(view)
    reg = np.concatenate([src, tgt], axis=0).astype(np.float32)
    src_n = src.shape[0]
    pix = _pixel_grid(w)
    imgs = []
    for e in eulers:
        R = _rot_from_euler_zyx(e)
        x = (R @ reg.T).T
        depth = x[:, 2]
        dmin, dmax = depth.min(), depth.max()
        pv = 1.0 - (depth - dmin) / (dmax - dmin)
        d2 = ((x[:, None, :2] - pix[None, :, :]) ** 2).sum(-1)   # (N, W2)
        wt = np.exp(-d2 / 2.0 * rho ** 2)
        s = (pv[:src_n, None] * wt[:src_n]).max(0)
        t = (pv[src_n:, None] * wt[src_n:]).max(0)
        img = np.stack([s.reshape(w, w), t.reshape(w, w)], 0)
        imgs.append((img - 0.5) / 0.5)
    return np.stack(imgs, 0).astype(np.float32)


if __name__ == "__main__":
    key = jax.random.PRNGKey(0)
    k1, k2 = jax.random.split(key)
    # small, deterministic point clouds in roughly [-1, 1]
    src_pred = jax.random.normal(k1, (30, 3), dtype=jnp.float32) * 0.5
    tgt_pcd = jax.random.normal(k2, (37, 3), dtype=jnp.float32) * 0.5

    rho, w = 8.0, 64

    out = registration_render(src_pred, tgt_pcd, rho=rho, w=w, view="muti")
    out = jax.block_until_ready(out)

    ref = reference_np(np.asarray(src_pred), np.asarray(tgt_pcd), rho, w, view="muti")
    assert out.shape == ref.shape == (6, 2, w, w)
    np.testing.assert_allclose(np.asarray(out), ref, rtol=3e-4, atol=3e-4)

    print("KERNEL_OK")
</pallas_src>

<mosaic_0001>
module attributes {stable_mosaic.version = 11 : i64} {
  func.func @kernel(%arg0: i32, %arg1: i32, %arg2: memref<1x72x4xf32, #tpu.memory_space<vmem>>, %arg3: memref<2x4096xf32, #tpu.memory_space<vmem>>, %arg4: memref<1x2x4096xf32, #tpu.memory_space<vmem>>) attributes {dimension_semantics = [#tpu.dimension_semantics<parallel>, #tpu.dimension_semantics<parallel>], iteration_bounds = array<i64: 6, 1>, scalar_prefetch = 0 : i64, scratch_operands = 0 : i64, tpu.core_type = #tpu.core_type<tc>, window_params = [{transform_indices = @transform_0, window_bounds = array<i64: 1, 72, 4>}, {transform_indices = @transform_1, window_bounds = array<i64: 2, 4096>}, {transform_indices = @transform_2, window_bounds = array<i64: 1, 2, 4096>}]} {
    %c0 = arith.constant 0 : index
    %c0_0 = arith.constant 0 : index
    %c0_1 = arith.constant 0 : index
    %0 = vector.load %arg2[%c0, %c0_0, %c0_1] : memref<1x72x4xf32, #tpu.memory_space<vmem>>, vector<1x72x4xf32>
    %1 = vector.shape_cast %0 : vector<1x72x4xf32> to vector<72x4xf32>
    %2 = vector.extract_strided_slice %1 {offsets = [0, 0], sizes = [72, 1], strides = [1, 1]} : vector<72x4xf32> to vector<72x1xf32>
    %3 = vector.extract_strided_slice %1 {offsets = [0, 1], sizes = [72, 1], strides = [1, 1]} : vector<72x4xf32> to vector<72x1xf32>
    %4 = vector.extract_strided_slice %1 {offsets = [0, 2], sizes = [72, 1], strides = [1, 1]} : vector<72x4xf32> to vector<72x1xf32>
    %5 = vector.extract_strided_slice %1 {offsets = [0, 3], sizes = [72, 1], strides = [1, 1]} : vector<72x4xf32> to vector<72x1xf32>
    %c0_2 = arith.constant 0 : index
    %c0_3 = arith.constant 0 : index
    %6 = vector.load %arg3[%c0_2, %c0_3] : memref<2x4096xf32, #tpu.memory_space<vmem>>, vector<1x4096xf32>
    %c1 = arith.constant 1 : index
    %c0_4 = arith.constant 0 : index
    %7 = vector.load %arg3[%c1, %c0_4] : memref<2x4096xf32, #tpu.memory_space<vmem>>, vector<1x4096xf32>
    %8 = vector.broadcast %2 : vector<72x1xf32> to vector<72x4096xf32>
    %9 = vector.broadcast %6 : vector<1x4096xf32> to vector<72x4096xf32>
    %10 = arith.subf %8, %9 : vector<72x4096xf32>
    %11 = vector.broadcast %3 : vector<72x1xf32> to vector<72x4096xf32>
    %12 = vector.broadcast %7 : vector<1x4096xf32> to vector<72x4096xf32>
    %13 = arith.subf %11, %12 : vector<72x4096xf32>
    %14 = arith.mulf %10, %10 : vector<72x4096xf32>
    %15 = arith.mulf %13, %13 : vector<72x4096xf32>
    %16 = arith.addf %14, %15 : vector<72x4096xf32>
    %cst = arith.constant -3.200000e+01 : f32
    %17 = vector.broadcast %cst : f32 to vector<72x4096xf32>
    %18 = arith.mulf %16, %17 : vector<72x4096xf32>
    %19 = vector.broadcast %4 : vector<72x1xf32> to vector<72x4096xf32>
    %20 = arith.addf %18, %19 : vector<72x4096xf32>
    %cst_5 = arith.constant dense<0xFF800000> : vector<4096xf32>
    %21 = vector.multi_reduction <maximumf>, %20, %cst_5 [0] : vector<72x4096xf32> to vector<4096xf32>
    %22 = vector.shape_cast %21 : vector<4096xf32> to vector<1x4096xf32>
    %23 = vector.broadcast %5 : vector<72x1xf32> to vector<72x4096xf32>
    %24 = arith.addf %18, %23 : vector<72x4096xf32>
    %cst_6 = arith.constant dense<0xFF800000> : vector<4096xf32>
    %25 = vector.multi_reduction <maximumf>, %24, %cst_6 [0] : vector<72x4096xf32> to vector<4096xf32>
    %26 = vector.shape_cast %25 : vector<4096xf32> to vector<1x4096xf32>
    %27 = tpu.concatenate %22, %26 in 0 : vector<1x4096xf32>, vector<1x4096xf32> -> vector<2x4096xf32>
    %28 = math.exp %27 : vector<2x4096xf32>
    %cst_7 = arith.constant 2.000000e+00 : f32
    %29 = vector.broadcast %cst_7 : f32 to vector<2x4096xf32>
    %30 = arith.mulf %28, %29 : vector<2x4096xf32>
    %cst_8 = arith.constant 1.000000e+00 : f32
    %31 = vector.broadcast %cst_8 : f32 to vector<2x4096xf32>
    %32 = arith.subf %30, %31 : vector<2x4096xf32>
    %c0_9 = arith.constant 0 : index
    %c0_10 = arith.constant 0 : index
    %c0_11 = arith.constant 0 : index
    %33 = vector.load %arg4[%c0_9, %c0_10, %c0_11] : memref<1x2x4096xf32, #tpu.memory_space<vmem>>, vector<1x2x4096xf32>
    %34 = vector.shape_cast %33 : vector<1x2x4096xf32> to vector<2x4096xf32>
    %35 = vector.shape_cast %32 : vector<2x4096xf32> to vector<1x2x4096xf32>
    tpu.vector_store %arg4[%c0_9, %c0_10, %c0_11], %35 {strides = array<i32>} : memref<1x2x4096xf32, #tpu.memory_space<vmem>>, vector<1x2x4096xf32>,
    return
  }
  func.func @transform_0(%arg0: i32, %arg1: i32) -> (i32, i32, i32) {
    %c0_i32 = arith.constant 0 : i32
    %c0_i32_0 = arith.constant 0 : i32
    %c0_i32_1 = arith.constant 0 : i32
    return %arg0, %c0_i32, %c0_i32_0 : i32, i32, i32
  }
  func.func @transform_1(%arg0: i32, %arg1: i32) -> (i32, i32) {
    %c0_i32 = arith.constant 0 : i32
    %c0_i32_0 = arith.constant 0 : i32
    return %c0_i32, %arg1 : i32, i32
  }
  func.func @transform_2(%arg0: i32, %arg1: i32) -> (i32, i32, i32) {
    %c0_i32 = arith.constant 0 : i32
    %c0_i32_0 = arith.constant 0 : i32
    return %arg0, %c0_i32, %arg1 : i32, i32, i32
  }
}

</mosaic_0001>

<llo_original>
// kernel: sub.0
$region0: #{sub.0}
  #allocation0 [shape = 's32[1]{0}', space=sflag, size = 0x4, scoped, tag = 'scoped memory for sub.0']
  %s0 = inlined_call_operand.vmem [shape: f32[6], index: 0, kind: input, shape index: {}]
  %s1 = inlined_call_operand.vmem [shape: f32[6], index: 1, kind: input, shape index: {}]
  %s2 = inlined_call_operand.vmem [shape: f32[6], index: 2, kind: output, shape index: {}]
  %v3 = vld [vmem:[%s0] sm:$0x1]
  %v4 = vld [vmem:[%s1] sm:$0x1]
  %5 = xla_tuple %v3, %v4
  %6 = xla_tuple %5
  %v7 = vsub.f32 %v3, %v4
  %8 = xla_tuple %v7
  %9 = vst [vmem:[%s2] sm:$0x1] %v7

// kernel: registration_render.1
$region0: #{registration_render.1}
  #allocation0 [shape = 'u32[]', space=smem, size = 0x4, offset = 0x4, fixed_abs, tag = 'smem constant byte address 0x4 - core index']
  #allocation1 [shape = 'u32[72,128]{1,0:T(1,128)}', space=vmem, size = 0x9000, scoped, tag = 'internal scratch']
  %s0 = inlined_call_operand.vmem [shape: f32[6,72,4], index: 0, kind: input, shape index: {}]
  %s1 = inlined_call_operand.vmem [shape: f32[2,4096], index: 1, kind: input, shape index: {}]
  %s2 = inlined_call_operand.vmem [shape: f32[6,2,4096], index: 2, kind: output, shape index: {}]
  %s3 = sld [smem:[#allocation0]]
  $region41: #{registration_render.1} parent=0
    _
  %s5 = ssub.s32 1, %s3
  %s6 = scalar_select 0, %s5, %s3
  loop: start=0, step=1, limit=8
  $region2: #{registration_render.1} parent=0 // loop_pre_header
    _
  $region3: #{registration_render.1} parent=0 // loop_header
    %s8 = sphi 0, %s12
    %p9 = scmp.ge.s32.totalorder %s8, 8
    %s15 = sphi 0, %s27
    %s16 = sphi 0, %s23
    %s17 = sphi 0, %s15
    %s18 = sphi 0, %s16
    %s19 = sphi 0, %s17
    %s20 = sphi 0, %s18
    %s30 = sphi 0, %s32
    %s33 = sphi 0, %s30
    %s34 = sphi 0, %s33
    %s50 = sphi 0, %s34
    %s56 = sphi 0, %s58
    %s59 = sphi 0, %s56
    %s60 = sphi 0, %s59
    %s76 = sphi 0, %s60
    %s84 = sphi 0, %s86
    %s87 = sphi 0, %s84
    %s88 = sphi 0, %s87
    %s104 = sphi 0, %s88
  $region4: #{registration_render.1} parent=0 // loop_header_branch
    %11 = sbr.rel (%p9) target = $region8
  $region5: #{registration_render.1} parent=0 // loop_body
    %s13 = ssub.s32 %s8, 1
    %s14 = ssub.s32 %s8, 2
    %s21 = sadd.s32 1, %s16
    %p22 = scmp.ge.s32.totalorder %s21, 1
    %s23 = scalar_select %p22, 0, %s21
    %s24 = sadd.s32 1, %s15
    %s25 = scalar_select %p22, %s24, %s15
    %p26 = scmp.ge.s32.totalorder %s25, 6
    %s27 = scalar_select %p26, 0, %s25
    %s28 = ssub.s32 %s15, %s27
    %p29 = scmp.eq.s32.totalorder %s28, 0
    %s31 = sadd.s32 %s30, 1
    %s32 = scalar_select %p29, %s30, %s31
    %p35 = pneg %p29
    %p36 = scmp.eq.s32.totalorder %s8, 5
    %p37 = por %p35, %p36
    %p38 = scmp.ne.s32.totalorder %s30, %s33
    %p39 = scmp.eq.s32.totalorder %s8, 0
    %p40 = por %p38, %p39
    %p41 = scmp.ne.s32.totalorder %s30, %s33
    %p42 = scmp.eq.s32.totalorder %s13, 5
    %p43 = por %p41, %p42
    %p44 = scmp.ne.s32.totalorder %s33, %s34
    %p45 = scmp.eq.s32.totalorder %s13, 0
    %p46 = por %p44, %p45
    %p47 = scmp.ne.s32.totalorder %s33, %s34
    %p48 = scmp.eq.s32.totalorder %s14, 5
    %p49 = por %p47, %p48
    %p51 = scmp.ne.s32.totalorder %s34, %s50
    %p52 = scmp.eq.s32.totalorder %s14, 0
    %p53 = por %p51, %p52
    %s54 = ssub.s32 %s16, %s23
    %p55 = scmp.eq.s32.totalorder %s54, 0
    %s57 = sadd.s32 %s56, 1
    %s58 = scalar_select %p55, %s56, %s57
    %p61 = pneg %p55
    %p62 = scmp.eq.s32.totalorder %s8, 5
    %p63 = por %p61, %p62
    %p64 = scmp.ne.s32.totalorder %s56, %s59
    %p65 = scmp.eq.s32.totalorder %s8, 0
    %p66 = por %p64, %p65
    %p67 = scmp.ne.s32.totalorder %s56, %s59
    %p68 = scmp.eq.s32.totalorder %s13, 5
    %p69 = por %p67, %p68
    %p70 = scmp.ne.s32.totalorder %s59, %s60
    %p71 = scmp.eq.s32.totalorder %s13, 0
    %p72 = por %p70, %p71
    %p73 = scmp.ne.s32.totalorder %s59, %s60
    %p74 = scmp.eq.s32.totalorder %s14, 5
    %p75 = por %p73, %p74
    %p77 = scmp.ne.s32.totalorder %s60, %s76
    %p78 = scmp.eq.s32.totalorder %s14, 0
    %p79 = por %p77, %p78
    %s80 = ssub.s32 %s15, %s27
    %s81 = ssub.s32 %s16, %s23
    %s82 = sor.u32 %s80, %s81
    %p83 = scmp.eq.s32.totalorder %s82, 0
    %s85 = sadd.s32 %s84, 1
    %s86 = scalar_select %p83, %s84, %s85
    %p89 = pneg %p83
    %p90 = scmp.eq.s32.totalorder %s8, 5
    %p91 = por %p89, %p90
    %p92 = scmp.ne.s32.totalorder %s84, %s87
    %p93 = scmp.eq.s32.totalorder %s8, 0
    %p94 = por %p92, %p93
    %p95 = scmp.ne.s32.totalorder %s84, %s87
    %p96 = scmp.eq.s32.totalorder %s13, 5
    %p97 = por %p95, %p96
    %p98 = scmp.ne.s32.totalorder %s87, %s88
    %p99 = scmp.eq.s32.totalorder %s13, 0
    %p100 = por %p98, %p99
    %p101 = scmp.ne.s32.totalorder %s87, %s88
    %p102 = scmp.eq.s32.totalorder %s14, 5
    %p103 = por %p101, %p102
    %p105 = scmp.ne.s32.totalorder %s88, %s104
    %p106 = scmp.eq.s32.totalorder %s14, 0
    %p107 = por %p105, %p106
    %p108 = scmp.le.s32.totalorder 1, %s8
    %p109 = scmp.lt.s32.totalorder %s8, 7
    %p110 = pnand %p108, %p109
    %p111 = pneg %p110
    // Predicated region
    $region9: #{registration_render.1} parent=5 // pred_check
      _
    $region10: #{registration_render.1} parent=5 // pred_check_branch
      %113 = sbr.rel (%p110) target = $region12
    $region11: #{registration_render.1} parent=5 // pred_region
      %s114 = ssub.s32 %s8, 1
      // Predicated region
      $region13: #{registration_render.1} parent=11 // pred_check
        %p115 = pneg %p72
      $region14: #{registration_render.1} parent=11 // pred_check_branch
        %117 = sbr.rel (%p115) target = $region16
      $region15: #{registration_render.1} parent=11 // pred_region
        %s118 = smul.u32 32, %s18
        %p119 = scmp.lt.s32.totalorder %s118, 31
        %s120 = scalar_select %p119, %s118, 31
        %s121 = smul.addr %s120, 2
        %s122 = scalar_lea.vmem %s1, %s121
        %s123 = smul.u32 32, %s18
      $region16: #{registration_render.1} parent=11 // pred_fallthru
        _
    $region12: #{registration_render.1} parent=5 // pred_fallthru
      _
    %p124 = scmp.lt.s32.totalorder %s8, 6
    // Predicated region
    $region17: #{registration_render.1} parent=5 // pred_check
      %p125 = pneg %p124
    $region18: #{registration_render.1} parent=5 // pred_check_branch
      %127 = sbr.rel (%p125) target = $region20
    $region19: #{registration_render.1} parent=5 // pred_region
      // Predicated region
      $region21: #{registration_render.1} parent=19 // pred_check
        %p128 = pneg %p40
      $region22: #{registration_render.1} parent=19 // pred_check_branch
        %130 = sbr.rel (%p128) target = $region24
      $region23: #{registration_render.1} parent=19 // pred_region
        %p131 = scmp.lt.s32.totalorder %s15, 5
        %s132 = scalar_select %p131, %s15, 5
        %s133 = smul.addr %s132, 9
        %s134 = smul.addr %s133, 8
        %s135 = scalar_lea.vmem %s0, %s134
      $region24: #{registration_render.1} parent=19 // pred_fallthru
        _
    $region20: #{registration_render.1} parent=5 // pred_fallthru
      _
    %p136 = scmp.le.s32.totalorder 1, %s8
    %p137 = scmp.lt.s32.totalorder %s8, 7
    %p138 = pnand %p136, %p137
    %p139 = pneg %p138
    // Predicated region
    $region25: #{registration_render.1} parent=5 // pred_check
      _
    $region26: #{registration_render.1} parent=5 // pred_check_branch
      %141 = sbr.rel (%p138) target = $region28
    $region27: #{registration_render.1} parent=5 // pred_region
      %s142 = ssub.s32 %s8, 1
      %p143 = scmp.lt.s32.totalorder %s17, 5
      %s144 = scalar_select %p143, %s17, 5
      %s145 = smul.addr %s144, 9
      %s146 = smul.addr %s145, 8
      %s147 = scalar_lea.vmem %s0, %s146
      %p148 = pneg %p46
      %p149 = pneg %p43
      %s150 = smul.u32 32, %s18
      %p151 = scmp.lt.s32.totalorder %s150, 31
      %s152 = scalar_select %p151, %s150, 31
      %s153 = smul.addr %s152, 2
      %s154 = scalar_lea.vmem %s1, %s153
      %p155 = pneg %p72
      %p156 = pneg %p69
      %p157 = pneg %p100
      %p158 = pneg %p97
      %s159 = smul.u32 32, %s18
      %p160 = scmp.lt.s32.totalorder %s17, 5
      %s161 = scalar_select %p160, %s17, 5
      %p162 = scmp.lt.s32.totalorder %s159, 31
      %s163 = scalar_select %p162, %s159, 31
      %s164 = smul.addr %s161, 32
      %s165 = sadd.s32 %s163, %s164
      %s166 = smul.addr %s165, 2
      %s167 = scalar_lea.vmem %s2, %s166
      %p168 = scmp.lt.s32.totalorder %s17, 5
      %s169 = scalar_select %p168, %s17, 5
      %s170 = smul.addr %s169, 9
      %s171 = smul.addr %s170, 8
      %s172 = scalar_lea.vmem %s0, %s171
      %s173 = smul.u32 32, %s18
      %p174 = scmp.lt.s32.totalorder %s173, 31
      %s175 = scalar_select %p174, %s173, 31
      %s176 = smul.addr %s175, 2
      %s177 = scalar_lea.vmem %s1, %s176
      %s178 = smul.u32 32, %s18
      %s179 = smul.u32 32, %s18
      %p180 = scmp.lt.s32.totalorder %s17, 5
      %s181 = scalar_select %p180, %s17, 5
      %p182 = scmp.lt.s32.totalorder %s179, 31
      %s183 = scalar_select %p182, %s179, 31
      %s184 = smul.addr %s181, 32
      %s185 = sadd.s32 %s183, %s184
      %s186 = smul.addr %s185, 2
      %s187 = scalar_lea.vmem %s2, %s186
      %s188 = smul.u32 32, %s18
      %v189 = vld [vmem:[%s172] sm:$0xff]
      %v190 = vld [vmem:[%s172 + $0x8] sm:$0xff]
      %v191 = vld [vmem:[%s172 + $0x10] sm:$0xff]
      %v192 = vld [vmem:[%s172 + $0x18] sm:$0xff]
      %v193 = vld [vmem:[%s172 + $0x20] sm:$0xff]
      %v194 = vld [vmem:[%s172 + $0x28] sm:$0xff]
      %v195 = vld [vmem:[%s172 + $0x30] sm:$0xff]
      %v196 = vld [vmem:[%s172 + $0x38] sm:$0xff]
      %v197 = vld [vmem:[%s172 + $0x40] sm:$0xff]
      %v198 = vld [vmem:[%s177] ss:$2 sm:$0xff]
      %s199 = scalar_lea.vmem %s177, 16
      %v200 = vld [vmem:[%s199] ss:$2 sm:$0xff]
      %s201 = scalar_lea.vmem %s177, 32
      %v202 = vld [vmem:[%s201] ss:$2 sm:$0xff]
      %s203 = scalar_lea.vmem %s177, 48
      %v204 = vld [vmem:[%s203] ss:$2 sm:$0xff]
      %s205 = scalar_lea.vmem %s177, 1
      %v206 = vld [vmem:[%s205] ss:$2 sm:$0xff]
      %s207 = scalar_lea.vmem %s177, 17
      %v208 = vld [vmem:[%s207] ss:$2 sm:$0xff]
      %s209 = scalar_lea.vmem %s177, 33
      %v210 = vld [vmem:[%s209] ss:$2 sm:$0xff]
      %s211 = scalar_lea.vmem %s177, 49
      %v212 = vld [vmem:[%s211] ss:$2 sm:$0xff]
      %214 = vset.pattern.permute.xlu0 0
      %215 = vperm.xlu0 %214, %v189
      %v216 = vpop.permute.xlu0 %215
      %219 = vset.pattern.permute.xlu0 0
      %220 = vperm.xlu0 %219, %v190
      %v221 = vpop.permute.xlu0 %220
      %224 = vset.pattern.permute.xlu0 0
      %225 = vperm.xlu0 %224, %v191
      %v226 = vpop.permute.xlu0 %225
      %229 = vset.pattern.permute.xlu0 0
      %230 = vperm.xlu0 %229, %v192
      %v231 = vpop.permute.xlu0 %230
      %234 = vset.pattern.permute.xlu0 0
      %235 = vperm.xlu0 %234, %v193
      %v236 = vpop.permute.xlu0 %235
      %239 = vset.pattern.permute.xlu0 0
      %240 = vperm.xlu0 %239, %v194
      %v241 = vpop.permute.xlu0 %240
      %244 = vset.pattern.permute.xlu0 0
      %245 = vperm.xlu0 %244, %v195
      %v246 = vpop.permute.xlu0 %245
      %249 = vset.pattern.permute.xlu0 0
      %250 = vperm.xlu0 %249, %v196
      %v251 = vpop.permute.xlu0 %250
      %254 = vset.pattern.permute.xlu0 0
      %255 = vperm.xlu0 %254, %v197
      %v256 = vpop.permute.xlu0 %255
      %v262 = vperm.slane %v198, 0
      %v263 = vperm.slane %v198, 1
      %v264 = vperm.slane %v198, 2
      %v265 = vperm.slane %v198, 3
      %v266 = vperm.slane %v198, 4
      %v267 = vperm.slane %v198, 5
      %v268 = vperm.slane %v198, 6
      %v269 = vperm.slane %v198, 7
      %v270 = vperm.slane %v200, 0
      %v271 = vperm.slane %v200, 1
      %v272 = vperm.slane %v200, 2
      %v273 = vperm.slane %v200, 3
      %v274 = vperm.slane %v200, 4
      %v275 = vperm.slane %v200, 5
      %v276 = vperm.slane %v200, 6
      %v277 = vperm.slane %v200, 7
      %v278 = vperm.slane %v202, 0
      %v279 = vperm.slane %v202, 1
      %v280 = vperm.slane %v202, 2
      %v281 = vperm.slane %v202, 3
      %v282 = vperm.slane %v202, 4
      %v283 = vperm.slane %v202, 5
      %v284 = vperm.slane %v202, 6
      %v285 = vperm.slane %v202, 7
      %v286 = vperm.slane %v204, 0
      %v287 = vperm.slane %v204, 1
      %v288 = vperm.slane %v204, 2
      %v289 = vperm.slane %v204, 3
      %v290 = vperm.slane %v204, 4
      %v291 = vperm.slane %v204, 5
      %v292 = vperm.slane %v204, 6
      %v293 = vperm.slane %v204, 7
      %v326 = vsub.f32 %v216, %v262
      %v327 = vsub.f32 %v216, %v263
      %v328 = vsub.f32 %v216, %v264
      %v329 = vsub.f32 %v216, %v265
      %v330 = vsub.f32 %v216, %v266
      %v331 = vsub.f32 %v216, %v267
      %v332 = vsub.f32 %v216, %v268
      %v333 = vsub.f32 %v216, %v269
      %v334 = vsub.f32 %v216, %v270
      %v335 = vsub.f32 %v216, %v271
      %v336 = vsub.f32 %v216, %v272
      %v337 = vsub.f32 %v216, %v273
      %v338 = vsub.f32 %v216, %v274
      %v339 = vsub.f32 %v216, %v275
      %v340 = vsub.f32 %v216, %v276
      %v341 = vsub.f32 %v216, %v277
      %v342 = vsub.f32 %v216, %v278
      %v343 = vsub.f32 %v216, %v279
      %v344 = vsub.f32 %v216, %v280
      %v345 = vsub.f32 %v216, %v281
      %v346 = vsub.f32 %v216, %v282
      %v347 = vsub.f32 %v216, %v283
      %v348 = vsub.f32 %v216, %v284
      %v349 = vsub.f32 %v216, %v285
      %v350 = vsub.f32 %v216, %v286
      %v351 = vsub.f32 %v216, %v287
      %v352 = vsub.f32 %v216, %v288
      %v353 = vsub.f32 %v216, %v289
      %v354 = vsub.f32 %v216, %v290
      %v355 = vsub.f32 %v216, %v291
      %v356 = vsub.f32 %v216, %v292
      %v357 = vsub.f32 %v216, %v293
      %v358 = vsub.f32 %v221, %v262
      %v359 = vsub.f32 %v221, %v263
      %v360 = vsub.f32 %v221, %v264
      %v361 = vsub.f32 %v221, %v265
      %v362 = vsub.f32 %v221, %v266
      %v363 = vsub.f32 %v221, %v267
      %v364 = vsub.f32 %v221, %v268
      %v365 = vsub.f32 %v221, %v269
      %v366 = vsub.f32 %v221, %v270
      %v367 = vsub.f32 %v221, %v271
      %v368 = vsub.f32 %v221, %v272
      %v369 = vsub.f32 %v221, %v273
      %v370 = vsub.f32 %v221, %v274
      %v371 = vsub.f32 %v221, %v275
      %v372 = vsub.f32 %v221, %v276
      %v373 = vsub.f32 %v221, %v277
      %v374 = vsub.f32 %v221, %v278
      %v375 = vsub.f32 %v221, %v279
      %v376 = vsub.f32 %v221, %v280
      %v377 = vsub.f32 %v221, %v281
      %v378 = vsub.f32 %v221, %v282
      %v379 = vsub.f32 %v221, %v283
      %v380 = vsub.f32 %v221, %v284
      %v381 = vsub.f32 %v221, %v285
      %v382 = vsub.f32 %v221, %v286
      %v383 = vsub.f32 %v221, %v287
      %v384 = vsub.f32 %v221, %v288
      %v385 = vsub.f32 %v221, %v289
      %v386 = vsub.f32 %v221, %v290
      %v387 = vsub.f32 %v221, %v291
      %v388 = vsub.f32 %v221, %v292
      %v389 = vsub.f32 %v221, %v293
      %v390 = vsub.f32 %v226, %v262
      %v391 = vsub.f32 %v226, %v263
      %v392 = vsub.f32 %v226, %v264
      %v393 = vsub.f32 %v226, %v265
      %v394 = vsub.f32 %v226, %v266
      %v395 = vsub.f32 %v226, %v267
      %v396 = vsub.f32 %v226, %v268
      %v397 = vsub.f32 %v226, %v269
      %v398 = vsub.f32 %v226, %v270
      %v399 = vsub.f32 %v226, %v271
      %v400 = vsub.f32 %v226, %v272
      %v401 = vsub.f32 %v226, %v273
      %v402 = vsub.f32 %v226, %v274
      %v403 = vsub.f32 %v226, %v275
      %v404 = vsub.f32 %v226, %v276
      %v405 = vsub.f32 %v226, %v277
      %v406 = vsub.f32 %v226, %v278
      %v407 = vsub.f32 %v226, %v279
      %v408 = vsub.f32 %v226, %v280
      %v409 = vsub.f32 %v226, %v281
      %v410 = vsub.f32 %v226, %v282
      %v411 = vsub.f32 %v226, %v283
      %v412 = vsub.f32 %v226, %v284
      %v413 = vsub.f32 %v226, %v285
      %v414 = vsub.f32 %v226, %v286
      %v415 = vsub.f32 %v226, %v287
      %v416 = vsub.f32 %v226, %v288
      %v417 = vsub.f32 %v226, %v289
      %v418 = vsub.f32 %v226, %v290
      %v419 = vsub.f32 %v226, %v291
      %v420 = vsub.f32 %v226, %v292
      %v421 = vsub.f32 %v226, %v293
      %v422 = vsub.f32 %v231, %v262
      %v423 = vsub.f32 %v231, %v263
      %v424 = vsub.f32 %v231, %v264
      %v425 = vsub.f32 %v231, %v265
      %v426 = vsub.f32 %v231, %v266
      %v427 = vsub.f32 %v231, %v267
      %v428 = vsub.f32 %v231, %v268
      %v429 = vsub.f32 %v231, %v269
      %v430 = vsub.f32 %v231, %v270
      %v431 = vsub.f32 %v231, %v271
      %v432 = vsub.f32 %v231, %v272
      %v433 = vsub.f32 %v231, %v273
      %v434 = vsub.f32 %v231, %v274
      %v435 = vsub.f32 %v231, %v275
      %v436 = vsub.f32 %v231, %v276
      %v437 = vsub.f32 %v231, %v277
      %v438 = vsub.f32 %v231, %v278
      %v439 = vsub.f32 %v231, %v279
      %v440 = vsub.f32 %v231, %v280
      %v441 = vsub.f32 %v231, %v281
      %v442 = vsub.f32 %v231, %v282
      %v443 = vsub.f32 %v231, %v283
      %v444 = vsub.f32 %v231, %v284
      %v445 = vsub.f32 %v231, %v285
      %v446 = vsub.f32 %v231, %v286
      %v447 = vsub.f32 %v231, %v287
      %v448 = vsub.f32 %v231, %v288
      %v449 = vsub.f32 %v231, %v289
      %v450 = vsub.f32 %v231, %v290
      %v451 = vsub.f32 %v231, %v291
      %v452 = vsub.f32 %v231, %v292
      %v453 = vsub.f32 %v231, %v293
      %v454 = vsub.f32 %v236, %v262
      %v455 = vsub.f32 %v236, %v263
      %v456 = vsub.f32 %v236, %v264
      %v457 = vsub.f32 %v236, %v265
      %v458 = vsub.f32 %v236, %v266
      %v459 = vsub.f32 %v236, %v267
      %v460 = vsub.f32 %v236, %v268
      %v461 = vsub.f32 %v236, %v269
      %v462 = vsub.f32 %v236, %v270
      %v463 = vsub.f32 %v236, %v271
      %v464 = vsub.f32 %v236, %v272
      %v465 = vsub.f32 %v236, %v273
      %v466 = vsub.f32 %v236, %v274
      %v467 = vsub.f32 %v236, %v275
      %v468 = vsub.f32 %v236, %v276
      %v469 = vsub.f32 %v236, %v277
      %v470 = vsub.f32 %v236, %v278
      %v471 = vsub.f32 %v236, %v279
      %v472 = vsub.f32 %v236, %v280
      %v473 = vsub.f32 %v236, %v281
      %v474 = vsub.f32 %v236, %v282
      %v475 = vsub.f32 %v236, %v283
      %v476 = vsub.f32 %v236, %v284
      %v477 = vsub.f32 %v236, %v285
      %v478 = vsub.f32 %v236, %v286
      %v479 = vsub.f32 %v236, %v287
      %v480 = vsub.f32 %v236, %v288
      %v481 = vsub.f32 %v236, %v289
      %v482 = vsub.f32 %v236, %v290
      %v483 = vsub.f32 %v236, %v291
      %v484 = vsub.f32 %v236, %v292
      %v485 = vsub.f32 %v236, %v293
      %v486 = vsub.f32 %v241, %v262
      %v487 = vsub.f32 %v241, %v263
      %v488 = vsub.f32 %v241, %v264
      %v489 = vsub.f32 %v241, %v265
      %v490 = vsub.f32 %v241, %v266
      %v491 = vsub.f32 %v241, %v267
      %v492 = vsub.f32 %v241, %v268
      %v493 = vsub.f32 %v241, %v269
      %v494 = vsub.f32 %v241, %v270
      %v495 = vsub.f32 %v241, %v271
      %v496 = vsub.f32 %v241, %v272
      %v497 = vsub.f32 %v241, %v273
      %v498 = vsub.f32 %v241, %v274
      %v499 = vsub.f32 %v241, %v275
      %v500 = vsub.f32 %v241, %v276
      %v501 = vsub.f32 %v241, %v277
      %v502 = vsub.f32 %v241, %v278
      %v503 = vsub.f32 %v241, %v279
      %v504 = vsub.f32 %v241, %v280
      %v505 = vsub.f32 %v241, %v281
      %v506 = vsub.f32 %v241, %v282
      %v507 = vsub.f32 %v241, %v283
      %v508 = vsub.f32 %v241, %v284
      %v509 = vsub.f32 %v241, %v285
      %v510 = vsub.f32 %v241, %v286
      %v511 = vsub.f32 %v241, %v287
      %v512 = vsub.f32 %v241, %v288
      %v513 = vsub.f32 %v241, %v289
      %v514 = vsub.f32 %v241, %v290
      %v515 = vsub.f32 %v241, %v291
      %v516 = vsub.f32 %v241, %v292
      %v517 = vsub.f32 %v241, %v293
      %v518 = vsub.f32 %v246, %v262
      %v519 = vsub.f32 %v246, %v263
      %v520 = vsub.f32 %v246, %v264
      %v521 = vsub.f32 %v246, %v265
      %v522 = vsub.f32 %v246, %v266
      %v523 = vsub.f32 %v246, %v267
      %v524 = vsub.f32 %v246, %v268
      %v525 = vsub.f32 %v246, %v269
      %v526 = vsub.f32 %v246, %v270
      %v527 = vsub.f32 %v246, %v271
      %v528 = vsub.f32 %v246, %v272
      %v529 = vsub.f32 %v246, %v273
      %v530 = vsub.f32 %v246, %v274
      %v531 = vsub.f32 %v246, %v275
      %v532 = vsub.f32 %v246, %v276
      %v533 = vsub.f32 %v246, %v277
      %v534 = vsub.f32 %v246, %v278
      %v535 = vsub.f32 %v246, %v279
      %v536 = vsub.f32 %v246, %v280
      %v537 = vsub.f32 %v246, %v281
      %v538 = vsub.f32 %v246, %v282
      %v539 = vsub.f32 %v246, %v283
      %v540 = vsub.f32 %v246, %v284
      %v541 = vsub.f32 %v246, %v285
      %v542 = vsub.f32 %v246, %v286
      %v543 = vsub.f32 %v246, %v287
      %v544 = vsub.f32 %v246, %v288
      %v545 = vsub.f32 %v246, %v289
      %v546 = vsub.f32 %v246, %v290
      %v547 = vsub.f32 %v246, %v291
      %v548 = vsub.f32 %v246, %v292
      %v549 = vsub.f32 %v246, %v293
      %v550 = vsub.f32 %v251, %v262
      %v551 = vsub.f32 %v251, %v263
      %v552 = vsub.f32 %v251, %v264
      %v553 = vsub.f32 %v251, %v265
      %v554 = vsub.f32 %v251, %v266
      %v555 = vsub.f32 %v251, %v267
      %v556 = vsub.f32 %v251, %v268
      %v557 = vsub.f32 %v251, %v269
      %v558 = vsub.f32 %v251, %v270
      %v559 = vsub.f32 %v251, %v271
      %v560 = vsub.f32 %v251, %v272
      %v561 = vsub.f32 %v251, %v273
      %v562 = vsub.f32 %v251, %v274
      %v563 = vsub.f32 %v251, %v275
      %v564 = vsub.f32 %v251, %v276
      %v565 = vsub.f32 %v251, %v277
      %v566 = vsub.f32 %v251, %v278
      %v567 = vsub.f32 %v251, %v279
      %v568 = vsub.f32 %v251, %v280
      %v569 = vsub.f32 %v251, %v281
      %v570 = vsub.f32 %v251, %v282
      %v571 = vsub.f32 %v251, %v283
      %v572 = vsub.f32 %v251, %v284
      %v573 = vsub.f32 %v251, %v285
      %v574 = vsub.f32 %v251, %v286
      %v575 = vsub.f32 %v251, %v287
      %v576 = vsub.f32 %v251, %v288
      %v577 = vsub.f32 %v251, %v289
      %v578 = vsub.f32 %v251, %v290
      %v579 = vsub.f32 %v251, %v291
      %v580 = vsub.f32 %v251, %v292
      %v581 = vsub.f32 %v251, %v293
      %v582 = vsub.f32 %v256, %v262
      %v583 = vsub.f32 %v256, %v263
      %v584 = vsub.f32 %v256, %v264
      %v585 = vsub.f32 %v256, %v265
      %v586 = vsub.f32 %v256, %v266
      %v587 = vsub.f32 %v256, %v267
      %v588 = vsub.f32 %v256, %v268
      %v589 = vsub.f32 %v256, %v269
      %v590 = vsub.f32 %v256, %v270
      %v591 = vsub.f32 %v256, %v271
      %v592 = vsub.f32 %v256, %v272
      %v593 = vsub.f32 %v256, %v273
      %v594 = vsub.f32 %v256, %v274
      %v595 = vsub.f32 %v256, %v275
      %v596 = vsub.f32 %v256, %v276
      %v597 = vsub.f32 %v256, %v277
      %v598 = vsub.f32 %v256, %v278
      %v599 = vsub.f32 %v256, %v279
      %v600 = vsub.f32 %v256, %v280
      %v601 = vsub.f32 %v256, %v281
      %v602 = vsub.f32 %v256, %v282
      %v603 = vsub.f32 %v256, %v283
      %v604 = vsub.f32 %v256, %v284
      %v605 = vsub.f32 %v256, %v285
      %v606 = vsub.f32 %v256, %v286
      %v607 = vsub.f32 %v256, %v287
      %v608 = vsub.f32 %v256, %v288
      %v609 = vsub.f32 %v256, %v289
      %v610 = vsub.f32 %v256, %v290
      %v611 = vsub.f32 %v256, %v291
      %v612 = vsub.f32 %v256, %v292
      %v613 = vsub.f32 %v256, %v293
      %614 = vset.pattern.permute.xlu0 1
      %615 = vperm.xlu0 %614, %v189
      %v616 = vpop.permute.xlu0 %615
      %618 = vset.pattern.permute.xlu0 1
      %619 = vperm.xlu0 %618, %v190
      %v620 = vpop.permute.xlu0 %619
      %622 = vset.pattern.permute.xlu0 1
      %623 = vperm.xlu0 %622, %v191
      %v624 = vpop.permute.xlu0 %623
      %626 = vset.pattern.permute.xlu0 1
      %627 = vperm.xlu0 %626, %v192
      %v628 = vpop.permute.xlu0 %627
      %630 = vset.pattern.permute.xlu0 1
      %631 = vperm.xlu0 %630, %v193
      %v632 = vpop.permute.xlu0 %631
      %634 = vset.pattern.permute.xlu0 1
      %635 = vperm.xlu0 %634, %v194
      %v636 = vpop.permute.xlu0 %635
      %638 = vset.pattern.permute.xlu0 1
      %639 = vperm.xlu0 %638, %v195
      %v640 = vpop.permute.xlu0 %639
      %642 = vset.pattern.permute.xlu0 1
      %643 = vperm.xlu0 %642, %v196
      %v644 = vpop.permute.xlu0 %643
      %646 = vset.pattern.permute.xlu0 1
      %647 = vperm.xlu0 %646, %v197
      %v648 = vpop.permute.xlu0 %647
      %v654 = vperm.slane %v206, 0
      %v655 = vperm.slane %v206, 1
      %v656 = vperm.slane %v206, 2
      %v657 = vperm.slane %v206, 3
      %v658 = vperm.slane %v206, 4
      %v659 = vperm.slane %v206, 5
      %v660 = vperm.slane %v206, 6
      %v661 = vperm.slane %v206, 7
      %v662 = vperm.slane %v208, 0
      %v663 = vperm.slane %v208, 1
      %v664 = vperm.slane %v208, 2
      %v665 = vperm.slane %v208, 3
      %v666 = vperm.slane %v208, 4
      %v667 = vperm.slane %v208, 5
      %v668 = vperm.slane %v208, 6
      %v669 = vperm.slane %v208, 7
      %v670 = vperm.slane %v210, 0
      %v671 = vperm.slane %v210, 1
      %v672 = vperm.slane %v210, 2
      %v673 = vperm.slane %v210, 3
      %v674 = vperm.slane %v210, 4
      %v675 = vperm.slane %v210, 5
      %v676 = vperm.slane %v210, 6
      %v677 = vperm.slane %v210, 7
      %v678 = vperm.slane %v212, 0
      %v679 = vperm.slane %v212, 1
      %v680 = vperm.slane %v212, 2
      %v681 = vperm.slane %v212, 3
      %v682 = vperm.slane %v212, 4
      %v683 = vperm.slane %v212, 5
      %v684 = vperm.slane %v212, 6
      %v685 = vperm.slane %v212, 7
      %v718 = vsub.f32 %v616, %v654
      %v719 = vsub.f32 %v616, %v655
      %v720 = vsub.f32 %v616, %v656
      %v721 = vsub.f32 %v616, %v657
      %v722 = vsub.f32 %v616, %v658
      %v723 = vsub.f32 %v616, %v659
      %v724 = vsub.f32 %v616, %v660
      %v725 = vsub.f32 %v616, %v661
      %v726 = vsub.f32 %v616, %v662
      %v727 = vsub.f32 %v616, %v663
      %v728 = vsub.f32 %v616, %v664
      %v729 = vsub.f32 %v616, %v665
      %v730 = vsub.f32 %v616, %v666
      %v731 = vsub.f32 %v616, %v667
      %v732 = vsub.f32 %v616, %v668
      %v733 = vsub.f32 %v616, %v669
      %v734 = vsub.f32 %v616, %v670
      %v735 = vsub.f32 %v616, %v671
      %v736 = vsub.f32 %v616, %v672
      %v737 = vsub.f32 %v616, %v673
      %v738 = vsub.f32 %v616, %v674
      %v739 = vsub.f32 %v616, %v675
      %v740 = vsub.f32 %v616, %v676
      %v741 = vsub.f32 %v616, %v677
      %v742 = vsub.f32 %v616, %v678
      %v743 = vsub.f32 %v616, %v679
      %v744 = vsub.f32 %v616, %v680
      %v745 = vsub.f32 %v616, %v681
      %v746 = vsub.f32 %v616, %v682
      %v747 = vsub.f32 %v616, %v683
      %v748 = vsub.f32 %v616, %v684
      %v749 = vsub.f32 %v616, %v685
      %v750 = vsub.f32 %v620, %v654
      %v751 = vsub.f32 %v620, %v655
      %v752 = vsub.f32 %v620, %v656
      %v753 = vsub.f32 %v620, %v657
      %v754 = vsub.f32 %v620, %v658
      %v755 = vsub.f32 %v620, %v659
      %v756 = vsub.f32 %v620, %v660
      %v757 = vsub.f32 %v620, %v661
      %v758 = vsub.f32 %v620, %v662
      %v759 = vsub.f32 %v620, %v663
      %v760 = vsub.f32 %v620, %v664
      %v761 = vsub.f32 %v620, %v665
      %v762 = vsub.f32 %v620, %v666
      %v763 = vsub.f32 %v620, %v667
      %v764 = vsub.f32 %v620, %v668
      %v765 = vsub.f32 %v620, %v669
      %v766 = vsub.f32 %v620, %v670
      %v767 = vsub.f32 %v620, %v671
      %v768 = vsub.f32 %v620, %v672
      %v769 = vsub.f32 %v620, %v673
      %v770 = vsub.f32 %v620, %v674
      %v771 = vsub.f32 %v620, %v675
      %v772 = vsub.f32 %v620, %v676
      %v773 = vsub.f32 %v620, %v677
      %v774 = vsub.f32 %v620, %v678
      %v775 = vsub.f32 %v620, %v679
      %v776 = vsub.f32 %v620, %v680
      %v777 = vsub.f32 %v620, %v681
      %v778 = vsub.f32 %v620, %v682
      %v779 = vsub.f32 %v620, %v683
      %v780 = vsub.f32 %v620, %v684
      %v781 = vsub.f32 %v620, %v685
      %v782 = vsub.f32 %v624, %v654
      %v783 = vsub.f32 %v624, %v655
      %v784 = vsub.f32 %v624, %v656
      %v785 = vsub.f32 %v624, %v657
      %v786 = vsub.f32 %v624, %v658
      %v787 = vsub.f32 %v624, %v659
      %v788 = vsub.f32 %v624, %v660
      %v789 = vsub.f32 %v624, %v661
      %v790 = vsub.f32 %v624, %v662
      %v791 = vsub.f32 %v624, %v663
      %v792 = vsub.f32 %v624, %v664
      %v793 = vsub.f32 %v624, %v665
      %v794 = vsub.f32 %v624, %v666
      %v795 = vsub.f32 %v624, %v667
      %v796 = vsub.f32 %v624, %v668
      %v797 = vsub.f32 %v624, %v669
      %v798 = vsub.f32 %v624, %v670
      %v799 = vsub.f32 %v624, %v671
      %v800 = vsub.f32 %v624, %v672
      %v801 = vsub.f32 %v624, %v673
      %v802 = vsub.f32 %v624, %v674
      %v803 = vsub.f32 %v624, %v675
      %v804 = vsub.f32 %v624, %v676
      %v805 = vsub.f32 %v624, %v677
      %v806 = vsub.f32 %v624, %v678
      %v807 = vsub.f32 %v624, %v679
      %v808 = vsub.f32 %v624, %v680
      %v809 = vsub.f32 %v624, %v681
      %v810 = vsub.f32 %v624, %v682
      %v811 = vsub.f32 %v624, %v683
      %v812 = vsub.f32 %v624, %v684
      %v813 = vsub.f32 %v624, %v685
      %v814 = vsub.f32 %v628, %v654
      %v815 = vsub.f32 %v628, %v655
      %v816 = vsub.f32 %v628, %v656
      %v817 = vsub.f32 %v628, %v657
      %v818 = vsub.f32 %v628, %v658
      %v819 = vsub.f32 %v628, %v659
      %v820 = vsub.f32 %v628, %v660
      %v821 = vsub.f32 %v628, %v661
      %v822 = vsub.f32 %v628, %v662
      %v823 = vsub.f32 %v628, %v663
      %v824 = vsub.f32 %v628, %v664
      %v825 = vsub.f32 %v628, %v665
      %v826 = vsub.f32 %v628, %v666
      %v827 = vsub.f32 %v628, %v667
      %v828 = vsub.f32 %v628, %v668
      %v829 = vsub.f32 %v628, %v669
      %v830 = vsub.f32 %v628, %v670
      %v831 = vsub.f32 %v628, %v671
      %v832 = vsub.f32 %v628, %v672
      %v833 = vsub.f32 %v628, %v673
      %v834 = vsub.f32 %v628, %v674
      %v835 = vsub.f32 %v628, %v675
      %v836 = vsub.f32 %v628, %v676
      %v837 = vsub.f32 %v628, %v677
      %v838 = vsub.f32 %v628, %v678
      %v839 = vsub.f32 %v628, %v679
      %v840 = vsub.f32 %v628, %v680
      %v841 = vsub.f32 %v628, %v681
      %v842 = vsub.f32 %v628, %v682
      %v843 = vsub.f32 %v628, %v683
      %v844 = vsub.f32 %v628, %v684
      %v845 = vsub.f32 %v628, %v685
      %v846 = vsub.f32 %v632, %v654
      %v847 = vsub.f32 %v632, %v655
      %v848 = vsub.f32 %v632, %v656
      %v849 = vsub.f32 %v632, %v657
      %v850 = vsub.f32 %v632, %v658
      %v851 = vsub.f32 %v632, %v659
      %v852 = vsub.f32 %v632, %v660
      %v853 = vsub.f32 %v632, %v661
      %v854 = vsub.f32 %v632, %v662
      %v855 = vsub.f32 %v632, %v663
      %v856 = vsub.f32 %v632, %v664
      %v857 = vsub.f32 %v632, %v665
      %v858 = vsub.f32 %v632, %v666
      %v859 = vsub.f32 %v632, %v667
      %v860 = vsub.f32 %v632, %v668
      %v861 = vsub.f32 %v632, %v669
      %v862 = vsub.f32 %v632, %v670
      %v863 = vsub.f32 %v632, %v671
      %v864 = vsub.f32 %v632, %v672
      %v865 = vsub.f32 %v632, %v673
      %v866 = vsub.f32 %v632, %v674
      %v867 = vsub.f32 %v632, %v675
      %v868 = vsub.f32 %v632, %v676
      %v869 = vsub.f32 %v632, %v677
      %v870 = vsub.f32 %v632, %v678
      %v871 = vsub.f32 %v632, %v679
      %v872 = vsub.f32 %v632, %v680
      %v873 = vsub.f32 %v632, %v681
      %v874 = vsub.f32 %v632, %v682
      %v875 = vsub.f32 %v632, %v683
      %v876 = vsub.f32 %v632, %v684
      %v877 = vsub.f32 %v632, %v685
      %v878 = vsub.f32 %v636, %v654
      %v879 = vsub.f32 %v636, %v655
      %v880 = vsub.f32 %v636, %v656
      %v881 = vsub.f32 %v636, %v657
      %v882 = vsub.f32 %v636, %v658
      %v883 = vsub.f32 %v636, %v659
      %v884 = vsub.f32 %v636, %v660
      %v885 = vsub.f32 %v636, %v661
      %v886 = vsub.f32 %v636, %v662
      %v887 = vsub.f32 %v636, %v663
      %v888 = vsub.f32 %v636, %v664
      %v889 = vsub.f32 %v636, %v665
      %v890 = vsub.f32 %v636, %v666
      %v891 = vsub.f32 %v636, %v667
      %v892 = vsub.f32 %v636, %v668
      %v893 = vsub.f32 %v636, %v669
      %v894 = vsub.f32 %v636, %v670
      %v895 = vsub.f32 %v636, %v671
      %v896 = vsub.f32 %v636, %v672
      %v897 = vsub.f32 %v636, %v673
      %v898 = vsub.f32 %v636, %v674
      %v899 = vsub.f32 %v636, %v675
      %v900 = vsub.f32 %v636, %v676
      %v901 = vsub.f32 %v636, %v677
      %v902 = vsub.f32 %v636, %v678
      %v903 = vsub.f32 %v636, %v679
      %v904 = vsub.f32 %v636, %v680
      %v905 = vsub.f32 %v636, %v681
      %v906 = vsub.f32 %v636, %v682
      %v907 = vsub.f32 %v636, %v683
      %v908 = vsub.f32 %v636, %v684
      %v909 = vsub.f32 %v636, %v685
      %v910 = vsub.f32 %v640, %v654
      %v911 = vsub.f32 %v640, %v655
      %v912 = vsub.f32 %v640, %v656
      %v913 = vsub.f32 %v640, %v657
      %v914 = vsub.f32 %v640, %v658
      %v915 = vsub.f32 %v640, %v659
      %v916 = vsub.f32 %v640, %v660
      %v917 = vsub.f32 %v640, %v661
      %v918 = vsub.f32 %v640, %v662
      %v919 = vsub.f32 %v640, %v663
      %v920 = vsub.f32 %v640, %v664
      %v921 = vsub.f32 %v640, %v665
      %v922 = vsub.f32 %v640, %v666
      %v923 = vsub.f32 %v640, %v667
      %v924 = vsub.f32 %v640, %v668
      %v925 = vsub.f32 %v640, %v669
      %v926 = vsub.f32 %v640, %v670
      %v927 = vsub.f32 %v640, %v671
      %v928 = vsub.f32 %v640, %v672
      %v929 = vsub.f32 %v640, %v673
      %v930 = vsub.f32 %v640, %v674
      %v931 = vsub.f32 %v640, %v675
      %v932 = vsub.f32 %v640, %v676
      %v933 = vsub.f32 %v640, %v677
      %v934 = vsub.f32 %v640, %v678
      %v935 = vsub.f32 %v640, %v679
      %v936 = vsub.f32 %v640, %v680
      %v937 = vsub.f32 %v640, %v681
      %v938 = vsub.f32 %v640, %v682
      %v939 = vsub.f32 %v640, %v683
      %v940 = vsub.f32 %v640, %v684
      %v941 = vsub.f32 %v640, %v685
      %v942 = vsub.f32 %v644, %v654
      %v943 = vsub.f32 %v644, %v655
      %v944 = vsub.f32 %v644, %v656
      %v945 = vsub.f32 %v644, %v657
      %v946 = vsub.f32 %v644, %v658
      %v947 = vsub.f32 %v644, %v659
      %v948 = vsub.f32 %v644, %v660
      %v949 = vsub.f32 %v644, %v661
      %v950 = vsub.f32 %v644, %v662
      %v951 = vsub.f32 %v644, %v663
      %v952 = vsub.f32 %v644, %v664
      %v953 = vsub.f32 %v644, %v665
      %v954 = vsub.f32 %v644, %v666
      %v955 = vsub.f32 %v644, %v667
      %v956 = vsub.f32 %v644, %v668
      %v957 = vsub.f32 %v644, %v669
      %v958 = vsub.f32 %v644, %v670
      %v959 = vsub.f32 %v644, %v671
      %v960 = vsub.f32 %v644, %v672
      %v961 = vsub.f32 %v644, %v673
      %v962 = vsub.f32 %v644, %v674
      %v963 = vsub.f32 %v644, %v675
      %v964 = vsub.f32 %v644, %v676
      %v965 = vsub.f32 %v644, %v677
      %v966 = vsub.f32 %v644, %v678
      %v967 = vsub.f32 %v644, %v679
      %v968 = vsub.f32 %v644, %v680
      %v969 = vsub.f32 %v644, %v681
      %v970 = vsub.f32 %v644, %v682
      %v971 = vsub.f32 %v644, %v683
      %v972 = vsub.f32 %v644, %v684
      %v973 = vsub.f32 %v644, %v685
      %v974 = vsub.f32 %v648, %v654
      %v975 = vsub.f32 %v648, %v655
      %v976 = vsub.f32 %v648, %v656
      %v977 = vsub.f32 %v648, %v657
      %v978 = vsub.f32 %v648, %v658
      %v979 = vsub.f32 %v648, %v659
      %v980 = vsub.f32 %v648, %v660
      %v981 = vsub.f32 %v648, %v661
      %v982 = vsub.f32 %v648, %v662
      %v983 = vsub.f32 %v648, %v663
      %v984 = vsub.f32 %v648, %v664
      %v985 = vsub.f32 %v648, %v665
      %v986 = vsub.f32 %v648, %v666
      %v987 = vsub.f32 %v648, %v667
      %v988 = vsub.f32 %v648, %v668
      %v989 = vsub.f32 %v648, %v669
      %v990 = vsub.f32 %v648, %v670
      %v991 = vsub.f32 %v648, %v671
      %v992 = vsub.f32 %v648, %v672
      %v993 = vsub.f32 %v648, %v673
      %v994 = vsub.f32 %v648, %v674
      %v995 = vsub.f32 %v648, %v675
      %v996 = vsub.f32 %v648, %v676
      %v997 = vsub.f32 %v648, %v677
      %v998 = vsub.f32 %v648, %v678
      %v999 = vsub.f32 %v648, %v679
      %v1000 = vsub.f32 %v648, %v680
      %v1001 = vsub.f32 %v648, %v681
      %v1002 = vsub.f32 %v648, %v682
      %v1003 = vsub.f32 %v648, %v683
      %v1004 = vsub.f32 %v648, %v684
      %v1005 = vsub.f32 %v648, %v685
      %v1006 = vmul.f32 %v326, %v326
      %v1007 = vmul.f32 %v327, %v327
      %v1008 = vmul.f32 %v328, %v328
      %v1009 = vmul.f32 %v329, %v329
      %v1010 = vmul.f32 %v330, %v330
      %v1011 = vmul.f32 %v331, %v331
      %v1012 = vmul.f32 %v332, %v332
      %v1013 = vmul.f32 %v333, %v333
      %v1014 = vmul.f32 %v334, %v334
      %v1015 = vmul.f32 %v335, %v335
      %v1016 = vmul.f32 %v336, %v336
      %v1017 = vmul.f32 %v337, %v337
      %v1018 = vmul.f32 %v338, %v338
      %v1019 = vmul.f32 %v339, %v339
      %v1020 = vmul.f32 %v340, %v340
      %v1021 = vmul.f32 %v341, %v341
      %v1022 = vmul.f32 %v342, %v342
      %v1023 = vmul.f32 %v343, %v343
      %v1024 = vmul.f32 %v344, %v344
      %v1025 = vmul.f32 %v345, %v345
      %v1026 = vmul.f32 %v346, %v346
      %v1027 = vmul.f32 %v347, %v347
      %v1028 = vmul.f32 %v348, %v348
      %v1029 = vmul.f32 %v349, %v349
      %v1030 = vmul.f32 %v350, %v350
      %v1031 = vmul.f32 %v351, %v351
      %v1032 = vmul.f32 %v352, %v352
      %v1033 = vmul.f32 %v353, %v353
      %v1034 = vmul.f32 %v354, %v354
      %v1035 = vmul.f32 %v355, %v355
      %v1036 = vmul.f32 %v356, %v356
      %v1037 = vmul.f32 %v357, %v357
      %v1038 = vmul.f32 %v358, %v358
      %v1039 = vmul.f32 %v359, %v359
      %v1040 = vmul.f32 %v360, %v360
      %v1041 = vmul.f32 %v361, %v361
      %v1042 = vmul.f32 %v362, %v362
      %v1043 = vmul.f32 %v363, %v363
      %v1044 = vmul.f32 %v364, %v364
      %v1045 = vmul.f32 %v365, %v365
      %v1046 = vmul.f32 %v366, %v366
      %v1047 = vmul.f32 %v367, %v367
      %v1048 = vmul.f32 %v368, %v368
      %v1049 = vmul.f32 %v369, %v369
      %v1050 = vmul.f32 %v370, %v370
      %v1051 = vmul.f32 %v371, %v371
      %v1052 = vmul.f32 %v372, %v372
      %v1053 = vmul.f32 %v373, %v373
      %v1054 = vmul.f32 %v374, %v374
      %v1055 = vmul.f32 %v375, %v375
      %v1056 = vmul.f32 %v376, %v376
      %v1057 = vmul.f32 %v377, %v377
      %v1058 = vmul.f32 %v378, %v378
      %v1059 = vmul.f32 %v379, %v379
      %v1060 = vmul.f32 %v380, %v380
      %v1061 = vmul.f32 %v381, %v381
      %v1062 = vmul.f32 %v382, %v382
      %v1063 = vmul.f32 %v383, %v383
      %v1064 = vmul.f32 %v384, %v384
      %v1065 = vmul.f32 %v385, %v385
      %v1066 = vmul.f32 %v386, %v386
      %v1067 = vmul.f32 %v387, %v387
      %v1068 = vmul.f32 %v388, %v388
      %v1069 = vmul.f32 %v389, %v389
      %v1070 = vmul.f32 %v390, %v390
      %v1071 = vmul.f32 %v391, %v391
      %v1072 = vmul.f32 %v392, %v392
      %v1073 = vmul.f32 %v393, %v393
      %v1074 = vmul.f32 %v394, %v394
      %v1075 = vmul.f32 %v395, %v395
      %v1076 = vmul.f32 %v396, %v396
      %v1077 = vmul.f32 %v397, %v397
      %v1078 = vmul.f32 %v398, %v398
      %v1079 = vmul.f32 %v399, %v399
      %v1080 = vmul.f32 %v400, %v400
      %v1081 = vmul.f32 %v401, %v401
      %v1082 = vmul.f32 %v402, %v402
      %v1083 = vmul.f32 %v403, %v403
      %v1084 = vmul.f32 %v404, %v404
      %v1085 = vmul.f32 %v405, %v405
      %v1086 = vmul.f32 %v406, %v406
      %v1087 = vmul.f32 %v407, %v407
      %v1088 = vmul.f32 %v408, %v408
      %v1089 = vmul.f32 %v409, %v409
      %v1090 = vmul.f32 %v410, %v410
      %v1091 = vmul.f32 %v411, %v411
      %v1092 = vmul.f32 %v412, %v412
      %v1093 = vmul.f32 %v413, %v413
      %v1094 = vmul.f32 %v414, %v414
      %v1095 = vmul.f32 %v415, %v415
      %v1096 = vmul.f32 %v416, %v416
      %v1097 = vmul.f32 %v417, %v417
      %v1098 = vmul.f32 %v418, %v418
      %v1099 = vmul.f32 %v419, %v419
      %v1100 = vmul.f32 %v420, %v420
      %v1101 = vmul.f32 %v421, %v421
      %v1102 = vmul.f32 %v422, %v422
      %v1103 = vmul.f32 %v423, %v423
      %v1104 = vmul.f32 %v424, %v424
      %v1105 = vmul.f32 %v425, %v425
      %v1106 = vmul.f32 %v426, %v426
      %v1107 = vmul.f32 %v427, %v427
      %v1108 = vmul.f32 %v428, %v428
      %v1109 = vmul.f32 %v429, %v429
      %v1110 = vmul.f32 %v430, %v430
      %v1111 = vmul.f32 %v431, %v431
      %v1112 = vmul.f32 %v432, %v432
      %v1113 = vmul.f32 %v433, %v433
      %v1114 = vmul.f32 %v434, %v434
      %v1115 = vmul.f32 %v435, %v435
      %v1116 = vmul.f32 %v436, %v436
      %v1117 = vmul.f32 %v437, %v437
      %v1118 = vmul.f32 %v438, %v438
      %v1119 = vmul.f32 %v439, %v439
      %v1120 = vmul.f32 %v440, %v440
      %v1121 = vmul.f32 %v441, %v441
      %v1122 = vmul.f32 %v442, %v442
      %v1123 = vmul.f32 %v443, %v443
      %v1124 = vmul.f32 %v444, %v444
      %v1125 = vmul.f32 %v445, %v445
      %v1126 = vmul.f32 %v446, %v446
      %v1127 = vmul.f32 %v447, %v447
      %v1128 = vmul.f32 %v448, %v448
      %v1129 = vmul.f32 %v449, %v449
      %v1130 = vmul.f32 %v450, %v450
      %v1131 = vmul.f32 %v451, %v451
      %v1132 = vmul.f32 %v452, %v452
      %v1133 = vmul.f32 %v453, %v453
      %v1134 = vmul.f32 %v454, %v454
      %v1135 = vmul.f32 %v455, %v455
      %v1136 = vmul.f32 %v456, %v456
      %v1137 = vmul.f32 %v457, %v457
      %v1138 = vmul.f32 %v458, %v458
      %v1139 = vmul.f32 %v459, %v459
      %v1140 = vmul.f32 %v460, %v460
      %v1141 = vmul.f32 %v461, %v461
      %v1142 = vmul.f32 %v462, %v462
      %v1143 = vmul.f32 %v463, %v463
      %v1144 = vmul.f32 %v464, %v464
      %v1145 = vmul.f32 %v465, %v465
      %v1146 = vmul.f32 %v466, %v466
      %v1147 = vmul.f32 %v467, %v467
      %v1148 = vmul.f32 %v468, %v468
      %v1149 = vmul.f32 %v469, %v469
      %v1150 = vmul.f32 %v470, %v470
      %v1151 = vmul.f32 %v471, %v471
      %v1152 = vmul.f32 %v472, %v472
      %v1153 = vmul.f32 %v473, %v473
      %v1154 = vmul.f32 %v474, %v474
      %v1155 = vmul.f32 %v475, %v475
      %v1156 = vmul.f32 %v476, %v476
      %v1157 = vmul.f32 %v477, %v477
      %v1158 = vmul.f32 %v478, %v478
      %v1159 = vmul.f32 %v479, %v479
      %v1160 = vmul.f32 %v480, %v480
      %v1161 = vmul.f32 %v481, %v481
      %v1162 = vmul.f32 %v482, %v482
      %v1163 = vmul.f32 %v483, %v483
      %v1164 = vmul.f32 %v484, %v484
      %v1165 = vmul.f32 %v485, %v485
      %v1166 = vmul.f32 %v486, %v486
      %v1167 = vmul.f32 %v487, %v487
      %v1168 = vmul.f32 %v488, %v488
      %v1169 = vmul.f32 %v489, %v489
      %v1170 = vmul.f32 %v490, %v490
      %v1171 = vmul.f32 %v491, %v491
      %v1172 = vmul.f32 %v492, %v492
      %v1173 = vmul.f32 %v493, %v493
      %v1174 = vmul.f32 %v494, %v494
      %v1175 = vmul.f32 %v495, %v495
      %v1176 = vmul.f32 %v496, %v496
      %v1177 = vmul.f32 %v497, %v497
      %v1178 = vmul.f32 %v498, %v498
      %v1179 = vmul.f32 %v499, %v499
      %v1180 = vmul.f32 %v500, %v500
      %v1181 = vmul.f32 %v501, %v501
      %v1182 = vmul.f32 %v502, %v502
      %v1183 = vmul.f32 %v503, %v503
      %v1184 = vmul.f32 %v504, %v504
      %v1185 = vmul.f32 %v505, %v505
      %v1186 = vmul.f32 %v506, %v506
      %v1187 = vmul.f32 %v507, %v507
      %v1188 = vmul.f32 %v508, %v508
      %v1189 = vmul.f32 %v509, %v509
      %v1190 = vmul.f32 %v510, %v510
      %v1191 = vmul.f32 %v511, %v511
      %v1192 = vmul.f32 %v512, %v512
      %v1193 = vmul.f32 %v513, %v513
      %v1194 = vmul.f32 %v514, %v514
      %v1195 = vmul.f32 %v515, %v515
      %v1196 = vmul.f32 %v516, %v516
      %v1197 = vmul.f32 %v517, %v517
      %v1198 = vmul.f32 %v518, %v518
      %v1199 = vmul.f32 %v519, %v519
      %v1200 = vmul.f32 %v520, %v520
      %v1201 = vmul.f32 %v521, %v521
      %v1202 = vmul.f32 %v522, %v522
      %v1203 = vmul.f32 %v523, %v523
      %v1204 = vmul.f32 %v524, %v524
      %v1205 = vmul.f32 %v525, %v525
      %v1206 = vmul.f32 %v526, %v526
      %v1207 = vmul.f32 %v527, %v527
      %v1208 = vmul.f32 %v528, %v528
      %v1209 = vmul.f32 %v529, %v529
      %v1210 = vmul.f32 %v530, %v530
      %v1211 = vmul.f32 %v531, %v531
      %v1212 = vmul.f32 %v532, %v532
      %v1213 = vmul.f32 %v533, %v533
      %v1214 = vmul.f32 %v534, %v534
      %v1215 = vmul.f32 %v535, %v535
      %v1216 = vmul.f32 %v536, %v536
      %v1217 = vmul.f32 %v537, %v537
      %v1218 = vmul.f32 %v538, %v538
      %v1219 = vmul.f32 %v539, %v539
      %v1220 = vmul.f32 %v540, %v540
      %v1221 = vmul.f32 %v541, %v541
      %v1222 = vmul.f32 %v542, %v542
      %v1223 = vmul.f32 %v543, %v543
      %v1224 = vmul.f32 %v544, %v544
      %v1225 = vmul.f32 %v545, %v545
      %v1226 = vmul.f32 %v546, %v546
      %v1227 = vmul.f32 %v547, %v547
      %v1228 = vmul.f32 %v548, %v548
      %v1229 = vmul.f32 %v549, %v549
      %v1230 = vmul.f32 %v550, %v550
      %v1231 = vmul.f32 %v551, %v551
      %v1232 = vmul.f32 %v552, %v552
      %v1233 = vmul.f32 %v553, %v553
      %v1234 = vmul.f32 %v554, %v554
      %v1235 = vmul.f32 %v555, %v555
      %v1236 = vmul.f32 %v556, %v556
      %v1237 = vmul.f32 %v557, %v557
      %v1238 = vmul.f32 %v558, %v558
      %v1239 = vmul.f32 %v559, %v559
      %v1240 = vmul.f32 %v560, %v560
      %v1241 = vmul.f32 %v561, %v561
      %v1242 = vmul.f32 %v562, %v562
      %v1243 = vmul.f32 %v563, %v563
      %v1244 = vmul.f32 %v564, %v564
      %v1245 = vmul.f32 %v565, %v565
      %v1246 = vmul.f32 %v566, %v566
      %v1247 = vmul.f32 %v567, %v567
      %v1248 = vmul.f32 %v568, %v568
      %v1249 = vmul.f32 %v569, %v569
      %v1250 = vmul.f32 %v570, %v570
      %v1251 = vmul.f32 %v571, %v571
      %v1252 = vmul.f32 %v572, %v572
      %v1253 = vmul.f32 %v573, %v573
      %v1254 = vmul.f32 %v574, %v574
      %v1255 = vmul.f32 %v575, %v575
      %v1256 = vmul.f32 %v576, %v576
      %v1257 = vmul.f32 %v577, %v577
      %v1258 = vmul.f32 %v578, %v578
      %v1259 = vmul.f32 %v579, %v579
      %v1260 = vmul.f32 %v580, %v580
      %v1261 = vmul.f32 %v581, %v581
      %v1262 = vmul.f32 %v582, %v582
      %v1263 = vmul.f32 %v583, %v583
      %v1264 = vmul.f32 %v584, %v584
      %v1265 = vmul.f32 %v585, %v585
      %v1266 = vmul.f32 %v586, %v586
      %v1267 = vmul.f32 %v587, %v587
      %v1268 = vmul.f32 %v588, %v588
      %v1269 = vmul.f32 %v589, %v589
      %v1270 = vmul.f32 %v590, %v590
      %v1271 = vmul.f32 %v591, %v591
      %v1272 = vmul.f32 %v592, %v592
      %v1273 = vmul.f32 %v593, %v593
      %v1274 = vmul.f32 %v594, %v594
      %v1275 = vmul.f32 %v595, %v595
      %v1276 = vmul.f32 %v596, %v596
      %v1277 = vmul.f32 %v597, %v597
      %v1278 = vmul.f32 %v598, %v598
      %v1279 = vmul.f32 %v599, %v599
      %v1280 = vmul.f32 %v600, %v600
      %v1281 = vmul.f32 %v601, %v601
      %v1282 = vmul.f32 %v602, %v602
      %v1283 = vmul.f32 %v603, %v603
      %v1284 = vmul.f32 %v604, %v604
      %v1285 = vmul.f32 %v605, %v605
      %v1286 = vmul.f32 %v606, %v606
      %v1287 = vmul.f32 %v607, %v607
      %v1288 = vmul.f32 %v608, %v608
      %v1289 = vmul.f32 %v609, %v609
      %v1290 = vmul.f32 %v610, %v610
      %v1291 = vmul.f32 %v611, %v611
      %v1292 = vmul.f32 %v612, %v612
      %v1293 = vmul.f32 %v613, %v613
      %v1294 = vmul.f32 %v718, %v718
      %v1295 = vmul.f32 %v719, %v719
      %v1296 = vmul.f32 %v720, %v720
      %v1297 = vmul.f32 %v721, %v721
      %v1298 = vmul.f32 %v722, %v722
      %v1299 = vmul.f32 %v723, %v723
      %v1300 = vmul.f32 %v724, %v724
      %v1301 = vmul.f32 %v725, %v725
      %v1302 = vmul.f32 %v726, %v726
      %v1303 = vmul.f32 %v727, %v727
      %v1304 = vmul.f32 %v728, %v728
      %v1305 = vmul.f32 %v729, %v729
      %v1306 = vmul.f32 %v730, %v730
      %v1307 = vmul.f32 %v731, %v731
      %v1308 = vmul.f32 %v732, %v732
      %v1309 = vmul.f32 %v733, %v733
      %v1310 = vmul.f32 %v734, %v734
      %v1311 = vmul.f32 %v735, %v735
      %v1312 = vmul.f32 %v736, %v736
      %v1313 = vmul.f32 %v737, %v737
      %v1314 = vmul.f32 %v738, %v738
      %v1315 = vmul.f32 %v739, %v739
      %v1316 = vmul.f32 %v740, %v740
      %v1317 = vmul.f32 %v741, %v741
      %v1318 = vmul.f32 %v742, %v742
      %v1319 = vmul.f32 %v743, %v743
      %v1320 = vmul.f32 %v744, %v744
      %v1321 = vmul.f32 %v745, %v745
      %v1322 = vmul.f32 %v746, %v746
      %v1323 = vmul.f32 %v747, %v747
      %v1324 = vmul.f32 %v748, %v748
      %v1325 = vmul.f32 %v749, %v749
      %v1326 = vmul.f32 %v750, %v750
      %v1327 = vmul.f32 %v751, %v751
      %v1328 = vmul.f32 %v752, %v752
      %v1329 = vmul.f32 %v753, %v753
      %v1330 = vmul.f32 %v754, %v754
      %v1331 = vmul.f32 %v755, %v755
      %v1332 = vmul.f32 %v756, %v756
      %v1333 = vmul.f32 %v757, %v757
      %v1334 = vmul.f32 %v758, %v758
      %v1335 = vmul.f32 %v759, %v759
      %v1336 = vmul.f32 %v760, %v760
      %v1337 = vmul.f32 %v761, %v761
      %v1338 = vmul.f32 %v762, %v762
      %v1339 = vmul.f32 %v763, %v763
      %v1340 = vmul.f32 %v764, %v764
      %v1341 = vmul.f32 %v765, %v765
      %v1342 = vmul.f32 %v766, %v766
      %v1343 = vmul.f32 %v767, %v767
      %v1344 = vmul.f32 %v768, %v768
      %v1345 = vmul.f32 %v769, %v769
      %v1346 = vmul.f32 %v770, %v770
      %v1347 = vmul.f32 %v771, %v771
      %v1348 = vmul.f32 %v772, %v772
      %v1349 = vmul.f32 %v773, %v773
      %v1350 = vmul.f32 %v774, %v774
      %v1351 = vmul.f32 %v775, %v775
      %v1352 = vmul.f32 %v776, %v776
      %v1353 = vmul.f32 %v777, %v777
      %v1354 = vmul.f32 %v778, %v778
      %v1355 = vmul.f32 %v779, %v779
      %v1356 = vmul.f32 %v780, %v780
      %v1357 = vmul.f32 %v781, %v781
      %v1358 = vmul.f32 %v782, %v782
      %v1359 = vmul.f32 %v783, %v783
      %v1360 = vmul.f32 %v784, %v784
      %v1361 = vmul.f32 %v785, %v785
      %v1362 = vmul.f32 %v786, %v786
      %v1363 = vmul.f32 %v787, %v787
      %v1364 = vmul.f32 %v788, %v788
      %v1365 = vmul.f32 %v789, %v789
      %v1366 = vmul.f32 %v790, %v790
      %v1367 = vmul.f32 %v791, %v791
      %v1368 = vmul.f32 %v792, %v792
      %v1369 = vmul.f32 %v793, %v793
      %v1370 = vmul.f32 %v794, %v794
      %v1371 = vmul.f32 %v795, %v795
      %v1372 = vmul.f32 %v796, %v796
      %v1373 = vmul.f32 %v797, %v797
      %v1374 = vmul.f32 %v798, %v798
      %v1375 = vmul.f32 %v799, %v799
      %v1376 = vmul.f32 %v800, %v800
      %v1377 = vmul.f32 %v801, %v801
      %v1378 = vmul.f32 %v802, %v802
      %v1379 = vmul.f32 %v803, %v803
      %v1380 = vmul.f32 %v804, %v804
      %v1381 = vmul.f32 %v805, %v805
      %v1382 = vmul.f32 %v806, %v806
      %v1383 = vmul.f32 %v807, %v807
      %v1384 = vmul.f32 %v808, %v808
      %v1385 = vmul.f32 %v809, %v809
      %v1386 = vmul.f32 %v810, %v810
      %v1387 = vmul.f32 %v811, %v811
      %v1388 = vmul.f32 %v812, %v812
      %v1389 = vmul.f32 %v813, %v813
      %v1390 = vmul.f32 %v814, %v814
      %v1391 = vmul.f32 %v815, %v815
      %v1392 = vmul.f32 %v816, %v816
      %v1393 = vmul.f32 %v817, %v817
      %v1394 = vmul.f32 %v818, %v818
      %v1395 = vmul.f32 %v819, %v819
      %v1396 = vmul.f32 %v820, %v820
      %v1397 = vmul.f32 %v821, %v821
      %v1398 = vmul.f32 %v822, %v822
      %v1399 = vmul.f32 %v823, %v823
      %v1400 = vmul.f32 %v824, %v824
      %v1401 = vmul.f32 %v825, %v825
      %v1402 = vmul.f32 %v826, %v826
      %v1403 = vmul.f32 %v827, %v827
      %v1404 = vmul.f32 %v828, %v828
      %v1405 = vmul.f32 %v829, %v829
      %v1406 = vmul.f32 %v830, %v830
      %v1407 = vmul.f32 %v831, %v831
      %v1408 = vmul.f32 %v832, %v832
      %v1409 = vmul.f32 %v833, %v833
      %v1410 = vmul.f32 %v834, %v834
      %v1411 = vmul.f32 %v835, %v835
      %v1412 = vmul.f32 %v836, %v836
      %v1413 = vmul.f32 %v837, %v837
      %v1414 = vmul.f32 %v838, %v838
      %v1415 = vmul.f32 %v839, %v839
      %v1416 = vmul.f32 %v840, %v840
      %v1417 = vmul.f32 %v841, %v841
      %v1418 = vmul.f32 %v842, %v842
      %v1419 = vmul.f32 %v843, %v843
      %v1420 = vmul.f32 %v844, %v844
      %v1421 = vmul.f32 %v845, %v845
      %v1422 = vmul.f32 %v846, %v846
      %v1423 = vmul.f32 %v847, %v847
      %v1424 = vmul.f32 %v848, %v848
      %v1425 = vmul.f32 %v849, %v849
      %v1426 = vmul.f32 %v850, %v850
      %v1427 = vmul.f32 %v851, %v851
      %v1428 = vmul.f32 %v852, %v852
      %v1429 = vmul.f32 %v853, %v853
      %v1430 = vmul.f32 %v854, %v854
      %v1431 = vmul.f32 %v855, %v855
      %v1432 = vmul.f32 %v856, %v856
      %v1433 = vmul.f32 %v857, %v857
      %v1434 = vmul.f32 %v858, %v858
      %v1435 = vmul.f32 %v859, %v859
      %v1436 = vmul.f32 %v860, %v860
      %v1437 = vmul.f32 %v861, %v861
      %v1438 = vmul.f32 %v862, %v862
      %v1439 = vmul.f32 %v863, %v863
      %v1440 = vmul.f32 %v864, %v864
      %v1441 = vmul.f32 %v865, %v865
      %v1442 = vmul.f32 %v866, %v866
      %v1443 = vmul.f32 %v867, %v867
      %v1444 = vmul.f32 %v868, %v868
      %v1445 = vmul.f32 %v869, %v869
      %v1446 = vmul.f32 %v870, %v870
      %v1447 = vmul.f32 %v871, %v871
      %v1448 = vmul.f32 %v872, %v872
      %v1449 = vmul.f32 %v873, %v873
      %v1450 = vmul.f32 %v874, %v874
      %v1451 = vmul.f32 %v875, %v875
      %v1452 = vmul.f32 %v876, %v876
      %v1453 = vmul.f32 %v877, %v877
      %v1454 = vmul.f32 %v878, %v878
      %v1455 = vmul.f32 %v879, %v879
      %v1456 = vmul.f32 %v880, %v880
      %v1457 = vmul.f32 %v881, %v881
      %v1458 = vmul.f32 %v882, %v882
      %v1459 = vmul.f32 %v883, %v883
      %v1460 = vmul.f32 %v884, %v884
      %v1461 = vmul.f32 %v885, %v885
      %v1462 = vmul.f32 %v886, %v886
      %v1463 = vmul.f32 %v887, %v887
      %v1464 = vmul.f32 %v888, %v888
      %v1465 = vmul.f32 %v889, %v889
      %v1466 = vmul.f32 %v890, %v890
      %v1467 = vmul.f32 %v891, %v891
      %v1468 = vmul.f32 %v892, %v892
      %v1469 = vmul.f32 %v893, %v893
      %v1470 = vmul.f32 %v894, %v894
      %v1471 = vmul.f32 %v895, %v895
      %v1472 = vmul.f32 %v896, %v896
      %v1473 = vmul.f32 %v897, %v897
      %v1474 = vmul.f32 %v898, %v898
      %v1475 = vmul.f32 %v899, %v899
      %v1476 = vmul.f32 %v900, %v900
      %v1477 = vmul.f32 %v901, %v901
      %v1478 = vmul.f32 %v902, %v902
      %v1479 = vmul.f32 %v903, %v903
      %v1480 = vmul.f32 %v904, %v904
      %v1481 = vmul.f32 %v905, %v905
      %v1482 = vmul.f32 %v906, %v906
      %v1483 = vmul.f32 %v907, %v907
      %v1484 = vmul.f32 %v908, %v908
      %v1485 = vmul.f32 %v909, %v909
      %v1486 = vmul.f32 %v910, %v910
      %v1487 = vmul.f32 %v911, %v911
      %v1488 = vmul.f32 %v912, %v912
      %v1489 = vmul.f32 %v913, %v913
      %v1490 = vmul.f32 %v914, %v914
      %v1491 = vmul.f32 %v915, %v915
      %v1492 = vmul.f32 %v916, %v916
      %v1493 = vmul.f32 %v917, %v917
      %v1494 = vmul.f32 %v918, %v918
      %v1495 = vmul.f32 %v919, %v919
      %v1496 = vmul.f32 %v920, %v920
      %v1497 = vmul.f32 %v921, %v921
      %v1498 = vmul.f32 %v922, %v922
      %v1499 = vmul.f32 %v923, %v923
      %v1500 = vmul.f32 %v924, %v924
      %v1501 = vmul.f32 %v925, %v925
      %v1502 = vmul.f32 %v926, %v926
      %v1503 = vmul.f32 %v927, %v927
      %v1504 = vmul.f32 %v928, %v928
      %v1505 = vmul.f32 %v929, %v929
      %v1506 = vmul.f32 %v930, %v930
      %v1507 = vmul.f32 %v931, %v931
      %v1508 = vmul.f32 %v932, %v932
      %v1509 = vmul.f32 %v933, %v933
      %v1510 = vmul.f32 %v934, %v934
      %v1511 = vmul.f32 %v935, %v935
      %v1512 = vmul.f32 %v936, %v936
      %v1513 = vmul.f32 %v937, %v937
      %v1514 = vmul.f32 %v938, %v938
      %v1515 = vmul.f32 %v939, %v939
      %v1516 = vmul.f32 %v940, %v940
      %v1517 = vmul.f32 %v941, %v941
      %v1518 = vmul.f32 %v942, %v942
      %v1519 = vmul.f32 %v943, %v943
      %v1520 = vmul.f32 %v944, %v944
      %v1521 = vmul.f32 %v945, %v945
      %v1522 = vmul.f32 %v946, %v946
      %v1523 = vmul.f32 %v947, %v947
      %v1524 = vmul.f32 %v948, %v948
      %v1525 = vmul.f32 %v949, %v949
      %v1526 = vmul.f32 %v950, %v950
      %v1527 = vmul.f32 %v951, %v951
      %v1528 = vmul.f32 %v952, %v952
      %v1529 = vmul.f32 %v953, %v953
      %v1530 = vmul.f32 %v954, %v954
      %v1531 = vmul.f32 %v955, %v955
      %v1532 = vmul.f32 %v956, %v956
      %v1533 = vmul.f32 %v957, %v957
      %v1534 = vmul.f32 %v958, %v958
      %v1535 = vmul.f32 %v959, %v959
      %v1536 = vmul.f32 %v960, %v960
      %v1537 = vmul.f32 %v961, %v961
      %v1538 = vmul.f32 %v962, %v962
      %v1539 = vmul.f32 %v963, %v963
      %v1540 = vmul.f32 %v964, %v964
      %v1541 = vmul.f32 %v965, %v965
      %v1542 = vmul.f32 %v966, %v966
      %v1543 = vmul.f32 %v967, %v967
      %v1544 = vmul.f32 %v968, %v968
      %v1545 = vmul.f32 %v969, %v969
      %v1546 = vmul.f32 %v970, %v970
      %v1547 = vmul.f32 %v971, %v971
      %v1548 = vmul.f32 %v972, %v972
      %v1549 = vmul.f32 %v973, %v973
      %v1550 = vmul.f32 %v974, %v974
      %v1551 = vmul.f32 %v975, %v975
      %v1552 = vmul.f32 %v976, %v976
      %v1553 = vmul.f32 %v977, %v977
      %v1554 = vmul.f32 %v978, %v978
      %v1555 = vmul.f32 %v979, %v979
      %v1556 = vmul.f32 %v980, %v980
      %v1557 = vmul.f32 %v981, %v981
      %v1558 = vmul.f32 %v982, %v982
      %v1559 = vmul.f32 %v983, %v983
      %v1560 = vmul.f32 %v984, %v984
      %v1561 = vmul.f32 %v985, %v985
      %v1562 = vmul.f32 %v986, %v986
      %v1563 = vmul.f32 %v987, %v987
      %v1564 = vmul.f32 %v988, %v988
      %v1565 = vmul.f32 %v989, %v989
      %v1566 = vmul.f32 %v990, %v990
      %v1567 = vmul.f32 %v991, %v991
      %v1568 = vmul.f32 %v992, %v992
      %v1569 = vmul.f32 %v993, %v993
      %v1570 = vmul.f32 %v994, %v994
      %v1571 = vmul.f32 %v995, %v995
      %v1572 = vmul.f32 %v996, %v996
      %v1573 = vmul.f32 %v997, %v997
      %v1574 = vmul.f32 %v998, %v998
      %v1575 = vmul.f32 %v999, %v999
      %v1576 = vmul.f32 %v1000, %v1000
      %v1577 = vmul.f32 %v1001, %v1001
      %v1578 = vmul.f32 %v1002, %v1002
      %v1579 = vmul.f32 %v1003, %v1003
      %v1580 = vmul.f32 %v1004, %v1004
      %v1581 = vmul.f32 %v1005, %v1005
      %v1582 = vadd.f32 %v1006, %v1294
      %v1583 = vadd.f32 %v1007, %v1295
      %v1584 = vadd.f32 %v1008, %v1296
      %v1585 = vadd.f32 %v1009, %v1297
      %v1586 = vadd.f32 %v1010, %v1298
      %v1587 = vadd.f32 %v1011, %v1299
      %v1588 = vadd.f32 %v1012, %v1300
      %v1589 = vadd.f32 %v1013, %v1301
      %v1590 = vadd.f32 %v1014, %v1302
      %v1591 = vadd.f32 %v1015, %v1303
      %v1592 = vadd.f32 %v1016, %v1304
      %v1593 = vadd.f32 %v1017, %v1305
      %v1594 = vadd.f32 %v1018, %v1306
      %v1595 = vadd.f32 %v1019, %v1307
      %v1596 = vadd.f32 %v1020, %v1308
      %v1597 = vadd.f32 %v1021, %v1309
      %v1598 = vadd.f32 %v1022, %v1310
      %v1599 = vadd.f32 %v1023, %v1311
      %v1600 = vadd.f32 %v1024, %v1312
      %v1601 = vadd.f32 %v1025, %v1313
      %v1602 = vadd.f32 %v1026, %v1314
      %v1603 = vadd.f32 %v1027, %v1315
      %v1604 = vadd.f32 %v1028, %v1316
      %v1605 = vadd.f32 %v1029, %v1317
      %v1606 = vadd.f32 %v1030, %v1318
      %v1607 = vadd.f32 %v1031, %v1319
      %v1608 = vadd.f32 %v1032, %v1320
      %v1609 = vadd.f32 %v1033, %v1321
      %v1610 = vadd.f32 %v1034, %v1322
      %v1611 = vadd.f32 %v1035, %v1323
      %v1612 = vadd.f32 %v1036, %v1324
      %v1613 = vadd.f32 %v1037, %v1325
      %v1614 = vadd.f32 %v1038, %v1326
      %v1615 = vadd.f32 %v1039, %v1327
      %v1616 = vadd.f32 %v1040, %v1328
      %v1617 = vadd.f32 %v1041, %v1329
      %v1618 = vadd.f32 %v1042, %v1330
      %v1619 = vadd.f32 %v1043, %v1331
      %v1620 = vadd.f32 %v1044, %v1332
      %v1621 = vadd.f32 %v1045, %v1333
      %v1622 = vadd.f32 %v1046, %v1334
      %v1623 = vadd.f32 %v1047, %v1335
      %v1624 = vadd.f32 %v1048, %v1336
      %v1625 = vadd.f32 %v1049, %v1337
      %v1626 = vadd.f32 %v1050, %v1338
      %v1627 = vadd.f32 %v1051, %v1339
      %v1628 = vadd.f32 %v1052, %v1340
      %v1629 = vadd.f32 %v1053, %v1341
      %v1630 = vadd.f32 %v1054, %v1342
      %v1631 = vadd.f32 %v1055, %v1343
      %v1632 = vadd.f32 %v1056, %v1344
      %v1633 = vadd.f32 %v1057, %v1345
      %v1634 = vadd.f32 %v1058, %v1346
      %v1635 = vadd.f32 %v1059, %v1347
      %v1636 = vadd.f32 %v1060, %v1348
      %v1637 = vadd.f32 %v1061, %v1349
      %v1638 = vadd.f32 %v1062, %v1350
      %v1639 = vadd.f32 %v1063, %v1351
      %v1640 = vadd.f32 %v1064, %v1352
      %v1641 = vadd.f32 %v1065, %v1353
      %v1642 = vadd.f32 %v1066, %v1354
      %v1643 = vadd.f32 %v1067, %v1355
      %v1644 = vadd.f32 %v1068, %v1356
      %v1645 = vadd.f32 %v1069, %v1357
      %v1646 = vadd.f32 %v1070, %v1358
      %v1647 = vadd.f32 %v1071, %v1359
      %v1648 = vadd.f32 %v1072, %v1360
      %v1649 = vadd.f32 %v1073, %v1361
      %v1650 = vadd.f32 %v1074, %v1362
      %v1651 = vadd.f32 %v1075, %v1363
      %v1652 = vadd.f32 %v1076, %v1364
      %v1653 = vadd.f32 %v1077, %v1365
      %v1654 = vadd.f32 %v1078, %v1366
      %v1655 = vadd.f32 %v1079, %v1367
      %v1656 = vadd.f32 %v1080, %v1368
      %v1657 = vadd.f32 %v1081, %v1369
      %v1658 = vadd.f32 %v1082, %v1370
      %v1659 = vadd.f32 %v1083, %v1371
      %v1660 = vadd.f32 %v1084, %v1372
      %v1661 = vadd.f32 %v1085, %v1373
      %v1662 = vadd.f32 %v1086, %v1374
      %v1663 = vadd.f32 %v1087, %v1375
      %v1664 = vadd.f32 %v1088, %v1376
      %v1665 = vadd.f32 %v1089, %v1377
      %v1666 = vadd.f32 %v1090, %v1378
      %v1667 = vadd.f32 %v1091, %v1379
      %v1668 = vadd.f32 %v1092, %v1380
      %v1669 = vadd.f32 %v1093, %v1381
      %v1670 = vadd.f32 %v1094, %v1382
      %v1671 = vadd.f32 %v1095, %v1383
      %v1672 = vadd.f32 %v1096, %v1384
      %v1673 = vadd.f32 %v1097, %v1385
      %v1674 = vadd.f32 %v1098, %v1386
      %v1675 = vadd.f32 %v1099, %v1387
      %v1676 = vadd.f32 %v1100, %v1388
      %v1677 = vadd.f32 %v1101, %v1389
      %v1678 = vadd.f32 %v1102, %v1390
      %v1679 = vadd.f32 %v1103, %v1391
      %v1680 = vadd.f32 %v1104, %v1392
      %v1681 = vadd.f32 %v1105, %v1393
      %v1682 = vadd.f32 %v1106, %v1394
      %v1683 = vadd.f32 %v1107, %v1395
      %v1684 = vadd.f32 %v1108, %v1396
      %v1685 = vadd.f32 %v1109, %v1397
      %v1686 = vadd.f32 %v1110, %v1398
      %v1687 = vadd.f32 %v1111, %v1399
      %v1688 = vadd.f32 %v1112, %v1400
      %v1689 = vadd.f32 %v1113, %v1401
      %v1690 = vadd.f32 %v1114, %v1402
      %v1691 = vadd.f32 %v1115, %v1403
      %v1692 = vadd.f32 %v1116, %v1404
      %v1693 = vadd.f32 %v1117, %v1405
      %v1694 = vadd.f32 %v1118, %v1406
      %v1695 = vadd.f32 %v1119, %v1407
      %v1696 = vadd.f32 %v1120, %v1408
      %v1697 = vadd.f32 %v1121, %v1409
      %v1698 = vadd.f32 %v1122, %v1410
      %v1699 = vadd.f32 %v1123, %v1411
      %v1700 = vadd.f32 %v1124, %v1412
      %v1701 = vadd.f32 %v1125, %v1413
      %v1702 = vadd.f32 %v1126, %v1414
      %v1703 = vadd.f32 %v1127, %v1415
      %v1704 = vadd.f32 %v1128, %v1416
      %v1705 = vadd.f32 %v1129, %v1417
      %v1706 = vadd.f32 %v1130, %v1418
      %v1707 = vadd.f32 %v1131, %v1419
      %v1708 = vadd.f32 %v1132, %v1420
      %v1709 = vadd.f32 %v1133, %v1421
      %v1710 = vadd.f32 %v1134, %v1422
      %v1711 = vadd.f32 %v1135, %v1423
      %v1712 = vadd.f32 %v1136, %v1424
      %v1713 = vadd.f32 %v1137, %v1425
      %v1714 = vadd.f32 %v1138, %v1426
      %v1715 = vadd.f32 %v1139, %v1427
      %v1716 = vadd.f32 %v1140, %v1428
      %v1717 = vadd.f32 %v1141, %v1429
      %v1718 = vadd.f32 %v1142, %v1430
      %v1719 = vadd.f32 %v1143, %v1431
      %v1720 = vadd.f32 %v1144, %v1432
      %v1721 = vadd.f32 %v1145, %v1433
      %v1722 = vadd.f32 %v1146, %v1434
      %v1723 = vadd.f32 %v1147, %v1435
      %v1724 = vadd.f32 %v1148, %v1436
      %v1725 = vadd.f32 %v1149, %v1437
      %v1726 = vadd.f32 %v1150, %v1438
      %v1727 = vadd.f32 %v1151, %v1439
      %v1728 = vadd.f32 %v1152, %v1440
      %v1729 = vadd.f32 %v1153, %v1441
      %v1730 = vadd.f32 %v1154, %v1442
      %v1731 = vadd.f32 %v1155, %v1443
      %v1732 = vadd.f32 %v1156, %v1444
      %v1733 = vadd.f32 %v1157, %v1445
      %v1734 = vadd.f32 %v1158, %v1446
      %v1735 = vadd.f32 %v1159, %v1447
      %v1736 = vadd.f32 %v1160, %v1448
      %v1737 = vadd.f32 %v1161, %v1449
      %v1738 = vadd.f32 %v1162, %v1450
      %v1739 = vadd.f32 %v1163, %v1451
      %v1740 = vadd.f32 %v1164, %v1452
      %v1741 = vadd.f32 %v1165, %v1453
      %v1742 = vadd.f32 %v1166, %v1454
      %v1743 = vadd.f32 %v1167, %v1455
      %v1744 = vadd.f32 %v1168, %v1456
      %v1745 = vadd.f32 %v1169, %v1457
      %v1746 = vadd.f32 %v1170, %v1458
      %v1747 = vadd.f32 %v1171, %v1459
      %v1748 = vadd.f32 %v1172, %v1460
      %v1749 = vadd.f32 %v1173, %v1461
      %v1750 = vadd.f32 %v1174, %v1462
      %v1751 = vadd.f32 %v1175, %v1463
      %v1752 = vadd.f32 %v1176, %v1464
      %v1753 = vadd.f32 %v1177, %v1465
      %v1754 = vadd.f32 %v1178, %v1466
      %v1755 = vadd.f32 %v1179, %v1467
      %v1756 = vadd.f32 %v1180, %v1468
      %v1757 = vadd.f32 %v1181, %v1469
      %v1758 = vadd.f32 %v1182, %v1470
      %v1759 = vadd.f32 %v1183, %v1471
      %v1760 = vadd.f32 %v1184, %v1472
      %v1761 = vadd.f32 %v1185, %v1473
      %v1762 = vadd.f32 %v1186, %v1474
      %v1763 = vadd.f32 %v1187, %v1475
      %v1764 = vadd.f32 %v1188, %v1476
      %v1765 = vadd.f32 %v1189, %v1477
      %v1766 = vadd.f32 %v1190, %v1478
      %v1767 = vadd.f32 %v1191, %v1479
      %v1768 = vadd.f32 %v1192, %v1480
      %v1769 = vadd.f32 %v1193, %v1481
      %v1770 = vadd.f32 %v1194, %v1482
      %v1771 = vadd.f32 %v1195, %v1483
      %v1772 = vadd.f32 %v1196, %v1484
      %v1773 = vadd.f32 %v1197, %v1485
      %v1774 = vadd.f32 %v1198, %v1486
      %v1775 = vadd.f32 %v1199, %v1487
      %v1776 = vadd.f32 %v1200, %v1488
      %v1777 = vadd.f32 %v1201, %v1489
      %v1778 = vadd.f32 %v1202, %v1490
      %v1779 = vadd.f32 %v1203, %v1491
      %v1780 = vadd.f32 %v1204, %v1492
      %v1781 = vadd.f32 %v1205, %v1493
      %v1782 = vadd.f32 %v1206, %v1494
      %v1783 = vadd.f32 %v1207, %v1495
      %v1784 = vadd.f32 %v1208, %v1496
      %v1785 = vadd.f32 %v1209, %v1497
      %v1786 = vadd.f32 %v1210, %v1498
      %v1787 = vadd.f32 %v1211, %v1499
      %v1788 = vadd.f32 %v1212, %v1500
      %v1789 = vadd.f32 %v1213, %v1501
      %v1790 = vadd.f32 %v1214, %v1502
      %v1791 = vadd.f32 %v1215, %v1503
      %v1792 = vadd.f32 %v1216, %v1504
      %v1793 = vadd.f32 %v1217, %v1505
      %v1794 = vadd.f32 %v1218, %v1506
      %v1795 = vadd.f32 %v1219, %v1507
      %v1796 = vadd.f32 %v1220, %v1508
      %v1797 = vadd.f32 %v1221, %v1509
      %v1798 = vadd.f32 %v1222, %v1510
      %v1799 = vadd.f32 %v1223, %v1511
      %v1800 = vadd.f32 %v1224, %v1512
      %v1801 = vadd.f32 %v1225, %v1513
      %v1802 = vadd.f32 %v1226, %v1514
      %v1803 = vadd.f32 %v1227, %v1515
      %v1804 = vadd.f32 %v1228, %v1516
      %v1805 = vadd.f32 %v1229, %v1517
      %v1806 = vadd.f32 %v1230, %v1518
      %v1807 = vadd.f32 %v1231, %v1519
      %v1808 = vadd.f32 %v1232, %v1520
      %v1809 = vadd.f32 %v1233, %v1521
      %v1810 = vadd.f32 %v1234, %v1522
      %v1811 = vadd.f32 %v1235, %v1523
      %v1812 = vadd.f32 %v1236, %v1524
      %v1813 = vadd.f32 %v1237, %v1525
      %v1814 = vadd.f32 %v1238, %v1526
      %v1815 = vadd.f32 %v1239, %v1527
      %v1816 = vadd.f32 %v1240, %v1528
      %v1817 = vadd.f32 %v1241, %v1529
      %v1818 = vadd.f32 %v1242, %v1530
      %v1819 = vadd.f32 %v1243, %v1531
      %v1820 = vadd.f32 %v1244, %v1532
      %v1821 = vadd.f32 %v1245, %v1533
      %v1822 = vadd.f32 %v1246, %v1534
      %v1823 = vadd.f32 %v1247, %v1535
      %v1824 = vadd.f32 %v1248, %v1536
      %v1825 = vadd.f32 %v1249, %v1537
      %v1826 = vadd.f32 %v1250, %v1538
      %v1827 = vadd.f32 %v1251, %v1539
      %v1828 = vadd.f32 %v1252, %v1540
      %v1829 = vadd.f32 %v1253, %v1541
      %v1830 = vadd.f32 %v1254, %v1542
      %v1831 = vadd.f32 %v1255, %v1543
      %v1832 = vadd.f32 %v1256, %v1544
      %v1833 = vadd.f32 %v1257, %v1545
      %v1834 = vadd.f32 %v1258, %v1546
      %v1835 = vadd.f32 %v1259, %v1547
      %v1836 = vadd.f32 %v1260, %v1548
      %v1837 = vadd.f32 %v1261, %v1549
      %v1838 = vadd.f32 %v1262, %v1550
      %v1839 = vadd.f32 %v1263, %v1551
      %v1840 = vadd.f32 %v1264, %v1552
      %v1841 = vadd.f32 %v1265, %v1553
      %v1842 = vadd.f32 %v1266, %v1554
      %v1843 = vadd.f32 %v1267, %v1555
      %v1844 = vadd.f32 %v1268, %v1556
      %v1845 = vadd.f32 %v1269, %v1557
      %v1846 = vadd.f32 %v1270, %v1558
      %v1847 = vadd.f32 %v1271, %v1559
      %v1848 = vadd.f32 %v1272, %v1560
      %v1849 = vadd.f32 %v1273, %v1561
      %v1850 = vadd.f32 %v1274, %v1562
      %v1851 = vadd.f32 %v1275, %v1563
      %v1852 = vadd.f32 %v1276, %v1564
      %v1853 = vadd.f32 %v1277, %v1565
      %v1854 = vadd.f32 %v1278, %v1566
      %v1855 = vadd.f32 %v1279, %v1567
      %v1856 = vadd.f32 %v1280, %v1568
      %v1857 = vadd.f32 %v1281, %v1569
      %v1858 = vadd.f32 %v1282, %v1570
      %v1859 = vadd.f32 %v1283, %v1571
      %v1860 = vadd.f32 %v1284, %v1572
      %v1861 = vadd.f32 %v1285, %v1573
      %v1862 = vadd.f32 %v1286, %v1574
      %v1863 = vadd.f32 %v1287, %v1575
      %v1864 = vadd.f32 %v1288, %v1576
      %v1865 = vadd.f32 %v1289, %v1577
      %v1866 = vadd.f32 %v1290, %v1578
      %v1867 = vadd.f32 %v1291, %v1579
      %v1868 = vadd.f32 %v1292, %v1580
      %v1869 = vadd.f32 %v1293, %v1581
      %v1870 = vmul.f32 %v1582, -32.0
      %v1871 = vmul.f32 %v1583, -32.0
      %v1872 = vmul.f32 %v1584, -32.0
      %v1873 = vmul.f32 %v1585, -32.0
      %v1874 = vmul.f32 %v1586, -32.0
      %v1875 = vmul.f32 %v1587, -32.0
      %v1876 = vmul.f32 %v1588, -32.0
      %v1877 = vmul.f32 %v1589, -32.0
      %v1878 = vmul.f32 %v1590, -32.0
      %v1879 = vmul.f32 %v1591, -32.0
      %v1880 = vmul.f32 %v1592, -32.0
      %v1881 = vmul.f32 %v1593, -32.0
      %v1882 = vmul.f32 %v1594, -32.0
      %v1883 = vmul.f32 %v1595, -32.0
      %v1884 = vmul.f32 %v1596, -32.0
      %v1885 = vmul.f32 %v1597, -32.0
      %v1886 = vmul.f32 %v1598, -32.0
      %v1887 = vmul.f32 %v1599, -32.0
      %v1888 = vmul.f32 %v1600, -32.0
      %v1889 = vmul.f32 %v1601, -32.0
      %v1890 = vmul.f32 %v1602, -32.0
      %v1891 = vmul.f32 %v1603, -32.0
      %v1892 = vmul.f32 %v1604, -32.0
      %v1893 = vmul.f32 %v1605, -32.0
      %v1894 = vmul.f32 %v1606, -32.0
      %v1895 = vmul.f32 %v1607, -32.0
      %v1896 = vmul.f32 %v1608, -32.0
      %v1897 = vmul.f32 %v1609, -32.0
      %v1898 = vmul.f32 %v1610, -32.0
      %v1899 = vmul.f32 %v1611, -32.0
      %v1900 = vmul.f32 %v1612, -32.0
      %v1901 = vmul.f32 %v1613, -32.0
      %v1902 = vmul.f32 %v1614, -32.0
      %v1903 = vmul.f32 %v1615, -32.0
      %v1904 = vmul.f32 %v1616, -32.0
      %v1905 = vmul.f32 %v1617, -32.0
      %v1906 = vmul.f32 %v1618, -32.0
      %v1907 = vmul.f32 %v1619, -32.0
      %v1908 = vmul.f32 %v1620, -32.0
      %v1909 = vmul.f32 %v1621, -32.0
      %v1910 = vmul.f32 %v1622, -32.0
      %v1911 = vmul.f32 %v1623, -32.0
      %v1912 = vmul.f32 %v1624, -32.0
      %v1913 = vmul.f32 %v1625, -32.0
      %v1914 = vmul.f32 %v1626, -32.0
      %v1915 = vmul.f32 %v1627, -32.0
      %v1916 = vmul.f32 %v1628, -32.0
      %v1917 = vmul.f32 %v1629, -32.0
      %v1918 = vmul.f32 %v1630, -32.0
      %v1919 = vmul.f32 %v1631, -32.0
      %v1920 = vmul.f32 %v1632, -32.0
      %v1921 = vmul.f32 %v1633, -32.0
      %v1922 = vmul.f32 %v1634, -32.0
      %v1923 = vmul.f32 %v1635, -32.0
      %v1924 = vmul.f32 %v1636, -32.0
      %v1925 = vmul.f32 %v1637, -32.0
      %v1926 = vmul.f32 %v1638, -32.0
      %v1927 = vmul.f32 %v1639, -32.0
      %v1928 = vmul.f32 %v1640, -32.0
      %v1929 = vmul.f32 %v1641, -32.0
      %v1930 = vmul.f32 %v1642, -32.0
      %v1931 = vmul.f32 %v1643, -32.0
      %v1932 = vmul.f32 %v1644, -32.0
      %v1933 = vmul.f32 %v1645, -32.0
      %v1934 = vmul.f32 %v1646, -32.0
      %v1935 = vmul.f32 %v1647, -32.0
      %v1936 = vmul.f32 %v1648, -32.0
      %v1937 = vmul.f32 %v1649, -32.0
      %v1938 = vmul.f32 %v1650, -32.0
      %v1939 = vmul.f32 %v1651, -32.0
      %v1940 = vmul.f32 %v1652, -32.0
      %v1941 = vmul.f32 %v1653, -32.0
      %v1942 = vmul.f32 %v1654, -32.0
      %v1943 = vmul.f32 %v1655, -32.0
      %v1944 = vmul.f32 %v1656, -32.0
      %v1945 = vmul.f32 %v1657, -32.0
      %v1946 = vmul.f32 %v1658, -32.0
      %v1947 = vmul.f32 %v1659, -32.0
      %v1948 = vmul.f32 %v1660, -32.0
      %v1949 = vmul.f32 %v1661, -32.0
      %v1950 = vmul.f32 %v1662, -32.0
      %v1951 = vmul.f32 %v1663, -32.0
      %v1952 = vmul.f32 %v1664, -32.0
      %v1953 = vmul.f32 %v1665, -32.0
      %v1954 = vmul.f32 %v1666, -32.0
      %v1955 = vmul.f32 %v1667, -32.0
      %v1956 = vmul.f32 %v1668, -32.0
      %v1957 = vmul.f32 %v1669, -32.0
      %v1958 = vmul.f32 %v1670, -32.0
      %v1959 = vmul.f32 %v1671, -32.0
      %v1960 = vmul.f32 %v1672, -32.0
      %v1961 = vmul.f32 %v1673, -32.0
      %v1962 = vmul.f32 %v1674, -32.0
      %v1963 = vmul.f32 %v1675, -32.0
      %v1964 = vmul.f32 %v1676, -32.0
      %v1965 = vmul.f32 %v1677, -32.0
      %v1966 = vmul.f32 %v1678, -32.0
      %v1967 = vmul.f32 %v1679, -32.0
      %v1968 = vmul.f32 %v1680, -32.0
      %v1969 = vmul.f32 %v1681, -32.0
      %v1970 = vmul.f32 %v1682, -32.0
      %v1971 = vmul.f32 %v1683, -32.0
      %v1972 = vmul.f32 %v1684, -32.0
      %v1973 = vmul.f32 %v1685, -32.0
      %v1974 = vmul.f32 %v1686, -32.0
      %v1975 = vmul.f32 %v1687, -32.0
      %v1976 = vmul.f32 %v1688, -32.0
      %v1977 = vmul.f32 %v1689, -32.0
      %v1978 = vmul.f32 %v1690, -32.0
      %v1979 = vmul.f32 %v1691, -32.0
      %v1980 = vmul.f32 %v1692, -32.0
      %v1981 = vmul.f32 %v1693, -32.0
      %v1982 = vmul.f32 %v1694, -32.0
      %v1983 = vmul.f32 %v1695, -32.0
      %v1984 = vmul.f32 %v1696, -32.0
      %v1985 = vmul.f32 %v1697, -32.0
      %v1986 = vmul.f32 %v1698, -32.0
      %v1987 = vmul.f32 %v1699, -32.0
      %v1988 = vmul.f32 %v1700, -32.0
      %v1989 = vmul.f32 %v1701, -32.0
      %v1990 = vmul.f32 %v1702, -32.0
      %v1991 = vmul.f32 %v1703, -32.0
      %v1992 = vmul.f32 %v1704, -32.0
      %v1993 = vmul.f32 %v1705, -32.0
      %v1994 = vmul.f32 %v1706, -32.0
      %v1995 = vmul.f32 %v1707, -32.0
      %v1996 = vmul.f32 %v1708, -32.0
      %v1997 = vmul.f32 %v1709, -32.0
      %v1998 = vmul.f32 %v1710, -32.0
      %v1999 = vmul.f32 %v1711, -32.0
      %v2000 = vmul.f32 %v1712, -32.0
      %v2001 = vmul.f32 %v1713, -32.0
      %v2002 = vmul.f32 %v1714, -32.0
      %v2003 = vmul.f32 %v1715, -32.0
      %v2004 = vmul.f32 %v1716, -32.0
      %v2005 = vmul.f32 %v1717, -32.0
      %v2006 = vmul.f32 %v1718, -32.0
      %v2007 = vmul.f32 %v1719, -32.0
      %v2008 = vmul.f32 %v1720, -32.0
      %v2009 = vmul.f32 %v1721, -32.0
      %v2010 = vmul.f32 %v1722, -32.0
      %v2011 = vmul.f32 %v1723, -32.0
      %v2012 = vmul.f32 %v1724, -32.0
      %v2013 = vmul.f32 %v1725, -32.0
      %v2014 = vmul.f32 %v1726, -32.0
      %v2015 = vmul.f32 %v1727, -32.0
      %v2016 = vmul.f32 %v1728, -32.0
      %v2017 = vmul.f32 %v1729, -32.0
      %v2018 = vmul.f32 %v1730, -32.0
      %v2019 = vmul.f32 %v1731, -32.0
      %v2020 = vmul.f32 %v1732, -32.0
      %v2021 = vmul.f32 %v1733, -32.0
      %v2022 = vmul.f32 %v1734, -32.0
      %v2023 = vmul.f32 %v1735, -32.0
      %v2024 = vmul.f32 %v1736, -32.0
      %v2025 = vmul.f32 %v1737, -32.0
      %v2026 = vmul.f32 %v1738, -32.0
      %v2027 = vmul.f32 %v1739, -32.0
      %v2028 = vmul.f32 %v1740, -32.0
      %v2029 = vmul.f32 %v1741, -32.0
      %v2030 = vmul.f32 %v1742, -32.0
      %v2031 = vmul.f32 %v1743, -32.0
      %v2032 = vmul.f32 %v1744, -32.0
      %v2033 = vmul.f32 %v1745, -32.0
      %v2034 = vmul.f32 %v1746, -32.0
      %v2035 = vmul.f32 %v1747, -32.0
      %v2036 = vmul.f32 %v1748, -32.0
      %v2037 = vmul.f32 %v1749, -32.0
      %v2038 = vmul.f32 %v1750, -32.0
      %v2039 = vmul.f32 %v1751, -32.0
      %v2040 = vmul.f32 %v1752, -32.0
      %v2041 = vmul.f32 %v1753, -32.0
      %v2042 = vmul.f32 %v1754, -32.0
      %v2043 = vmul.f32 %v1755, -32.0
      %v2044 = vmul.f32 %v1756, -32.0
      %v2045 = vmul.f32 %v1757, -32.0
      %v2046 = vmul.f32 %v1758, -32.0
      %v2047 = vmul.f32 %v1759, -32.0
      %v2048 = vmul.f32 %v1760, -32.0
      %v2049 = vmul.f32 %v1761, -32.0
      %v2050 = vmul.f32 %v1762, -32.0
      %v2051 = vmul.f32 %v1763, -32.0
      %v2052 = vmul.f32 %v1764, -32.0
      %v2053 = vmul.f32 %v1765, -32.0
      %v2054 = vmul.f32 %v1766, -32.0
      %v2055 = vmul.f32 %v1767, -32.0
      %v2056 = vmul.f32 %v1768, -32.0
      %v2057 = vmul.f32 %v1769, -32.0
      %v2058 = vmul.f32 %v1770, -32.0
      %v2059 = vmul.f32 %v1771, -32.0
      %v2060 = vmul.f32 %v1772, -32.0
      %v2061 = vmul.f32 %v1773, -32.0
      %v2062 = vmul.f32 %v1774, -32.0
      %v2063 = vmul.f32 %v1775, -32.0
      %v2064 = vmul.f32 %v1776, -32.0
      %v2065 = vmul.f32 %v1777, -32.0
      %v2066 = vmul.f32 %v1778, -32.0
      %v2067 = vmul.f32 %v1779, -32.0
      %v2068 = vmul.f32 %v1780, -32.0
      %v2069 = vmul.f32 %v1781, -32.0
      %v2070 = vmul.f32 %v1782, -32.0
      %v2071 = vmul.f32 %v1783, -32.0
      %v2072 = vmul.f32 %v1784, -32.0
      %v2073 = vmul.f32 %v1785, -32.0
      %v2074 = vmul.f32 %v1786, -32.0
      %v2075 = vmul.f32 %v1787, -32.0
      %v2076 = vmul.f32 %v1788, -32.0
      %v2077 = vmul.f32 %v1789, -32.0
      %v2078 = vmul.f32 %v1790, -32.0
      %v2079 = vmul.f32 %v1791, -32.0
      %v2080 = vmul.f32 %v1792, -32.0
      %v2081 = vmul.f32 %v1793, -32.0
      %v2082 = vmul.f32 %v1794, -32.0
      %v2083 = vmul.f32 %v1795, -32.0
      %v2084 = vmul.f32 %v1796, -32.0
      %v2085 = vmul.f32 %v1797, -32.0
      %v2086 = vmul.f32 %v1798, -32.0
      %v2087 = vmul.f32 %v1799, -32.0
      %v2088 = vmul.f32 %v1800, -32.0
      %v2089 = vmul.f32 %v1801, -32.0
      %v2090 = vmul.f32 %v1802, -32.0
      %v2091 = vmul.f32 %v1803, -32.0
      %v2092 = vmul.f32 %v1804, -32.0
      %v2093 = vmul.f32 %v1805, -32.0
      %v2094 = vmul.f32 %v1806, -32.0
      %v2095 = vmul.f32 %v1807, -32.0
      %v2096 = vmul.f32 %v1808, -32.0
      %v2097 = vmul.f32 %v1809, -32.0
      %v2098 = vmul.f32 %v1810, -32.0
      %v2099 = vmul.f32 %v1811, -32.0
      %v2100 = vmul.f32 %v1812, -32.0
      %v2101 = vmul.f32 %v1813, -32.0
      %v2102 = vmul.f32 %v1814, -32.0
      %v2103 = vmul.f32 %v1815, -32.0
      %v2104 = vmul.f32 %v1816, -32.0
      %v2105 = vmul.f32 %v1817, -32.0
      %v2106 = vmul.f32 %v1818, -32.0
      %v2107 = vmul.f32 %v1819, -32.0
      %v2108 = vmul.f32 %v1820, -32.0
      %v2109 = vmul.f32 %v1821, -32.0
      %v2110 = vmul.f32 %v1822, -32.0
      %v2111 = vmul.f32 %v1823, -32.0
      %v2112 = vmul.f32 %v1824, -32.0
      %v2113 = vmul.f32 %v1825, -32.0
      %v2114 = vmul.f32 %v1826, -32.0
      %v2115 = vmul.f32 %v1827, -32.0
      %v2116 = vmul.f32 %v1828, -32.0
      %v2117 = vmul.f32 %v1829, -32.0
      %v2118 = vmul.f32 %v1830, -32.0
      %v2119 = vmul.f32 %v1831, -32.0
      %v2120 = vmul.f32 %v1832, -32.0
      %v2121 = vmul.f32 %v1833, -32.0
      %v2122 = vmul.f32 %v1834, -32.0
      %v2123 = vmul.f32 %v1835, -32.0
      %v2124 = vmul.f32 %v1836, -32.0
      %v2125 = vmul.f32 %v1837, -32.0
      %v2126 = vmul.f32 %v1838, -32.0
      %v2127 = vmul.f32 %v1839, -32.0
      %v2128 = vmul.f32 %v1840, -32.0
      %v2129 = vmul.f32 %v1841, -32.0
      %v2130 = vmul.f32 %v1842, -32.0
      %v2131 = vmul.f32 %v1843, -32.0
      %v2132 = vmul.f32 %v1844, -32.0
      %v2133 = vmul.f32 %v1845, -32.0
      %v2134 = vmul.f32 %v1846, -32.0
      %v2135 = vmul.f32 %v1847, -32.0
      %v2136 = vmul.f32 %v1848, -32.0
      %v2137 = vmul.f32 %v1849, -32.0
      %v2138 = vmul.f32 %v1850, -32.0
      %v2139 = vmul.f32 %v1851, -32.0
      %v2140 = vmul.f32 %v1852, -32.0
      %v2141 = vmul.f32 %v1853, -32.0
      %v2142 = vmul.f32 %v1854, -32.0
      %v2143 = vmul.f32 %v1855, -32.0
      %v2144 = vmul.f32 %v1856, -32.0
      %v2145 = vmul.f32 %v1857, -32.0
      %v2146 = vmul.f32 %v1858, -32.0
      %v2147 = vmul.f32 %v1859, -32.0
      %v2148 = vmul.f32 %v1860, -32.0
      %v2149 = vmul.f32 %v1861, -32.0
      %v2150 = vmul.f32 %v1862, -32.0
      %v2151 = vmul.f32 %v1863, -32.0
      %v2152 = vmul.f32 %v1864, -32.0
      %v2153 = vmul.f32 %v1865, -32.0
      %v2154 = vmul.f32 %v1866, -32.0
      %v2155 = vmul.f32 %v1867, -32.0
      %v2156 = vmul.f32 %v1868, -32.0
      %v2157 = vmul.f32 %v1869, -32.0
      %2158 = vset.pattern.permute.xlu0 2
      %2159 = vperm.xlu0 %2158, %v189
      %v2160 = vpop.permute.xlu0 %2159
      %2162 = vset.pattern.permute.xlu0 2
      %2163 = vperm.xlu0 %2162, %v190
      %v2164 = vpop.permute.xlu0 %2163
      %2166 = vset.pattern.permute.xlu0 2
      %2167 = vperm.xlu0 %2166, %v191
      %v2168 = vpop.permute.xlu0 %2167
      %2170 = vset.pattern.permute.xlu0 2
      %2171 = vperm.xlu0 %2170, %v192
      %v2172 = vpop.permute.xlu0 %2171
      %2174 = vset.pattern.permute.xlu0 2
      %2175 = vperm.xlu0 %2174, %v193
      %v2176 = vpop.permute.xlu0 %2175
      %2178 = vset.pattern.permute.xlu0 2
      %2179 = vperm.xlu0 %2178, %v194
      %v2180 = vpop.permute.xlu0 %2179
      %2182 = vset.pattern.permute.xlu0 2
      %2183 = vperm.xlu0 %2182, %v195
      %v2184 = vpop.permute.xlu0 %2183
      %2186 = vset.pattern.permute.xlu0 2
      %2187 = vperm.xlu0 %2186, %v196
      %v2188 = vpop.permute.xlu0 %2187
      %2190 = vset.pattern.permute.xlu0 2
      %2191 = vperm.xlu0 %2190, %v197
      %v2192 = vpop.permute.xlu0 %2191
      %v2194 = vadd.f32 %v1870, %v2160
      %v2195 = vadd.f32 %v1871, %v2160
      %v2196 = vadd.f32 %v1872, %v2160
      %v2197 = vadd.f32 %v1873, %v2160
      %v2198 = vadd.f32 %v1874, %v2160
      %v2199 = vadd.f32 %v1875, %v2160
      %v2200 = vadd.f32 %v1876, %v2160
      %v2201 = vadd.f32 %v1877, %v2160
      %v2202 = vadd.f32 %v1878, %v2160
      %v2203 = vadd.f32 %v1879, %v2160
      %v2204 = vadd.f32 %v1880, %v2160
      %v2205 = vadd.f32 %v1881, %v2160
      %v2206 = vadd.f32 %v1882, %v2160
      %v2207 = vadd.f32 %v1883, %v2160
      %v2208 = vadd.f32 %v1884, %v2160
      %v2209 = vadd.f32 %v1885, %v2160
      %v2210 = vadd.f32 %v1886, %v2160
      %v2211 = vadd.f32 %v1887, %v2160
      %v2212 = vadd.f32 %v1888, %v2160
      %v2213 = vadd.f32 %v1889, %v2160
      %v2214 = vadd.f32 %v1890, %v2160
      %v2215 = vadd.f32 %v1891, %v2160
      %v2216 = vadd.f32 %v1892, %v2160
      %v2217 = vadd.f32 %v1893, %v2160
      %v2218 = vadd.f32 %v1894, %v2160
      %v2219 = vadd.f32 %v1895, %v2160
      %v2220 = vadd.f32 %v1896, %v2160
      %v2221 = vadd.f32 %v1897, %v2160
      %v2222 = vadd.f32 %v1898, %v2160
      %v2223 = vadd.f32 %v1899, %v2160
      %v2224 = vadd.f32 %v1900, %v2160
      %v2225 = vadd.f32 %v1901, %v2160
      %v2226 = vadd.f32 %v1902, %v2164
      %v2227 = vadd.f32 %v1903, %v2164
      %v2228 = vadd.f32 %v1904, %v2164
      %v2229 = vadd.f32 %v1905, %v2164
      %v2230 = vadd.f32 %v1906, %v2164
      %v2231 = vadd.f32 %v1907, %v2164
      %v2232 = vadd.f32 %v1908, %v2164
      %v2233 = vadd.f32 %v1909, %v2164
      %v2234 = vadd.f32 %v1910, %v2164
      %v2235 = vadd.f32 %v1911, %v2164
      %v2236 = vadd.f32 %v1912, %v2164
      %v2237 = vadd.f32 %v1913, %v2164
      %v2238 = vadd.f32 %v1914, %v2164
      %v2239 = vadd.f32 %v1915, %v2164
      %v2240 = vadd.f32 %v1916, %v2164
      %v2241 = vadd.f32 %v1917, %v2164
      %v2242 = vadd.f32 %v1918, %v2164
      %v2243 = vadd.f32 %v1919, %v2164
      %v2244 = vadd.f32 %v1920, %v2164
      %v2245 = vadd.f32 %v1921, %v2164
      %v2246 = vadd.f32 %v1922, %v2164
      %v2247 = vadd.f32 %v1923, %v2164
      %v2248 = vadd.f32 %v1924, %v2164
      %v2249 = vadd.f32 %v1925, %v2164
      %v2250 = vadd.f32 %v1926, %v2164
      %v2251 = vadd.f32 %v1927, %v2164
      %v2252 = vadd.f32 %v1928, %v2164
      %v2253 = vadd.f32 %v1929, %v2164
      %v2254 = vadd.f32 %v1930, %v2164
      %v2255 = vadd.f32 %v1931, %v2164
      %v2256 = vadd.f32 %v1932, %v2164
      %v2257 = vadd.f32 %v1933, %v2164
      %v2258 = vadd.f32 %v1934, %v2168
      %v2259 = vadd.f32 %v1935, %v2168
      %v2260 = vadd.f32 %v1936, %v2168
      %v2261 = vadd.f32 %v1937, %v2168
      %v2262 = vadd.f32 %v1938, %v2168
      %v2263 = vadd.f32 %v1939, %v2168
      %v2264 = vadd.f32 %v1940, %v2168
      %v2265 = vadd.f32 %v1941, %v2168
      %v2266 = vadd.f32 %v1942, %v2168
      %v2267 = vadd.f32 %v1943, %v2168
      %v2268 = vadd.f32 %v1944, %v2168
      %v2269 = vadd.f32 %v1945, %v2168
      %v2270 = vadd.f32 %v1946, %v2168
      %v2271 = vadd.f32 %v1947, %v2168
      %v2272 = vadd.f32 %v1948, %v2168
      %v2273 = vadd.f32 %v1949, %v2168
      %v2274 = vadd.f32 %v1950, %v2168
      %v2275 = vadd.f32 %v1951, %v2168
      %v2276 = vadd.f32 %v1952, %v2168
      %v2277 = vadd.f32 %v1953, %v2168
      %v2278 = vadd.f32 %v1954, %v2168
      %v2279 = vadd.f32 %v1955, %v2168
      %v2280 = vadd.f32 %v1956, %v2168
      %v2281 = vadd.f32 %v1957, %v2168
      %v2282 = vadd.f32 %v1958, %v2168
      %v2283 = vadd.f32 %v1959, %v2168
      %v2284 = vadd.f32 %v1960, %v2168
      %v2285 = vadd.f32 %v1961, %v2168
      %v2286 = vadd.f32 %v1962, %v2168
      %v2287 = vadd.f32 %v1963, %v2168
      %v2288 = vadd.f32 %v1964, %v2168
      %v2289 = vadd.f32 %v1965, %v2168
      %v2290 = vadd.f32 %v1966, %v2172
      %v2291 = vadd.f32 %v1967, %v2172
      %v2292 = vadd.f32 %v1968, %v2172
      %v2293 = vadd.f32 %v1969, %v2172
      %v2294 = vadd.f32 %v1970, %v2172
      %v2295 = vadd.f32 %v1971, %v2172
      %v2296 = vadd.f32 %v1972, %v2172
      %v2297 = vadd.f32 %v1973, %v2172
      %v2298 = vadd.f32 %v1974, %v2172
      %v2299 = vadd.f32 %v1975, %v2172
      %v2300 = vadd.f32 %v1976, %v2172
      %v2301 = vadd.f32 %v1977, %v2172
      %v2302 = vadd.f32 %v1978, %v2172
      %v2303 = vadd.f32 %v1979, %v2172
      %v2304 = vadd.f32 %v1980, %v2172
      %v2305 = vadd.f32 %v1981, %v2172
      %v2306 = vadd.f32 %v1982, %v2172
      %v2307 = vadd.f32 %v1983, %v2172
      %v2308 = vadd.f32 %v1984, %v2172
      %v2309 = vadd.f32 %v1985, %v2172
      %v2310 = vadd.f32 %v1986, %v2172
      %v2311 = vadd.f32 %v1987, %v2172
      %v2312 = vadd.f32 %v1988, %v2172
      %v2313 = vadd.f32 %v1989, %v2172
      %v2314 = vadd.f32 %v1990, %v2172
      %v2315 = vadd.f32 %v1991, %v2172
      %v2316 = vadd.f32 %v1992, %v2172
      %v2317 = vadd.f32 %v1993, %v2172
      %v2318 = vadd.f32 %v1994, %v2172
      %v2319 = vadd.f32 %v1995, %v2172
      %v2320 = vadd.f32 %v1996, %v2172
      %v2321 = vadd.f32 %v1997, %v2172
      %v2322 = vadd.f32 %v1998, %v2176
      %v2323 = vadd.f32 %v1999, %v2176
      %v2324 = vadd.f32 %v2000, %v2176
      %v2325 = vadd.f32 %v2001, %v2176
      %v2326 = vadd.f32 %v2002, %v2176
      %v2327 = vadd.f32 %v2003, %v2176
      %v2328 = vadd.f32 %v2004, %v2176
      %v2329 = vadd.f32 %v2005, %v2176
      %v2330 = vadd.f32 %v2006, %v2176
      %v2331 = vadd.f32 %v2007, %v2176
      %v2332 = vadd.f32 %v2008, %v2176
      %v2333 = vadd.f32 %v2009, %v2176
      %v2334 = vadd.f32 %v2010, %v2176
      %v2335 = vadd.f32 %v2011, %v2176
      %v2336 = vadd.f32 %v2012, %v2176
      %v2337 = vadd.f32 %v2013, %v2176
      %v2338 = vadd.f32 %v2014, %v2176
      %v2339 = vadd.f32 %v2015, %v2176
      %v2340 = vadd.f32 %v2016, %v2176
      %v2341 = vadd.f32 %v2017, %v2176
      %v2342 = vadd.f32 %v2018, %v2176
      %v2343 = vadd.f32 %v2019, %v2176
      %v2344 = vadd.f32 %v2020, %v2176
      %v2345 = vadd.f32 %v2021, %v2176
      %v2346 = vadd.f32 %v2022, %v2176
      %v2347 = vadd.f32 %v2023, %v2176
      %v2348 = vadd.f32 %v2024, %v2176
      %v2349 = vadd.f32 %v2025, %v2176
      %v2350 = vadd.f32 %v2026, %v2176
      %v2351 = vadd.f32 %v2027, %v2176
      %v2352 = vadd.f32 %v2028, %v2176
      %v2353 = vadd.f32 %v2029, %v2176
      %v2354 = vadd.f32 %v2030, %v2180
      %v2355 = vadd.f32 %v2031, %v2180
      %v2356 = vadd.f32 %v2032, %v2180
      %v2357 = vadd.f32 %v2033, %v2180
      %v2358 = vadd.f32 %v2034, %v2180
      %v2359 = vadd.f32 %v2035, %v2180
      %v2360 = vadd.f32 %v2036, %v2180
      %v2361 = vadd.f32 %v2037, %v2180
      %v2362 = vadd.f32 %v2038, %v2180
      %v2363 = vadd.f32 %v2039, %v2180
      %v2364 = vadd.f32 %v2040, %v2180
      %v2365 = vadd.f32 %v2041, %v2180
      %v2366 = vadd.f32 %v2042, %v2180
      %v2367 = vadd.f32 %v2043, %v2180
      %v2368 = vadd.f32 %v2044, %v2180
      %v2369 = vadd.f32 %v2045, %v2180
      %v2370 = vadd.f32 %v2046, %v2180
      %v2371 = vadd.f32 %v2047, %v2180
      %v2372 = vadd.f32 %v2048, %v2180
      %v2373 = vadd.f32 %v2049, %v2180
      %v2374 = vadd.f32 %v2050, %v2180
      %v2375 = vadd.f32 %v2051, %v2180
      %v2376 = vadd.f32 %v2052, %v2180
      %v2377 = vadd.f32 %v2053, %v2180
      %v2378 = vadd.f32 %v2054, %v2180
      %v2379 = vadd.f32 %v2055, %v2180
      %v2380 = vadd.f32 %v2056, %v2180
      %v2381 = vadd.f32 %v2057, %v2180
      %v2382 = vadd.f32 %v2058, %v2180
      %v2383 = vadd.f32 %v2059, %v2180
      %v2384 = vadd.f32 %v2060, %v2180
      %v2385 = vadd.f32 %v2061, %v2180
      %v2386 = vadd.f32 %v2062, %v2184
      %v2387 = vadd.f32 %v2063, %v2184
      %v2388 = vadd.f32 %v2064, %v2184
      %v2389 = vadd.f32 %v2065, %v2184
      %v2390 = vadd.f32 %v2066, %v2184
      %v2391 = vadd.f32 %v2067, %v2184
      %v2392 = vadd.f32 %v2068, %v2184
      %v2393 = vadd.f32 %v2069, %v2184
      %v2394 = vadd.f32 %v2070, %v2184
      %v2395 = vadd.f32 %v2071, %v2184
      %v2396 = vadd.f32 %v2072, %v2184
      %v2397 = vadd.f32 %v2073, %v2184
      %v2398 = vadd.f32 %v2074, %v2184
      %v2399 = vadd.f32 %v2075, %v2184
      %v2400 = vadd.f32 %v2076, %v2184
      %v2401 = vadd.f32 %v2077, %v2184
      %v2402 = vadd.f32 %v2078, %v2184
      %v2403 = vadd.f32 %v2079, %v2184
      %v2404 = vadd.f32 %v2080, %v2184
      %v2405 = vadd.f32 %v2081, %v2184
      %v2406 = vadd.f32 %v2082, %v2184
      %v2407 = vadd.f32 %v2083, %v2184
      %v2408 = vadd.f32 %v2084, %v2184
      %v2409 = vadd.f32 %v2085, %v2184
      %v2410 = vadd.f32 %v2086, %v2184
      %v2411 = vadd.f32 %v2087, %v2184
      %v2412 = vadd.f32 %v2088, %v2184
      %v2413 = vadd.f32 %v2089, %v2184
      %v2414 = vadd.f32 %v2090, %v2184
      %v2415 = vadd.f32 %v2091, %v2184
      %v2416 = vadd.f32 %v2092, %v2184
      %v2417 = vadd.f32 %v2093, %v2184
      %v2418 = vadd.f32 %v2094, %v2188
      %v2419 = vadd.f32 %v2095, %v2188
      %v2420 = vadd.f32 %v2096, %v2188
      %v2421 = vadd.f32 %v2097, %v2188
      %v2422 = vadd.f32 %v2098, %v2188
      %v2423 = vadd.f32 %v2099, %v2188
      %v2424 = vadd.f32 %v2100, %v2188
      %v2425 = vadd.f32 %v2101, %v2188
      %v2426 = vadd.f32 %v2102, %v2188
      %v2427 = vadd.f32 %v2103, %v2188
      %v2428 = vadd.f32 %v2104, %v2188
      %v2429 = vadd.f32 %v2105, %v2188
      %v2430 = vadd.f32 %v2106, %v2188
      %v2431 = vadd.f32 %v2107, %v2188
      %v2432 = vadd.f32 %v2108, %v2188
      %v2433 = vadd.f32 %v2109, %v2188
      %v2434 = vadd.f32 %v2110, %v2188
      %v2435 = vadd.f32 %v2111, %v2188
      %v2436 = vadd.f32 %v2112, %v2188
      %v2437 = vadd.f32 %v2113, %v2188
      %v2438 = vadd.f32 %v2114, %v2188
      %v2439 = vadd.f32 %v2115, %v2188
      %v2440 = vadd.f32 %v2116, %v2188
      %v2441 = vadd.f32 %v2117, %v2188
      %v2442 = vadd.f32 %v2118, %v2188
      %v2443 = vadd.f32 %v2119, %v2188
      %v2444 = vadd.f32 %v2120, %v2188
      %v2445 = vadd.f32 %v2121, %v2188
      %v2446 = vadd.f32 %v2122, %v2188
      %v2447 = vadd.f32 %v2123, %v2188
      %v2448 = vadd.f32 %v2124, %v2188
      %v2449 = vadd.f32 %v2125, %v2188
      %v2450 = vadd.f32 %v2126, %v2192
      %v2451 = vadd.f32 %v2127, %v2192
      %v2452 = vadd.f32 %v2128, %v2192
      %v2453 = vadd.f32 %v2129, %v2192
      %v2454 = vadd.f32 %v2130, %v2192
      %v2455 = vadd.f32 %v2131, %v2192
      %v2456 = vadd.f32 %v2132, %v2192
      %v2457 = vadd.f32 %v2133, %v2192
      %v2458 = vadd.f32 %v2134, %v2192
      %v2459 = vadd.f32 %v2135, %v2192
      %v2460 = vadd.f32 %v2136, %v2192
      %v2461 = vadd.f32 %v2137, %v2192
      %v2462 = vadd.f32 %v2138, %v2192
      %v2463 = vadd.f32 %v2139, %v2192
      %v2464 = vadd.f32 %v2140, %v2192
      %v2465 = vadd.f32 %v2141, %v2192
      %v2466 = vadd.f32 %v2142, %v2192
      %v2467 = vadd.f32 %v2143, %v2192
      %v2468 = vadd.f32 %v2144, %v2192
      %v2469 = vadd.f32 %v2145, %v2192
      %v2470 = vadd.f32 %v2146, %v2192
      %v2471 = vadd.f32 %v2147, %v2192
      %v2472 = vadd.f32 %v2148, %v2192
      %v2473 = vadd.f32 %v2149, %v2192
      %v2474 = vadd.f32 %v2150, %v2192
      %v2475 = vadd.f32 %v2151, %v2192
      %v2476 = vadd.f32 %v2152, %v2192
      %v2477 = vadd.f32 %v2153, %v2192
      %v2478 = vadd.f32 %v2154, %v2192
      %v2479 = vadd.f32 %v2155, %v2192
      %v2480 = vadd.f32 %v2156, %v2192
      %v2481 = vadd.f32 %v2157, %v2192
      %v2482 = vmax.f32 %v2194, %v2226
      %v2483 = vmax.f32 %v2482, %v2258
      %v2484 = vmax.f32 %v2483, %v2290
      %v2485 = vmax.f32 %v2484, %v2322
      %v2486 = vmax.f32 %v2485, %v2354
      %v2487 = vmax.f32 %v2486, %v2386
      %v2488 = vmax.f32 %v2487, %v2418
      %v2489 = vmax.f32 %v2488, %v2450
      %v2490 = vrot.slane %v2489, 4
      %v2491 = vmax.f32 %v2489, %v2490
      %v2492 = vrot.slane %v2491, 2
      %v2493 = vmax.f32 %v2491, %v2492
      %v2494 = vrot.slane %v2493, 1
      %v2495 = vmax.f32 %v2493, %v2494
      %v2496 = vmax.f32 %v2195, %v2227
      %v2497 = vmax.f32 %v2496, %v2259
      %v2498 = vmax.f32 %v2497, %v2291
      %v2499 = vmax.f32 %v2498, %v2323
      %v2500 = vmax.f32 %v2499, %v2355
      %v2501 = vmax.f32 %v2500, %v2387
      %v2502 = vmax.f32 %v2501, %v2419
      %v2503 = vmax.f32 %v2502, %v2451
      %v2504 = vrot.slane %v2503, 4
      %v2505 = vmax.f32 %v2503, %v2504
      %v2506 = vrot.slane %v2505, 2
      %v2507 = vmax.f32 %v2505, %v2506
      %v2508 = vrot.slane %v2507, 1
      %v2509 = vmax.f32 %v2507, %v2508
      %v2510 = vmax.f32 %v2196, %v2228
      %v2511 = vmax.f32 %v2510, %v2260
      %v2512 = vmax.f32 %v2511, %v2292
      %v2513 = vmax.f32 %v2512, %v2324
      %v2514 = vmax.f32 %v2513, %v2356
      %v2515 = vmax.f32 %v2514, %v2388
      %v2516 = vmax.f32 %v2515, %v2420
      %v2517 = vmax.f32 %v2516, %v2452
      %v2518 = vrot.slane %v2517, 4
      %v2519 = vmax.f32 %v2517, %v2518
      %v2520 = vrot.slane %v2519, 2
      %v2521 = vmax.f32 %v2519, %v2520
      %v2522 = vrot.slane %v2521, 1
      %v2523 = vmax.f32 %v2521, %v2522
      %v2524 = vmax.f32 %v2197, %v2229
      %v2525 = vmax.f32 %v2524, %v2261
      %v2526 = vmax.f32 %v2525, %v2293
      %v2527 = vmax.f32 %v2526, %v2325
      %v2528 = vmax.f32 %v2527, %v2357
      %v2529 = vmax.f32 %v2528, %v2389
      %v2530 = vmax.f32 %v2529, %v2421
      %v2531 = vmax.f32 %v2530, %v2453
      %v2532 = vrot.slane %v2531, 4
      %v2533 = vmax.f32 %v2531, %v2532
      %v2534 = vrot.slane %v2533, 2
      %v2535 = vmax.f32 %v2533, %v2534
      %v2536 = vrot.slane %v2535, 1
      %v2537 = vmax.f32 %v2535, %v2536
      %v2538 = vmax.f32 %v2198, %v2230
      %v2539 = vmax.f32 %v2538, %v2262
      %v2540 = vmax.f32 %v2539, %v2294
      %v2541 = vmax.f32 %v2540, %v2326
      %v2542 = vmax.f32 %v2541, %v2358
      %v2543 = vmax.f32 %v2542, %v2390
      %v2544 = vmax.f32 %v2543, %v2422
      %v2545 = vmax.f32 %v2544, %v2454
      %v2546 = vrot.slane %v2545, 4
      %v2547 = vmax.f32 %v2545, %v2546
      %v2548 = vrot.slane %v2547, 2
      %v2549 = vmax.f32 %v2547, %v2548
      %v2550 = vrot.slane %v2549, 1
      %v2551 = vmax.f32 %v2549, %v2550
      %v2552 = vmax.f32 %v2199, %v2231
      %v2553 = vmax.f32 %v2552, %v2263
      %v2554 = vmax.f32 %v2553, %v2295
      %v2555 = vmax.f32 %v2554, %v2327
      %v2556 = vmax.f32 %v2555, %v2359
      %v2557 = vmax.f32 %v2556, %v2391
      %v2558 = vmax.f32 %v2557, %v2423
      %v2559 = vmax.f32 %v2558, %v2455
      %v2560 = vrot.slane %v2559, 4
      %v2561 = vmax.f32 %v2559, %v2560
      %v2562 = vrot.slane %v2561, 2
      %v2563 = vmax.f32 %v2561, %v2562
      %v2564 = vrot.slane %v2563, 1
      %v2565 = vmax.f32 %v2563, %v2564
      %v2566 = vmax.f32 %v2200, %v2232
      %v2567 = vmax.f32 %v2566, %v2264
      %v2568 = vmax.f32 %v2567, %v2296
      %v2569 = vmax.f32 %v2568, %v2328
      %v2570 = vmax.f32 %v2569, %v2360
      %v2571 = vmax.f32 %v2570, %v2392
      %v2572 = vmax.f32 %v2571, %v2424
      %v2573 = vmax.f32 %v2572, %v2456
      %v2574 = vrot.slane %v2573, 4
      %v2575 = vmax.f32 %v2573, %v2574
      %v2576 = vrot.slane %v2575, 2
      %v2577 = vmax.f32 %v2575, %v2576
      %v2578 = vrot.slane %v2577, 1
      %v2579 = vmax.f32 %v2577, %v2578
      %v2580 = vmax.f32 %v2201, %v2233
      %v2581 = vmax.f32 %v2580, %v2265
      %v2582 = vmax.f32 %v2581, %v2297
      %v2583 = vmax.f32 %v2582, %v2329
      %v2584 = vmax.f32 %v2583, %v2361
      %v2585 = vmax.f32 %v2584, %v2393
      %v2586 = vmax.f32 %v2585, %v2425
      %v2587 = vmax.f32 %v2586, %v2457
      %v2588 = vrot.slane %v2587, 4
      %v2589 = vmax.f32 %v2587, %v2588
      %v2590 = vrot.slane %v2589, 2
      %v2591 = vmax.f32 %v2589, %v2590
      %v2592 = vrot.slane %v2591, 1
      %v2593 = vmax.f32 %v2591, %v2592
      %v2594 = vmax.f32 %v2202, %v2234
      %v2595 = vmax.f32 %v2594, %v2266
      %v2596 = vmax.f32 %v2595, %v2298
      %v2597 = vmax.f32 %v2596, %v2330
      %v2598 = vmax.f32 %v2597, %v2362
      %v2599 = vmax.f32 %v2598, %v2394
      %v2600 = vmax.f32 %v2599, %v2426
      %v2601 = vmax.f32 %v2600, %v2458
      %v2602 = vrot.slane %v2601, 4
      %v2603 = vmax.f32 %v2601, %v2602
      %v2604 = vrot.slane %v2603, 2
      %v2605 = vmax.f32 %v2603, %v2604
      %v2606 = vrot.slane %v2605, 1
      %v2607 = vmax.f32 %v2605, %v2606
      %v2608 = vmax.f32 %v2203, %v2235
      %v2609 = vmax.f32 %v2608, %v2267
      %v2610 = vmax.f32 %v2609, %v2299
      %v2611 = vmax.f32 %v2610, %v2331
      %v2612 = vmax.f32 %v2611, %v2363
      %v2613 = vmax.f32 %v2612, %v2395
      %v2614 = vmax.f32 %v2613, %v2427
      %v2615 = vmax.f32 %v2614, %v2459
      %v2616 = vrot.slane %v2615, 4
      %v2617 = vmax.f32 %v2615, %v2616
      %v2618 = vrot.slane %v2617, 2
      %v2619 = vmax.f32 %v2617, %v2618
      %v2620 = vrot.slane %v2619, 1
      %v2621 = vmax.f32 %v2619, %v2620
      %v2622 = vmax.f32 %v2204, %v2236
      %v2623 = vmax.f32 %v2622, %v2268
      %v2624 = vmax.f32 %v2623, %v2300
      %v2625 = vmax.f32 %v2624, %v2332
      %v2626 = vmax.f32 %v2625, %v2364
      %v2627 = vmax.f32 %v2626, %v2396
      %v2628 = vmax.f32 %v2627, %v2428
      %v2629 = vmax.f32 %v2628, %v2460
      %v2630 = vrot.slane %v2629, 4
      %v2631 = vmax.f32 %v2629, %v2630
      %v2632 = vrot.slane %v2631, 2
      %v2633 = vmax.f32 %v2631, %v2632
      %v2634 = vrot.slane %v2633, 1
      %v2635 = vmax.f32 %v2633, %v2634
      %v2636 = vmax.f32 %v2205, %v2237
      %v2637 = vmax.f32 %v2636, %v2269
      %v2638 = vmax.f32 %v2637, %v2301
      %v2639 = vmax.f32 %v2638, %v2333
      %v2640 = vmax.f32 %v2639, %v2365
      %v2641 = vmax.f32 %v2640, %v2397
      %v2642 = vmax.f32 %v2641, %v2429
      %v2643 = vmax.f32 %v2642, %v2461
      %v2644 = vrot.slane %v2643, 4
      %v2645 = vmax.f32 %v2643, %v2644
      %v2646 = vrot.slane %v2645, 2
      %v2647 = vmax.f32 %v2645, %v2646
      %v2648 = vrot.slane %v2647, 1
      %v2649 = vmax.f32 %v2647, %v2648
      %v2650 = vmax.f32 %v2206, %v2238
      %v2651 = vmax.f32 %v2650, %v2270
      %v2652 = vmax.f32 %v2651, %v2302
      %v2653 = vmax.f32 %v2652, %v2334
      %v2654 = vmax.f32 %v2653, %v2366
      %v2655 = vmax.f32 %v2654, %v2398
      %v2656 = vmax.f32 %v2655, %v2430
      %v2657 = vmax.f32 %v2656, %v2462
      %v2658 = vrot.slane %v2657, 4
      %v2659 = vmax.f32 %v2657, %v2658
      %v2660 = vrot.slane %v2659, 2
      %v2661 = vmax.f32 %v2659, %v2660
      %v2662 = vrot.slane %v2661, 1
      %v2663 = vmax.f32 %v2661, %v2662
      %v2664 = vmax.f32 %v2207, %v2239
      %v2665 = vmax.f32 %v2664, %v2271
      %v2666 = vmax.f32 %v2665, %v2303
      %v2667 = vmax.f32 %v2666, %v2335
      %v2668 = vmax.f32 %v2667, %v2367
      %v2669 = vmax.f32 %v2668, %v2399
      %v2670 = vmax.f32 %v2669, %v2431
      %v2671 = vmax.f32 %v2670, %v2463
      %v2672 = vrot.slane %v2671, 4
      %v2673 = vmax.f32 %v2671, %v2672
      %v2674 = vrot.slane %v2673, 2
      %v2675 = vmax.f32 %v2673, %v2674
      %v2676 = vrot.slane %v2675, 1
      %v2677 = vmax.f32 %v2675, %v2676
      %v2678 = vmax.f32 %v2208, %v2240
      %v2679 = vmax.f32 %v2678, %v2272
      %v2680 = vmax.f32 %v2679, %v2304
      %v2681 = vmax.f32 %v2680, %v2336
      %v2682 = vmax.f32 %v2681, %v2368
      %v2683 = vmax.f32 %v2682, %v2400
      %v2684 = vmax.f32 %v2683, %v2432
      %v2685 = vmax.f32 %v2684, %v2464
      %v2686 = vrot.slane %v2685, 4
      %v2687 = vmax.f32 %v2685, %v2686
      %v2688 = vrot.slane %v2687, 2
      %v2689 = vmax.f32 %v2687, %v2688
      %v2690 = vrot.slane %v2689, 1
      %v2691 = vmax.f32 %v2689, %v2690
      %v2692 = vmax.f32 %v2209, %v2241
      %v2693 = vmax.f32 %v2692, %v2273
      %v2694 = vmax.f32 %v2693, %v2305
      %v2695 = vmax.f32 %v2694, %v2337
      %v2696 = vmax.f32 %v2695, %v2369
      %v2697 = vmax.f32 %v2696, %v2401
      %v2698 = vmax.f32 %v2697, %v2433
      %v2699 = vmax.f32 %v2698, %v2465
      %v2700 = vrot.slane %v2699, 4
      %v2701 = vmax.f32 %v2699, %v2700
      %v2702 = vrot.slane %v2701, 2
      %v2703 = vmax.f32 %v2701, %v2702
      %v2704 = vrot.slane %v2703, 1
      %v2705 = vmax.f32 %v2703, %v2704
      %v2706 = vmax.f32 %v2210, %v2242
      %v2707 = vmax.f32 %v2706, %v2274
      %v2708 = vmax.f32 %v2707, %v2306
      %v2709 = vmax.f32 %v2708, %v2338
      %v2710 = vmax.f32 %v2709, %v2370
      %v2711 = vmax.f32 %v2710, %v2402
      %v2712 = vmax.f32 %v2711, %v2434
      %v2713 = vmax.f32 %v2712, %v2466
      %v2714 = vrot.slane %v2713, 4
      %v2715 = vmax.f32 %v2713, %v2714
      %v2716 = vrot.slane %v2715, 2
      %v2717 = vmax.f32 %v2715, %v2716
      %v2718 = vrot.slane %v2717, 1
      %v2719 = vmax.f32 %v2717, %v2718
      %v2720 = vmax.f32 %v2211, %v2243
      %v2721 = vmax.f32 %v2720, %v2275
      %v2722 = vmax.f32 %v2721, %v2307
      %v2723 = vmax.f32 %v2722, %v2339
      %v2724 = vmax.f32 %v2723, %v2371
      %v2725 = vmax.f32 %v2724, %v2403
      %v2726 = vmax.f32 %v2725, %v2435
      %v2727 = vmax.f32 %v2726, %v2467
      %v2728 = vrot.slane %v2727, 4
      %v2729 = vmax.f32 %v2727, %v2728
      %v2730 = vrot.slane %v2729, 2
      %v2731 = vmax.f32 %v2729, %v2730
      %v2732 = vrot.slane %v2731, 1
      %v2733 = vmax.f32 %v2731, %v2732
      %v2734 = vmax.f32 %v2212, %v2244
      %v2735 = vmax.f32 %v2734, %v2276
      %v2736 = vmax.f32 %v2735, %v2308
      %v2737 = vmax.f32 %v2736, %v2340
      %v2738 = vmax.f32 %v2737, %v2372
      %v2739 = vmax.f32 %v2738, %v2404
      %v2740 = vmax.f32 %v2739, %v2436
      %v2741 = vmax.f32 %v2740, %v2468
      %v2742 = vrot.slane %v2741, 4
      %v2743 = vmax.f32 %v2741, %v2742
      %v2744 = vrot.slane %v2743, 2
      %v2745 = vmax.f32 %v2743, %v2744
      %v2746 = vrot.slane %v2745, 1
      %v2747 = vmax.f32 %v2745, %v2746
      %v2748 = vmax.f32 %v2213, %v2245
      %v2749 = vmax.f32 %v2748, %v2277
      %v2750 = vmax.f32 %v2749, %v2309
      %v2751 = vmax.f32 %v2750, %v2341
      %v2752 = vmax.f32 %v2751, %v2373
      %v2753 = vmax.f32 %v2752, %v2405
      %v2754 = vmax.f32 %v2753, %v2437
      %v2755 = vmax.f32 %v2754, %v2469
      %v2756 = vrot.slane %v2755, 4
      %v2757 = vmax.f32 %v2755, %v2756
      %v2758 = vrot.slane %v2757, 2
      %v2759 = vmax.f32 %v2757, %v2758
      %v2760 = vrot.slane %v2759, 1
      %v2761 = vmax.f32 %v2759, %v2760
      %v2762 = vmax.f32 %v2214, %v2246
      %v2763 = vmax.f32 %v2762, %v2278
      %v2764 = vmax.f32 %v2763, %v2310
      %v2765 = vmax.f32 %v2764, %v2342
      %v2766 = vmax.f32 %v2765, %v2374
      %v2767 = vmax.f32 %v2766, %v2406
      %v2768 = vmax.f32 %v2767, %v2438
      %v2769 = vmax.f32 %v2768, %v2470
      %v2770 = vrot.slane %v2769, 4
      %v2771 = vmax.f32 %v2769, %v2770
      %v2772 = vrot.slane %v2771, 2
      %v2773 = vmax.f32 %v2771, %v2772
      %v2774 = vrot.slane %v2773, 1
      %v2775 = vmax.f32 %v2773, %v2774
      %v2776 = vmax.f32 %v2215, %v2247
      %v2777 = vmax.f32 %v2776, %v2279
      %v2778 = vmax.f32 %v2777, %v2311
      %v2779 = vmax.f32 %v2778, %v2343
      %v2780 = vmax.f32 %v2779, %v2375
      %v2781 = vmax.f32 %v2780, %v2407
      %v2782 = vmax.f32 %v2781, %v2439
      %v2783 = vmax.f32 %v2782, %v2471
      %v2784 = vrot.slane %v2783, 4
      %v2785 = vmax.f32 %v2783, %v2784
      %v2786 = vrot.slane %v2785, 2
      %v2787 = vmax.f32 %v2785, %v2786
      %v2788 = vrot.slane %v2787, 1
      %v2789 = vmax.f32 %v2787, %v2788
      %v2790 = vmax.f32 %v2216, %v2248
      %v2791 = vmax.f32 %v2790, %v2280
      %v2792 = vmax.f32 %v2791, %v2312
      %v2793 = vmax.f32 %v2792, %v2344
      %v2794 = vmax.f32 %v2793, %v2376
      %v2795 = vmax.f32 %v2794, %v2408
      %v2796 = vmax.f32 %v2795, %v2440
      %v2797 = vmax.f32 %v2796, %v2472
      %v2798 = vrot.slane %v2797, 4
      %v2799 = vmax.f32 %v2797, %v2798
      %v2800 = vrot.slane %v2799, 2
      %v2801 = vmax.f32 %v2799, %v2800
      %v2802 = vrot.slane %v2801, 1
      %v2803 = vmax.f32 %v2801, %v2802
      %v2804 = vmax.f32 %v2217, %v2249
      %v2805 = vmax.f32 %v2804, %v2281
      %v2806 = vmax.f32 %v2805, %v2313
      %v2807 = vmax.f32 %v2806, %v2345
      %v2808 = vmax.f32 %v2807, %v2377
      %v2809 = vmax.f32 %v2808, %v2409
      %v2810 = vmax.f32 %v2809, %v2441
      %v2811 = vmax.f32 %v2810, %v2473
      %v2812 = vrot.slane %v2811, 4
      %v2813 = vmax.f32 %v2811, %v2812
      %v2814 = vrot.slane %v2813, 2
      %v2815 = vmax.f32 %v2813, %v2814
      %v2816 = vrot.slane %v2815, 1
      %v2817 = vmax.f32 %v2815, %v2816
      %v2818 = vmax.f32 %v2218, %v2250
      %v2819 = vmax.f32 %v2818, %v2282
      %v2820 = vmax.f32 %v2819, %v2314
      %v2821 = vmax.f32 %v2820, %v2346
      %v2822 = vmax.f32 %v2821, %v2378
      %v2823 = vmax.f32 %v2822, %v2410
      %v2824 = vmax.f32 %v2823, %v2442
      %v2825 = vmax.f32 %v2824, %v2474
      %v2826 = vrot.slane %v2825, 4
      %v2827 = vmax.f32 %v2825, %v2826
      %v2828 = vrot.slane %v2827, 2
      %v2829 = vmax.f32 %v2827, %v2828
      %v2830 = vrot.slane %v2829, 1
      %v2831 = vmax.f32 %v2829, %v2830
      %v2832 = vmax.f32 %v2219, %v2251
      %v2833 = vmax.f32 %v2832, %v2283
      %v2834 = vmax.f32 %v2833, %v2315
      %v2835 = vmax.f32 %v2834, %v2347
      %v2836 = vmax.f32 %v2835, %v2379
      %v2837 = vmax.f32 %v2836, %v2411
      %v2838 = vmax.f32 %v2837, %v2443
      %v2839 = vmax.f32 %v2838, %v2475
      %v2840 = vrot.slane %v2839, 4
      %v2841 = vmax.f32 %v2839, %v2840
      %v2842 = vrot.slane %v2841, 2
      %v2843 = vmax.f32 %v2841, %v2842
      %v2844 = vrot.slane %v2843, 1
      %v2845 = vmax.f32 %v2843, %v2844
      %v2846 = vmax.f32 %v2220, %v2252
      %v2847 = vmax.f32 %v2846, %v2284
      %v2848 = vmax.f32 %v2847, %v2316
      %v2849 = vmax.f32 %v2848, %v2348
      %v2850 = vmax.f32 %v2849, %v2380
      %v2851 = vmax.f32 %v2850, %v2412
      %v2852 = vmax.f32 %v2851, %v2444
      %v2853 = vmax.f32 %v2852, %v2476
      %v2854 = vrot.slane %v2853, 4
      %v2855 = vmax.f32 %v2853, %v2854
      %v2856 = vrot.slane %v2855, 2
      %v2857 = vmax.f32 %v2855, %v2856
      %v2858 = vrot.slane %v2857, 1
      %v2859 = vmax.f32 %v2857, %v2858
      %v2860 = vmax.f32 %v2221, %v2253
      %v2861 = vmax.f32 %v2860, %v2285
      %v2862 = vmax.f32 %v2861, %v2317
      %v2863 = vmax.f32 %v2862, %v2349
      %v2864 = vmax.f32 %v2863, %v2381
      %v2865 = vmax.f32 %v2864, %v2413
      %v2866 = vmax.f32 %v2865, %v2445
      %v2867 = vmax.f32 %v2866, %v2477
      %v2868 = vrot.slane %v2867, 4
      %v2869 = vmax.f32 %v2867, %v2868
      %v2870 = vrot.slane %v2869, 2
      %v2871 = vmax.f32 %v2869, %v2870
      %v2872 = vrot.slane %v2871, 1
      %v2873 = vmax.f32 %v2871, %v2872
      %v2874 = vmax.f32 %v2222, %v2254
      %v2875 = vmax.f32 %v2874, %v2286
      %v2876 = vmax.f32 %v2875, %v2318
      %v2877 = vmax.f32 %v2876, %v2350
      %v2878 = vmax.f32 %v2877, %v2382
      %v2879 = vmax.f32 %v2878, %v2414
      %v2880 = vmax.f32 %v2879, %v2446
      %v2881 = vmax.f32 %v2880, %v2478
      %v2882 = vrot.slane %v2881, 4
      %v2883 = vmax.f32 %v2881, %v2882
      %v2884 = vrot.slane %v2883, 2
      %v2885 = vmax.f32 %v2883, %v2884
      %v2886 = vrot.slane %v2885, 1
      %v2887 = vmax.f32 %v2885, %v2886
      %v2888 = vmax.f32 %v2223, %v2255
      %v2889 = vmax.f32 %v2888, %v2287
      %v2890 = vmax.f32 %v2889, %v2319
      %v2891 = vmax.f32 %v2890, %v2351
      %v2892 = vmax.f32 %v2891, %v2383
      %v2893 = vmax.f32 %v2892, %v2415
      %v2894 = vmax.f32 %v2893, %v2447
      %v2895 = vmax.f32 %v2894, %v2479
      %v2896 = vrot.slane %v2895, 4
      %v2897 = vmax.f32 %v2895, %v2896
      %v2898 = vrot.slane %v2897, 2
      %v2899 = vmax.f32 %v2897, %v2898
      %v2900 = vrot.slane %v2899, 1
      %v2901 = vmax.f32 %v2899, %v2900
      %v2902 = vmax.f32 %v2224, %v2256
      %v2903 = vmax.f32 %v2902, %v2288
      %v2904 = vmax.f32 %v2903, %v2320
      %v2905 = vmax.f32 %v2904, %v2352
      %v2906 = vmax.f32 %v2905, %v2384
      %v2907 = vmax.f32 %v2906, %v2416
      %v2908 = vmax.f32 %v2907, %v2448
      %v2909 = vmax.f32 %v2908, %v2480
      %v2910 = vrot.slane %v2909, 4
      %v2911 = vmax.f32 %v2909, %v2910
      %v2912 = vrot.slane %v2911, 2
      %v2913 = vmax.f32 %v2911, %v2912
      %v2914 = vrot.slane %v2913, 1
      %v2915 = vmax.f32 %v2913, %v2914
      %v2916 = vmax.f32 %v2225, %v2257
      %v2917 = vmax.f32 %v2916, %v2289
      %v2918 = vmax.f32 %v2917, %v2321
      %v2919 = vmax.f32 %v2918, %v2353
      %v2920 = vmax.f32 %v2919, %v2385
      %v2921 = vmax.f32 %v2920, %v2417
      %v2922 = vmax.f32 %v2921, %v2449
      %v2923 = vmax.f32 %v2922, %v2481
      %v2924 = vrot.slane %v2923, 4
      %v2925 = vmax.f32 %v2923, %v2924
      %v2926 = vrot.slane %v2925, 2
      %v2927 = vmax.f32 %v2925, %v2926
      %v2928 = vrot.slane %v2927, 1
      %v2929 = vmax.f32 %v2927, %v2928
      %2930 = vset.pattern.permute.xlu0 3
      %2931 = vperm.xlu0 %2930, %v189
      %v2932 = vpop.permute.xlu0 %2931
      %2934 = vset.pattern.permute.xlu0 3
      %2935 = vperm.xlu0 %2934, %v190
      %v2936 = vpop.permute.xlu0 %2935
      %2938 = vset.pattern.permute.xlu0 3
      %2939 = vperm.xlu0 %2938, %v191
      %v2940 = vpop.permute.xlu0 %2939
      %2942 = vset.pattern.permute.xlu0 3
      %2943 = vperm.xlu0 %2942, %v192
      %v2944 = vpop.permute.xlu0 %2943
      %2946 = vset.pattern.permute.xlu0 3
      %2947 = vperm.xlu0 %2946, %v193
      %v2948 = vpop.permute.xlu0 %2947
      %2950 = vset.pattern.permute.xlu0 3
      %2951 = vperm.xlu0 %2950, %v194
      %v2952 = vpop.permute.xlu0 %2951
      %2954 = vset.pattern.permute.xlu0 3
      %2955 = vperm.xlu0 %2954, %v195
      %v2956 = vpop.permute.xlu0 %2955
      %2958 = vset.pattern.permute.xlu0 3
      %2959 = vperm.xlu0 %2958, %v196
      %v2960 = vpop.permute.xlu0 %2959
      %2962 = vset.pattern.permute.xlu0 3
      %2963 = vperm.xlu0 %2962, %v197
      %v2964 = vpop.permute.xlu0 %2963
      %v2966 = vadd.f32 %v1870, %v2932
      %v2967 = vadd.f32 %v1871, %v2932
      %v2968 = vadd.f32 %v1872, %v2932
      %v2969 = vadd.f32 %v1873, %v2932
      %v2970 = vadd.f32 %v1874, %v2932
      %v2971 = vadd.f32 %v1875, %v2932
      %v2972 = vadd.f32 %v1876, %v2932
      %v2973 = vadd.f32 %v1877, %v2932
      %v2974 = vadd.f32 %v1878, %v2932
      %v2975 = vadd.f32 %v1879, %v2932
      %v2976 = vadd.f32 %v1880, %v2932
      %v2977 = vadd.f32 %v1881, %v2932
      %v2978 = vadd.f32 %v1882, %v2932
      %v2979 = vadd.f32 %v1883, %v2932
      %v2980 = vadd.f32 %v1884, %v2932
      %v2981 = vadd.f32 %v1885, %v2932
      %v2982 = vadd.f32 %v1886, %v2932
      %v2983 = vadd.f32 %v1887, %v2932
      %v2984 = vadd.f32 %v1888, %v2932
      %v2985 = vadd.f32 %v1889, %v2932
      %v2986 = vadd.f32 %v1890, %v2932
      %v2987 = vadd.f32 %v1891, %v2932
      %v2988 = vadd.f32 %v1892, %v2932
      %v2989 = vadd.f32 %v1893, %v2932
      %v2990 = vadd.f32 %v1894, %v2932
      %v2991 = vadd.f32 %v1895, %v2932
      %v2992 = vadd.f32 %v1896, %v2932
      %v2993 = vadd.f32 %v1897, %v2932
      %v2994 = vadd.f32 %v1898, %v2932
      %v2995 = vadd.f32 %v1899, %v2932
      %v2996 = vadd.f32 %v1900, %v2932
      %v2997 = vadd.f32 %v1901, %v2932
      %v2998 = vadd.f32 %v1902, %v2936
      %v2999 = vadd.f32 %v1903, %v2936
      %v3000 = vadd.f32 %v1904, %v2936
      %v3001 = vadd.f32 %v1905, %v2936
      %v3002 = vadd.f32 %v1906, %v2936
      %v3003 = vadd.f32 %v1907, %v2936
      %v3004 = vadd.f32 %v1908, %v2936
      %v3005 = vadd.f32 %v1909, %v2936
      %v3006 = vadd.f32 %v1910, %v2936
      %v3007 = vadd.f32 %v1911, %v2936
      %v3008 = vadd.f32 %v1912, %v2936
      %v3009 = vadd.f32 %v1913, %v2936
      %v3010 = vadd.f32 %v1914, %v2936
      %v3011 = vadd.f32 %v1915, %v2936
      %v3012 = vadd.f32 %v1916, %v2936
      %v3013 = vadd.f32 %v1917, %v2936
      %v3014 = vadd.f32 %v1918, %v2936
      %v3015 = vadd.f32 %v1919, %v2936
      %v3016 = vadd.f32 %v1920, %v2936
      %v3017 = vadd.f32 %v1921, %v2936
      %v3018 = vadd.f32 %v1922, %v2936
      %v3019 = vadd.f32 %v1923, %v2936
      %v3020 = vadd.f32 %v1924, %v2936
      %v3021 = vadd.f32 %v1925, %v2936
      %v3022 = vadd.f32 %v1926, %v2936
      %v3023 = vadd.f32 %v1927, %v2936
      %v3024 = vadd.f32 %v1928, %v2936
      %v3025 = vadd.f32 %v1929, %v2936
      %v3026 = vadd.f32 %v1930, %v2936
      %v3027 = vadd.f32 %v1931, %v2936
      %v3028 = vadd.f32 %v1932, %v2936
      %v3029 = vadd.f32 %v1933, %v2936
      %v3030 = vadd.f32 %v1934, %v2940
      %v3031 = vadd.f32 %v1935, %v2940
      %v3032 = vadd.f32 %v1936, %v2940
      %v3033 = vadd.f32 %v1937, %v2940
      %v3034 = vadd.f32 %v1938, %v2940
      %v3035 = vadd.f32 %v1939, %v2940
      %v3036 = vadd.f32 %v1940, %v2940
      %v3037 = vadd.f32 %v1941, %v2940
      %v3038 = vadd.f32 %v1942, %v2940
      %v3039 = vadd.f32 %v1943, %v2940
      %v3040 = vadd.f32 %v1944, %v2940
      %v3041 = vadd.f32 %v1945, %v2940
      %v3042 = vadd.f32 %v1946, %v2940
      %v3043 = vadd.f32 %v1947, %v2940
      %v3044 = vadd.f32 %v1948, %v2940
      %v3045 = vadd.f32 %v1949, %v2940
      %v3046 = vadd.f32 %v1950, %v2940
      %v3047 = vadd.f32 %v1951, %v2940
      %v3048 = vadd.f32 %v1952, %v2940
      %v3049 = vadd.f32 %v1953, %v2940
      %v3050 = vadd.f32 %v1954, %v2940
      %v3051 = vadd.f32 %v1955, %v2940
      %v3052 = vadd.f32 %v1956, %v2940
      %v3053 = vadd.f32 %v1957, %v2940
      %v3054 = vadd.f32 %v1958, %v2940
      %v3055 = vadd.f32 %v1959, %v2940
      %v3056 = vadd.f32 %v1960, %v2940
      %v3057 = vadd.f32 %v1961, %v2940
      %v3058 = vadd.f32 %v1962, %v2940
      %v3059 = vadd.f32 %v1963, %v2940
      %v3060 = vadd.f32 %v1964, %v2940
      %v3061 = vadd.f32 %v1965, %v2940
      %v3062 = vadd.f32 %v1966, %v2944
      %v3063 = vadd.f32 %v1967, %v2944
      %v3064 = vadd.f32 %v1968, %v2944
      %v3065 = vadd.f32 %v1969, %v2944
      %v3066 = vadd.f32 %v1970, %v2944
      %v3067 = vadd.f32 %v1971, %v2944
      %v3068 = vadd.f32 %v1972, %v2944
      %v3069 = vadd.f32 %v1973, %v2944
      %v3070 = vadd.f32 %v1974, %v2944
      %v3071 = vadd.f32 %v1975, %v2944
      %v3072 = vadd.f32 %v1976, %v2944
      %v3073 = vadd.f32 %v1977, %v2944
      %v3074 = vadd.f32 %v1978, %v2944
      %v3075 = vadd.f32 %v1979, %v2944
      %v3076 = vadd.f32 %v1980, %v2944
      %v3077 = vadd.f32 %v1981, %v2944
      %v3078 = vadd.f32 %v1982, %v2944
      %v3079 = vadd.f32 %v1983, %v2944
      %v3080 = vadd.f32 %v1984, %v2944
      %v3081 = vadd.f32 %v1985, %v2944
      %v3082 = vadd.f32 %v1986, %v2944
      %v3083 = vadd.f32 %v1987, %v2944
      %v3084 = vadd.f32 %v1988, %v2944
      %v3085 = vadd.f32 %v1989, %v2944
      %v3086 = vadd.f32 %v1990, %v2944
      %v3087 = vadd.f32 %v1991, %v2944
      %v3088 = vadd.f32 %v1992, %v2944
      %v3089 = vadd.f32 %v1993, %v2944
      %v3090 = vadd.f32 %v1994, %v2944
      %v3091 = vadd.f32 %v1995, %v2944
      %v3092 = vadd.f32 %v1996, %v2944
      %v3093 = vadd.f32 %v1997, %v2944
      %v3094 = vadd.f32 %v1998, %v2948
      %v3095 = vadd.f32 %v1999, %v2948
      %v3096 = vadd.f32 %v2000, %v2948
      %v3097 = vadd.f32 %v2001, %v2948
      %v3098 = vadd.f32 %v2002, %v2948
      %v3099 = vadd.f32 %v2003, %v2948
      %v3100 = vadd.f32 %v2004, %v2948
      %v3101 = vadd.f32 %v2005, %v2948
      %v3102 = vadd.f32 %v2006, %v2948
      %v3103 = vadd.f32 %v2007, %v2948
      %v3104 = vadd.f32 %v2008, %v2948
      %v3105 = vadd.f32 %v2009, %v2948
      %v3106 = vadd.f32 %v2010, %v2948
      %v3107 = vadd.f32 %v2011, %v2948
      %v3108 = vadd.f32 %v2012, %v2948
      %v3109 = vadd.f32 %v2013, %v2948
      %v3110 = vadd.f32 %v2014, %v2948
      %v3111 = vadd.f32 %v2015, %v2948
      %v3112 = vadd.f32 %v2016, %v2948
      %v3113 = vadd.f32 %v2017, %v2948
      %v3114 = vadd.f32 %v2018, %v2948
      %v3115 = vadd.f32 %v2019, %v2948
      %v3116 = vadd.f32 %v2020, %v2948
      %v3117 = vadd.f32 %v2021, %v2948
      %v3118 = vadd.f32 %v2022, %v2948
      %v3119 = vadd.f32 %v2023, %v2948
      %v3120 = vadd.f32 %v2024, %v2948
      %v3121 = vadd.f32 %v2025, %v2948
      %v3122 = vadd.f32 %v2026, %v2948
      %v3123 = vadd.f32 %v2027, %v2948
      %v3124 = vadd.f32 %v2028, %v2948
      %v3125 = vadd.f32 %v2029, %v2948
      %v3126 = vadd.f32 %v2030, %v2952
      %v3127 = vadd.f32 %v2031, %v2952
      %v3128 = vadd.f32 %v2032, %v2952
      %v3129 = vadd.f32 %v2033, %v2952
      %v3130 = vadd.f32 %v2034, %v2952
      %v3131 = vadd.f32 %v2035, %v2952
      %v3132 = vadd.f32 %v2036, %v2952
      %v3133 = vadd.f32 %v2037, %v2952
      %v3134 = vadd.f32 %v2038, %v2952
      %v3135 = vadd.f32 %v2039, %v2952
      %v3136 = vadd.f32 %v2040, %v2952
      %v3137 = vadd.f32 %v2041, %v2952
      %v3138 = vadd.f32 %v2042, %v2952
      %v3139 = vadd.f32 %v2043, %v2952
      %v3140 = vadd.f32 %v2044, %v2952
      %v3141 = vadd.f32 %v2045, %v2952
      %v3142 = vadd.f32 %v2046, %v2952
      %v3143 = vadd.f32 %v2047, %v2952
      %v3144 = vadd.f32 %v2048, %v2952
      %v3145 = vadd.f32 %v2049, %v2952
      %v3146 = vadd.f32 %v2050, %v2952
      %v3147 = vadd.f32 %v2051, %v2952
      %v3148 = vadd.f32 %v2052, %v2952
      %v3149 = vadd.f32 %v2053, %v2952
      %v3150 = vadd.f32 %v2054, %v2952
      %v3151 = vadd.f32 %v2055, %v2952
      %v3152 = vadd.f32 %v2056, %v2952
      %v3153 = vadd.f32 %v2057, %v2952
      %v3154 = vadd.f32 %v2058, %v2952
      %v3155 = vadd.f32 %v2059, %v2952
      %v3156 = vadd.f32 %v2060, %v2952
      %v3157 = vadd.f32 %v2061, %v2952
      %v3158 = vadd.f32 %v2062, %v2956
      %v3159 = vadd.f32 %v2063, %v2956
      %v3160 = vadd.f32 %v2064, %v2956
      %v3161 = vadd.f32 %v2065, %v2956
      %v3162 = vadd.f32 %v2066, %v2956
      %v3163 = vadd.f32 %v2067, %v2956
      %v3164 = vadd.f32 %v2068, %v2956
      %v3165 = vadd.f32 %v2069, %v2956
      %v3166 = vadd.f32 %v2070, %v2956
      %v3167 = vadd.f32 %v2071, %v2956
      %v3168 = vadd.f32 %v2072, %v2956
      %v3169 = vadd.f32 %v2073, %v2956
      %v3170 = vadd.f32 %v2074, %v2956
      %v3171 = vadd.f32 %v2075, %v2956
      %v3172 = vadd.f32 %v2076, %v2956
      %v3173 = vadd.f32 %v2077, %v2956
      %v3174 = vadd.f32 %v2078, %v2956
      %v3175 = vadd.f32 %v2079, %v2956
      %v3176 = vadd.f32 %v2080, %v2956
      %v3177 = vadd.f32 %v2081, %v2956
      %v3178 = vadd.f32 %v2082, %v2956
      %v3179 = vadd.f32 %v2083, %v2956
      %v3180 = vadd.f32 %v2084, %v2956
      %v3181 = vadd.f32 %v2085, %v2956
      %v3182 = vadd.f32 %v2086, %v2956
      %v3183 = vadd.f32 %v2087, %v2956
      %v3184 = vadd.f32 %v2088, %v2956
      %v3185 = vadd.f32 %v2089, %v2956
      %v3186 = vadd.f32 %v2090, %v2956
      %v3187 = vadd.f32 %v2091, %v2956
      %v3188 = vadd.f32 %v2092, %v2956
      %v3189 = vadd.f32 %v2093, %v2956
      %v3190 = vadd.f32 %v2094, %v2960
      %v3191 = vadd.f32 %v2095, %v2960
      %v3192 = vadd.f32 %v2096, %v2960
      %v3193 = vadd.f32 %v2097, %v2960
      %v3194 = vadd.f32 %v2098, %v2960
      %v3195 = vadd.f32 %v2099, %v2960
      %v3196 = vadd.f32 %v2100, %v2960
      %v3197 = vadd.f32 %v2101, %v2960
      %v3198 = vadd.f32 %v2102, %v2960
      %v3199 = vadd.f32 %v2103, %v2960
      %v3200 = vadd.f32 %v2104, %v2960
      %v3201 = vadd.f32 %v2105, %v2960
      %v3202 = vadd.f32 %v2106, %v2960
      %v3203 = vadd.f32 %v2107, %v2960
      %v3204 = vadd.f32 %v2108, %v2960
      %v3205 = vadd.f32 %v2109, %v2960
      %v3206 = vadd.f32 %v2110, %v2960
      %v3207 = vadd.f32 %v2111, %v2960
      %v3208 = vadd.f32 %v2112, %v2960
      %v3209 = vadd.f32 %v2113, %v2960
      %v3210 = vadd.f32 %v2114, %v2960
      %v3211 = vadd.f32 %v2115, %v2960
      %v3212 = vadd.f32 %v2116, %v2960
      %v3213 = vadd.f32 %v2117, %v2960
      %v3214 = vadd.f32 %v2118, %v2960
      %v3215 = vadd.f32 %v2119, %v2960
      %v3216 = vadd.f32 %v2120, %v2960
      %v3217 = vadd.f32 %v2121, %v2960
      %v3218 = vadd.f32 %v2122, %v2960
      %v3219 = vadd.f32 %v2123, %v2960
      %v3220 = vadd.f32 %v2124, %v2960
      %v3221 = vadd.f32 %v2125, %v2960
      %v3222 = vadd.f32 %v2126, %v2964
      %v3223 = vadd.f32 %v2127, %v2964
      %v3224 = vadd.f32 %v2128, %v2964
      %v3225 = vadd.f32 %v2129, %v2964
      %v3226 = vadd.f32 %v2130, %v2964
      %v3227 = vadd.f32 %v2131, %v2964
      %v3228 = vadd.f32 %v2132, %v2964
      %v3229 = vadd.f32 %v2133, %v2964
      %v3230 = vadd.f32 %v2134, %v2964
      %v3231 = vadd.f32 %v2135, %v2964
      %v3232 = vadd.f32 %v2136, %v2964
      %v3233 = vadd.f32 %v2137, %v2964
      %v3234 = vadd.f32 %v2138, %v2964
      %v3235 = vadd.f32 %v2139, %v2964
      %v3236 = vadd.f32 %v2140, %v2964
      %v3237 = vadd.f32 %v2141, %v2964
      %v3238 = vadd.f32 %v2142, %v2964
      %v3239 = vadd.f32 %v2143, %v2964
      %v3240 = vadd.f32 %v2144, %v2964
      %v3241 = vadd.f32 %v2145, %v2964
      %v3242 = vadd.f32 %v2146, %v2964
      %v3243 = vadd.f32 %v2147, %v2964
      %v3244 = vadd.f32 %v2148, %v2964
      %v3245 = vadd.f32 %v2149, %v2964
      %v3246 = vadd.f32 %v2150, %v2964
      %v3247 = vadd.f32 %v2151, %v2964
      %v3248 = vadd.f32 %v2152, %v2964
      %v3249 = vadd.f32 %v2153, %v2964
      %v3250 = vadd.f32 %v2154, %v2964
      %v3251 = vadd.f32 %v2155, %v2964
      %v3252 = vadd.f32 %v2156, %v2964
      %v3253 = vadd.f32 %v2157, %v2964
      %v3254 = vmax.f32 %v2966, %v2998
      %v3255 = vmax.f32 %v3254, %v3030
      %v3256 = vmax.f32 %v3255, %v3062
      %v3257 = vmax.f32 %v3256, %v3094
      %v3258 = vmax.f32 %v3257, %v3126
      %v3259 = vmax.f32 %v3258, %v3158
      %v3260 = vmax.f32 %v3259, %v3190
      %v3261 = vmax.f32 %v3260, %v3222
      %v3262 = vrot.slane %v3261, 4
      %v3263 = vmax.f32 %v3261, %v3262
      %v3264 = vrot.slane %v3263, 2
      %v3265 = vmax.f32 %v3263, %v3264
      %v3266 = vrot.slane %v3265, 1
      %v3267 = vmax.f32 %v3265, %v3266
      %v3268 = vmax.f32 %v2967, %v2999
      %v3269 = vmax.f32 %v3268, %v3031
      %v3270 = vmax.f32 %v3269, %v3063
      %v3271 = vmax.f32 %v3270, %v3095
      %v3272 = vmax.f32 %v3271, %v3127
      %v3273 = vmax.f32 %v3272, %v3159
      %v3274 = vmax.f32 %v3273, %v3191
      %v3275 = vmax.f32 %v3274, %v3223
      %v3276 = vrot.slane %v3275, 4
      %v3277 = vmax.f32 %v3275, %v3276
      %v3278 = vrot.slane %v3277, 2
      %v3279 = vmax.f32 %v3277, %v3278
      %v3280 = vrot.slane %v3279, 1
      %v3281 = vmax.f32 %v3279, %v3280
      %v3282 = vmax.f32 %v2968, %v3000
      %v3283 = vmax.f32 %v3282, %v3032
      %v3284 = vmax.f32 %v3283, %v3064
      %v3285 = vmax.f32 %v3284, %v3096
      %v3286 = vmax.f32 %v3285, %v3128
      %v3287 = vmax.f32 %v3286, %v3160
      %v3288 = vmax.f32 %v3287, %v3192
      %v3289 = vmax.f32 %v3288, %v3224
      %v3290 = vrot.slane %v3289, 4
      %v3291 = vmax.f32 %v3289, %v3290
      %v3292 = vrot.slane %v3291, 2
      %v3293 = vmax.f32 %v3291, %v3292
      %v3294 = vrot.slane %v3293, 1
      %v3295 = vmax.f32 %v3293, %v3294
      %v3296 = vmax.f32 %v2969, %v3001
      %v3297 = vmax.f32 %v3296, %v3033
      %v3298 = vmax.f32 %v3297, %v3065
      %v3299 = vmax.f32 %v3298, %v3097
      %v3300 = vmax.f32 %v3299, %v3129
      %v3301 = vmax.f32 %v3300, %v3161
      %v3302 = vmax.f32 %v3301, %v3193
      %v3303 = vmax.f32 %v3302, %v3225
      %v3304 = vrot.slane %v3303, 4
      %v3305 = vmax.f32 %v3303, %v3304
      %v3306 = vrot.slane %v3305, 2
      %v3307 = vmax.f32 %v3305, %v3306
      %v3308 = vrot.slane %v3307, 1
      %v3309 = vmax.f32 %v3307, %v3308
      %v3310 = vmax.f32 %v2970, %v3002
      %v3311 = vmax.f32 %v3310, %v3034
      %v3312 = vmax.f32 %v3311, %v3066
      %v3313 = vmax.f32 %v3312, %v3098
      %v3314 = vmax.f32 %v3313, %v3130
      %v3315 = vmax.f32 %v3314, %v3162
      %v3316 = vmax.f32 %v3315, %v3194
      %v3317 = vmax.f32 %v3316, %v3226
      %v3318 = vrot.slane %v3317, 4
      %v3319 = vmax.f32 %v3317, %v3318
      %v3320 = vrot.slane %v3319, 2
      %v3321 = vmax.f32 %v3319, %v3320
      %v3322 = vrot.slane %v3321, 1
      %v3323 = vmax.f32 %v3321, %v3322
      %v3324 = vmax.f32 %v2971, %v3003
      %v3325 = vmax.f32 %v3324, %v3035
      %v3326 = vmax.f32 %v3325, %v3067
      %v3327 = vmax.f32 %v3326, %v3099
      %v3328 = vmax.f32 %v3327, %v3131
      %v3329 = vmax.f32 %v3328, %v3163
      %v3330 = vmax.f32 %v3329, %v3195
      %v3331 = vmax.f32 %v3330, %v3227
      %v3332 = vrot.slane %v3331, 4
      %v3333 = vmax.f32 %v3331, %v3332
      %v3334 = vrot.slane %v3333, 2
      %v3335 = vmax.f32 %v3333, %v3334
      %v3336 = vrot.slane %v3335, 1
      %v3337 = vmax.f32 %v3335, %v3336
      %v3338 = vmax.f32 %v2972, %v3004
      %v3339 = vmax.f32 %v3338, %v3036
      %v3340 = vmax.f32 %v3339, %v3068
      %v3341 = vmax.f32 %v3340, %v3100
      %v3342 = vmax.f32 %v3341, %v3132
      %v3343 = vmax.f32 %v3342, %v3164
      %v3344 = vmax.f32 %v3343, %v3196
      %v3345 = vmax.f32 %v3344, %v3228
      %v3346 = vrot.slane %v3345, 4
      %v3347 = vmax.f32 %v3345, %v3346
      %v3348 = vrot.slane %v3347, 2
      %v3349 = vmax.f32 %v3347, %v3348
      %v3350 = vrot.slane %v3349, 1
      %v3351 = vmax.f32 %v3349, %v3350
      %v3352 = vmax.f32 %v2973, %v3005
      %v3353 = vmax.f32 %v3352, %v3037
      %v3354 = vmax.f32 %v3353, %v3069
      %v3355 = vmax.f32 %v3354, %v3101
      %v3356 = vmax.f32 %v3355, %v3133
      %v3357 = vmax.f32 %v3356, %v3165
      %v3358 = vmax.f32 %v3357, %v3197
      %v3359 = vmax.f32 %v3358, %v3229
      %v3360 = vrot.slane %v3359, 4
      %v3361 = vmax.f32 %v3359, %v3360
      %v3362 = vrot.slane %v3361, 2
      %v3363 = vmax.f32 %v3361, %v3362
      %v3364 = vrot.slane %v3363, 1
      %v3365 = vmax.f32 %v3363, %v3364
      %v3366 = vmax.f32 %v2974, %v3006
      %v3367 = vmax.f32 %v3366, %v3038
      %v3368 = vmax.f32 %v3367, %v3070
      %v3369 = vmax.f32 %v3368, %v3102
      %v3370 = vmax.f32 %v3369, %v3134
      %v3371 = vmax.f32 %v3370, %v3166
      %v3372 = vmax.f32 %v3371, %v3198
      %v3373 = vmax.f32 %v3372, %v3230
      %v3374 = vrot.slane %v3373, 4
      %v3375 = vmax.f32 %v3373, %v3374
      %v3376 = vrot.slane %v3375, 2
      %v3377 = vmax.f32 %v3375, %v3376
      %v3378 = vrot.slane %v3377, 1
      %v3379 = vmax.f32 %v3377, %v3378
      %v3380 = vmax.f32 %v2975, %v3007
      %v3381 = vmax.f32 %v3380, %v3039
      %v3382 = vmax.f32 %v3381, %v3071
      %v3383 = vmax.f32 %v3382, %v3103
      %v3384 = vmax.f32 %v3383, %v3135
      %v3385 = vmax.f32 %v3384, %v3167
      %v3386 = vmax.f32 %v3385, %v3199
      %v3387 = vmax.f32 %v3386, %v3231
      %v3388 = vrot.slane %v3387, 4
      %v3389 = vmax.f32 %v3387, %v3388
      %v3390 = vrot.slane %v3389, 2
      %v3391 = vmax.f32 %v3389, %v3390
      %v3392 = vrot.slane %v3391, 1
      %v3393 = vmax.f32 %v3391, %v3392
      %v3394 = vmax.f32 %v2976, %v3008
      %v3395 = vmax.f32 %v3394, %v3040
      %v3396 = vmax.f32 %v3395, %v3072
      %v3397 = vmax.f32 %v3396, %v3104
      %v3398 = vmax.f32 %v3397, %v3136
      %v3399 = vmax.f32 %v3398, %v3168
      %v3400 = vmax.f32 %v3399, %v3200
      %v3401 = vmax.f32 %v3400, %v3232
      %v3402 = vrot.slane %v3401, 4
      %v3403 = vmax.f32 %v3401, %v3402
      %v3404 = vrot.slane %v3403, 2
      %v3405 = vmax.f32 %v3403, %v3404
      %v3406 = vrot.slane %v3405, 1
      %v3407 = vmax.f32 %v3405, %v3406
      %v3408 = vmax.f32 %v2977, %v3009
      %v3409 = vmax.f32 %v3408, %v3041
      %v3410 = vmax.f32 %v3409, %v3073
      %v3411 = vmax.f32 %v3410, %v3105
      %v3412 = vmax.f32 %v3411, %v3137
      %v3413 = vmax.f32 %v3412, %v3169
      %v3414 = vmax.f32 %v3413, %v3201
      %v3415 = vmax.f32 %v3414, %v3233
      %v3416 = vrot.slane %v3415, 4
      %v3417 = vmax.f32 %v3415, %v3416
      %v3418 = vrot.slane %v3417, 2
      %v3419 = vmax.f32 %v3417, %v3418
      %v3420 = vrot.slane %v3419, 1
      %v3421 = vmax.f32 %v3419, %v3420
      %v3422 = vmax.f32 %v2978, %v3010
      %v3423 = vmax.f32 %v3422, %v3042
      %v3424 = vmax.f32 %v3423, %v3074
      %v3425 = vmax.f32 %v3424, %v3106
      %v3426 = vmax.f32 %v3425, %v3138
      %v3427 = vmax.f32 %v3426, %v3170
      %v3428 = vmax.f32 %v3427, %v3202
      %v3429 = vmax.f32 %v3428, %v3234
      %v3430 = vrot.slane %v3429, 4
      %v3431 = vmax.f32 %v3429, %v3430
      %v3432 = vrot.slane %v3431, 2
      %v3433 = vmax.f32 %v3431, %v3432
      %v3434 = vrot.slane %v3433, 1
      %v3435 = vmax.f32 %v3433, %v3434
      %v3436 = vmax.f32 %v2979, %v3011
      %v3437 = vmax.f32 %v3436, %v3043
      %v3438 = vmax.f32 %v3437, %v3075
      %v3439 = vmax.f32 %v3438, %v3107
      %v3440 = vmax.f32 %v3439, %v3139
      %v3441 = vmax.f32 %v3440, %v3171
      %v3442 = vmax.f32 %v3441, %v3203
      %v3443 = vmax.f32 %v3442, %v3235
      %v3444 = vrot.slane %v3443, 4
      %v3445 = vmax.f32 %v3443, %v3444
      %v3446 = vrot.slane %v3445, 2
      %v3447 = vmax.f32 %v3445, %v3446
      %v3448 = vrot.slane %v3447, 1
      %v3449 = vmax.f32 %v3447, %v3448
      %v3450 = vmax.f32 %v2980, %v3012
      %v3451 = vmax.f32 %v3450, %v3044
      %v3452 = vmax.f32 %v3451, %v3076
      %v3453 = vmax.f32 %v3452, %v3108
      %v3454 = vmax.f32 %v3453, %v3140
      %v3455 = vmax.f32 %v3454, %v3172
      %v3456 = vmax.f32 %v3455, %v3204
      %v3457 = vmax.f32 %v3456, %v3236
      %v3458 = vrot.slane %v3457, 4
      %v3459 = vmax.f32 %v3457, %v3458
      %v3460 = vrot.slane %v3459, 2
      %v3461 = vmax.f32 %v3459, %v3460
      %v3462 = vrot.slane %v3461, 1
      %v3463 = vmax.f32 %v3461, %v3462
      %v3464 = vmax.f32 %v2981, %v3013
      %v3465 = vmax.f32 %v3464, %v3045
      %v3466 = vmax.f32 %v3465, %v3077
      %v3467 = vmax.f32 %v3466, %v3109
      %v3468 = vmax.f32 %v3467, %v3141
      %v3469 = vmax.f32 %v3468, %v3173
      %v3470 = vmax.f32 %v3469, %v3205
      %v3471 = vmax.f32 %v3470, %v3237
      %v3472 = vrot.slane %v3471, 4
      %v3473 = vmax.f32 %v3471, %v3472
      %v3474 = vrot.slane %v3473, 2
      %v3475 = vmax.f32 %v3473, %v3474
      %v3476 = vrot.slane %v3475, 1
      %v3477 = vmax.f32 %v3475, %v3476
      %v3478 = vmax.f32 %v2982, %v3014
      %v3479 = vmax.f32 %v3478, %v3046
      %v3480 = vmax.f32 %v3479, %v3078
      %v3481 = vmax.f32 %v3480, %v3110
      %v3482 = vmax.f32 %v3481, %v3142
      %v3483 = vmax.f32 %v3482, %v3174
      %v3484 = vmax.f32 %v3483, %v3206
      %v3485 = vmax.f32 %v3484, %v3238
      %v3486 = vrot.slane %v3485, 4
      %v3487 = vmax.f32 %v3485, %v3486
      %v3488 = vrot.slane %v3487, 2
      %v3489 = vmax.f32 %v3487, %v3488
      %v3490 = vrot.slane %v3489, 1
      %v3491 = vmax.f32 %v3489, %v3490
      %v3492 = vmax.f32 %v2983, %v3015
      %v3493 = vmax.f32 %v3492, %v3047
      %v3494 = vmax.f32 %v3493, %v3079
      %v3495 = vmax.f32 %v3494, %v3111
      %v3496 = vmax.f32 %v3495, %v3143
      %v3497 = vmax.f32 %v3496, %v3175
      %v3498 = vmax.f32 %v3497, %v3207
      %v3499 = vmax.f32 %v3498, %v3239
      %v3500 = vrot.slane %v3499, 4
      %v3501 = vmax.f32 %v3499, %v3500
      %v3502 = vrot.slane %v3501, 2
      %v3503 = vmax.f32 %v3501, %v3502
      %v3504 = vrot.slane %v3503, 1
      %v3505 = vmax.f32 %v3503, %v3504
      %v3506 = vmax.f32 %v2984, %v3016
      %v3507 = vmax.f32 %v3506, %v3048
      %v3508 = vmax.f32 %v3507, %v3080
      %v3509 = vmax.f32 %v3508, %v3112
      %v3510 = vmax.f32 %v3509, %v3144
      %v3511 = vmax.f32 %v3510, %v3176
      %v3512 = vmax.f32 %v3511, %v3208
      %v3513 = vmax.f32 %v3512, %v3240
      %v3514 = vrot.slane %v3513, 4
      %v3515 = vmax.f32 %v3513, %v3514
      %v3516 = vrot.slane %v3515, 2
      %v3517 = vmax.f32 %v3515, %v3516
      %v3518 = vrot.slane %v3517, 1
      %v3519 = vmax.f32 %v3517, %v3518
      %v3520 = vmax.f32 %v2985, %v3017
      %v3521 = vmax.f32 %v3520, %v3049
      %v3522 = vmax.f32 %v3521, %v3081
      %v3523 = vmax.f32 %v3522, %v3113
      %v3524 = vmax.f32 %v3523, %v3145
      %v3525 = vmax.f32 %v3524, %v3177
      %v3526 = vmax.f32 %v3525, %v3209
      %v3527 = vmax.f32 %v3526, %v3241
      %v3528 = vrot.slane %v3527, 4
      %v3529 = vmax.f32 %v3527, %v3528
      %v3530 = vrot.slane %v3529, 2
      %v3531 = vmax.f32 %v3529, %v3530
      %v3532 = vrot.slane %v3531, 1
      %v3533 = vmax.f32 %v3531, %v3532
      %v3534 = vmax.f32 %v2986, %v3018
      %v3535 = vmax.f32 %v3534, %v3050
      %v3536 = vmax.f32 %v3535, %v3082
      %v3537 = vmax.f32 %v3536, %v3114
      %v3538 = vmax.f32 %v3537, %v3146
      %v3539 = vmax.f32 %v3538, %v3178
      %v3540 = vmax.f32 %v3539, %v3210
      %v3541 = vmax.f32 %v3540, %v3242
      %v3542 = vrot.slane %v3541, 4
      %v3543 = vmax.f32 %v3541, %v3542
      %v3544 = vrot.slane %v3543, 2
      %v3545 = vmax.f32 %v3543, %v3544
      %v3546 = vrot.slane %v3545, 1
      %v3547 = vmax.f32 %v3545, %v3546
      %v3548 = vmax.f32 %v2987, %v3019
      %v3549 = vmax.f32 %v3548, %v3051
      %v3550 = vmax.f32 %v3549, %v3083
      %v3551 = vmax.f32 %v3550, %v3115
      %v3552 = vmax.f32 %v3551, %v3147
      %v3553 = vmax.f32 %v3552, %v3179
      %v3554 = vmax.f32 %v3553, %v3211
      %v3555 = vmax.f32 %v3554, %v3243
      %v3556 = vrot.slane %v3555, 4
      %v3557 = vmax.f32 %v3555, %v3556
      %v3558 = vrot.slane %v3557, 2
      %v3559 = vmax.f32 %v3557, %v3558
      %v3560 = vrot.slane %v3559, 1
      %v3561 = vmax.f32 %v3559, %v3560
      %v3562 = vmax.f32 %v2988, %v3020
      %v3563 = vmax.f32 %v3562, %v3052
      %v3564 = vmax.f32 %v3563, %v3084
      %v3565 = vmax.f32 %v3564, %v3116
      %v3566 = vmax.f32 %v3565, %v3148
      %v3567 = vmax.f32 %v3566, %v3180
      %v3568 = vmax.f32 %v3567, %v3212
      %v3569 = vmax.f32 %v3568, %v3244
      %v3570 = vrot.slane %v3569, 4
      %v3571 = vmax.f32 %v3569, %v3570
      %v3572 = vrot.slane %v3571, 2
      %v3573 = vmax.f32 %v3571, %v3572
      %v3574 = vrot.slane %v3573, 1
      %v3575 = vmax.f32 %v3573, %v3574
      %v3576 = vmax.f32 %v2989, %v3021
      %v3577 = vmax.f32 %v3576, %v3053
      %v3578 = vmax.f32 %v3577, %v3085
      %v3579 = vmax.f32 %v3578, %v3117
      %v3580 = vmax.f32 %v3579, %v3149
      %v3581 = vmax.f32 %v3580, %v3181
      %v3582 = vmax.f32 %v3581, %v3213
      %v3583 = vmax.f32 %v3582, %v3245
      %v3584 = vrot.slane %v3583, 4
      %v3585 = vmax.f32 %v3583, %v3584
      %v3586 = vrot.slane %v3585, 2
      %v3587 = vmax.f32 %v3585, %v3586
      %v3588 = vrot.slane %v3587, 1
      %v3589 = vmax.f32 %v3587, %v3588
      %v3590 = vmax.f32 %v2990, %v3022
      %v3591 = vmax.f32 %v3590, %v3054
      %v3592 = vmax.f32 %v3591, %v3086
      %v3593 = vmax.f32 %v3592, %v3118
      %v3594 = vmax.f32 %v3593, %v3150
      %v3595 = vmax.f32 %v3594, %v3182
      %v3596 = vmax.f32 %v3595, %v3214
      %v3597 = vmax.f32 %v3596, %v3246
      %v3598 = vrot.slane %v3597, 4
      %v3599 = vmax.f32 %v3597, %v3598
      %v3600 = vrot.slane %v3599, 2
      %v3601 = vmax.f32 %v3599, %v3600
      %v3602 = vrot.slane %v3601, 1
      %v3603 = vmax.f32 %v3601, %v3602
      %v3604 = vmax.f32 %v2991, %v3023
      %v3605 = vmax.f32 %v3604, %v3055
      %v3606 = vmax.f32 %v3605, %v3087
      %v3607 = vmax.f32 %v3606, %v3119
      %v3608 = vmax.f32 %v3607, %v3151
      %v3609 = vmax.f32 %v3608, %v3183
      %v3610 = vmax.f32 %v3609, %v3215
      %v3611 = vmax.f32 %v3610, %v3247
      %v3612 = vrot.slane %v3611, 4
      %v3613 = vmax.f32 %v3611, %v3612
      %v3614 = vrot.slane %v3613, 2
      %v3615 = vmax.f32 %v3613, %v3614
      %v3616 = vrot.slane %v3615, 1
      %v3617 = vmax.f32 %v3615, %v3616
      %v3618 = vmax.f32 %v2992, %v3024
      %v3619 = vmax.f32 %v3618, %v3056
      %v3620 = vmax.f32 %v3619, %v3088
      %v3621 = vmax.f32 %v3620, %v3120
      %v3622 = vmax.f32 %v3621, %v3152
      %v3623 = vmax.f32 %v3622, %v3184
      %v3624 = vmax.f32 %v3623, %v3216
      %v3625 = vmax.f32 %v3624, %v3248
      %v3626 = vrot.slane %v3625, 4
      %v3627 = vmax.f32 %v3625, %v3626
      %v3628 = vrot.slane %v3627, 2
      %v3629 = vmax.f32 %v3627, %v3628
      %v3630 = vrot.slane %v3629, 1
      %v3631 = vmax.f32 %v3629, %v3630
      %v3632 = vmax.f32 %v2993, %v3025
      %v3633 = vmax.f32 %v3632, %v3057
      %v3634 = vmax.f32 %v3633, %v3089
      %v3635 = vmax.f32 %v3634, %v3121
      %v3636 = vmax.f32 %v3635, %v3153
      %v3637 = vmax.f32 %v3636, %v3185
      %v3638 = vmax.f32 %v3637, %v3217
      %v3639 = vmax.f32 %v3638, %v3249
      %v3640 = vrot.slane %v3639, 4
      %v3641 = vmax.f32 %v3639, %v3640
      %v3642 = vrot.slane %v3641, 2
      %v3643 = vmax.f32 %v3641, %v3642
      %v3644 = vrot.slane %v3643, 1
      %v3645 = vmax.f32 %v3643, %v3644
      %v3646 = vmax.f32 %v2994, %v3026
      %v3647 = vmax.f32 %v3646, %v3058
      %v3648 = vmax.f32 %v3647, %v3090
      %v3649 = vmax.f32 %v3648, %v3122
      %v3650 = vmax.f32 %v3649, %v3154
      %v3651 = vmax.f32 %v3650, %v3186
      %v3652 = vmax.f32 %v3651, %v3218
      %v3653 = vmax.f32 %v3652, %v3250
      %v3654 = vrot.slane %v3653, 4
      %v3655 = vmax.f32 %v3653, %v3654
      %v3656 = vrot.slane %v3655, 2
      %v3657 = vmax.f32 %v3655, %v3656
      %v3658 = vrot.slane %v3657, 1
      %v3659 = vmax.f32 %v3657, %v3658
      %v3660 = vmax.f32 %v2995, %v3027
      %v3661 = vmax.f32 %v3660, %v3059
      %v3662 = vmax.f32 %v3661, %v3091
      %v3663 = vmax.f32 %v3662, %v3123
      %v3664 = vmax.f32 %v3663, %v3155
      %v3665 = vmax.f32 %v3664, %v3187
      %v3666 = vmax.f32 %v3665, %v3219
      %v3667 = vmax.f32 %v3666, %v3251
      %v3668 = vrot.slane %v3667, 4
      %v3669 = vmax.f32 %v3667, %v3668
      %v3670 = vrot.slane %v3669, 2
      %v3671 = vmax.f32 %v3669, %v3670
      %v3672 = vrot.slane %v3671, 1
      %v3673 = vmax.f32 %v3671, %v3672
      %v3674 = vmax.f32 %v2996, %v3028
      %v3675 = vmax.f32 %v3674, %v3060
      %v3676 = vmax.f32 %v3675, %v3092
      %v3677 = vmax.f32 %v3676, %v3124
      %v3678 = vmax.f32 %v3677, %v3156
      %v3679 = vmax.f32 %v3678, %v3188
      %v3680 = vmax.f32 %v3679, %v3220
      %v3681 = vmax.f32 %v3680, %v3252
      %v3682 = vrot.slane %v3681, 4
      %v3683 = vmax.f32 %v3681, %v3682
      %v3684 = vrot.slane %v3683, 2
      %v3685 = vmax.f32 %v3683, %v3684
      %v3686 = vrot.slane %v3685, 1
      %v3687 = vmax.f32 %v3685, %v3686
      %v3688 = vmax.f32 %v2997, %v3029
      %v3689 = vmax.f32 %v3688, %v3061
      %v3690 = vmax.f32 %v3689, %v3093
      %v3691 = vmax.f32 %v3690, %v3125
      %v3692 = vmax.f32 %v3691, %v3157
      %v3693 = vmax.f32 %v3692, %v3189
      %v3694 = vmax.f32 %v3693, %v3221
      %v3695 = vmax.f32 %v3694, %v3253
      %v3696 = vrot.slane %v3695, 4
      %v3697 = vmax.f32 %v3695, %v3696
      %v3698 = vrot.slane %v3697, 2
      %v3699 = vmax.f32 %v3697, %v3698
      %v3700 = vrot.slane %v3699, 1
      %v3701 = vmax.f32 %v3699, %v3700
      %vm3702 = vcmask 1040384
      %v3703 = vsel %vm3702, %v2495, %v3267
      %v3704 = vsel %vm3702, %v2509, %v3281
      %v3705 = vsel %vm3702, %v2523, %v3295
      %v3706 = vsel %vm3702, %v2537, %v3309
      %v3707 = vsel %vm3702, %v2551, %v3323
      %v3708 = vsel %vm3702, %v2565, %v3337
      %v3709 = vsel %vm3702, %v2579, %v3351
      %v3710 = vsel %vm3702, %v2593, %v3365
      %v3711 = vsel %vm3702, %v2607, %v3379
      %v3712 = vsel %vm3702, %v2621, %v3393
      %v3713 = vsel %vm3702, %v2635, %v3407
      %v3714 = vsel %vm3702, %v2649, %v3421
      %v3715 = vsel %vm3702, %v2663, %v3435
      %v3716 = vsel %vm3702, %v2677, %v3449
      %v3717 = vsel %vm3702, %v2691, %v3463
      %v3718 = vsel %vm3702, %v2705, %v3477
      %v3719 = vsel %vm3702, %v2719, %v3491
      %v3720 = vsel %vm3702, %v2733, %v3505
      %v3721 = vsel %vm3702, %v2747, %v3519
      %v3722 = vsel %vm3702, %v2761, %v3533
      %v3723 = vsel %vm3702, %v2775, %v3547
      %v3724 = vsel %vm3702, %v2789, %v3561
      %v3725 = vsel %vm3702, %v2803, %v3575
      %v3726 = vsel %vm3702, %v2817, %v3589
      %v3727 = vsel %vm3702, %v2831, %v3603
      %v3728 = vsel %vm3702, %v2845, %v3617
      %v3729 = vsel %vm3702, %v2859, %v3631
      %v3730 = vsel %vm3702, %v2873, %v3645
      %v3731 = vsel %vm3702, %v2887, %v3659
      %v3732 = vsel %vm3702, %v2901, %v3673
      %v3733 = vsel %vm3702, %v2915, %v3687
      %v3734 = vsel %vm3702, %v2929, %v3701
      %v3735 = vmul.f32 %v3703, 1.442695
      %v3736 = vpow.pop %v3735
      %v3737 = vmul.f32 %v3704, 1.442695
      %v3738 = vpow.pop %v3737
      %v3739 = vmul.f32 %v3705, 1.442695
      %v3740 = vpow.pop %v3739
      %v3741 = vmul.f32 %v3706, 1.442695
      %v3742 = vpow.pop %v3741
      %v3743 = vmul.f32 %v3707, 1.442695
      %v3744 = vpow.pop %v3743
      %v3745 = vmul.f32 %v3708, 1.442695
      %v3746 = vpow.pop %v3745
      %v3747 = vmul.f32 %v3709, 1.442695
      %v3748 = vpow.pop %v3747
      %v3749 = vmul.f32 %v3710, 1.442695
      %v3750 = vpow.pop %v3749
      %v3751 = vmul.f32 %v3711, 1.442695
      %v3752 = vpow.pop %v3751
      %v3753 = vmul.f32 %v3712, 1.442695
      %v3754 = vpow.pop %v3753
      %v3755 = vmul.f32 %v3713, 1.442695
      %v3756 = vpow.pop %v3755
      %v3757 = vmul.f32 %v3714, 1.442695
      %v3758 = vpow.pop %v3757
      %v3759 = vmul.f32 %v3715, 1.442695
      %v3760 = vpow.pop %v3759
      %v3761 = vmul.f32 %v3716, 1.442695
      %v3762 = vpow.pop %v3761
      %v3763 = vmul.f32 %v3717, 1.442695
      %v3764 = vpow.pop %v3763
      %v3765 = vmul.f32 %v3718, 1.442695
      %v3766 = vpow.pop %v3765
      %v3767 = vmul.f32 %v3719, 1.442695
      %v3768 = vpow.pop %v3767
      %v3769 = vmul.f32 %v3720, 1.442695
      %v3770 = vpow.pop %v3769
      %v3771 = vmul.f32 %v3721, 1.442695
      %v3772 = vpow.pop %v3771
      %v3773 = vmul.f32 %v3722, 1.442695
      %v3774 = vpow.pop %v3773
      %v3775 = vmul.f32 %v3723, 1.442695
      %v3776 = vpow.pop %v3775
      %v3777 = vmul.f32 %v3724, 1.442695
      %v3778 = vpow.pop %v3777
      %v3779 = vmul.f32 %v3725, 1.442695
      %v3780 = vpow.pop %v3779
      %v3781 = vmul.f32 %v3726, 1.442695
      %v3782 = vpow.pop %v3781
      %v3783 = vmul.f32 %v3727, 1.442695
      %v3784 = vpow.pop %v3783
      %v3785 = vmul.f32 %v3728, 1.442695
      %v3786 = vpow.pop %v3785
      %v3787 = vmul.f32 %v3729, 1.442695
      %v3788 = vpow.pop %v3787
      %v3789 = vmul.f32 %v3730, 1.442695
      %v3790 = vpow.pop %v3789
      %v3791 = vmul.f32 %v3731, 1.442695
      %v3792 = vpow.pop %v3791
      %v3793 = vmul.f32 %v3732, 1.442695
      %v3794 = vpow.pop %v3793
      %v3795 = vmul.f32 %v3733, 1.442695
      %v3796 = vpow.pop %v3795
      %v3797 = vmul.f32 %v3734, 1.442695
      %v3798 = vpow.pop %v3797
      %v3799 = vmul.f32 %v3736, 2.0
      %v3800 = vmul.f32 %v3738, 2.0
      %v3801 = vmul.f32 %v3740, 2.0
      %v3802 = vmul.f32 %v3742, 2.0
      %v3803 = vmul.f32 %v3744, 2.0
      %v3804 = vmul.f32 %v3746, 2.0
      %v3805 = vmul.f32 %v3748, 2.0
      %v3806 = vmul.f32 %v3750, 2.0
      %v3807 = vmul.f32 %v3752, 2.0
      %v3808 = vmul.f32 %v3754, 2.0
      %v3809 = vmul.f32 %v3756, 2.0
      %v3810 = vmul.f32 %v3758, 2.0
      %v3811 = vmul.f32 %v3760, 2.0
      %v3812 = vmul.f32 %v3762, 2.0
      %v3813 = vmul.f32 %v3764, 2.0
      %v3814 = vmul.f32 %v3766, 2.0
      %v3815 = vmul.f32 %v3768, 2.0
      %v3816 = vmul.f32 %v3770, 2.0
      %v3817 = vmul.f32 %v3772, 2.0
      %v3818 = vmul.f32 %v3774, 2.0
      %v3819 = vmul.f32 %v3776, 2.0
      %v3820 = vmul.f32 %v3778, 2.0
      %v3821 = vmul.f32 %v3780, 2.0
      %v3822 = vmul.f32 %v3782, 2.0
      %v3823 = vmul.f32 %v3784, 2.0
      %v3824 = vmul.f32 %v3786, 2.0
      %v3825 = vmul.f32 %v3788, 2.0
      %v3826 = vmul.f32 %v3790, 2.0
      %v3827 = vmul.f32 %v3792, 2.0
      %v3828 = vmul.f32 %v3794, 2.0
      %v3829 = vmul.f32 %v3796, 2.0
      %v3830 = vmul.f32 %v3798, 2.0
      %v3831 = vsub.f32 %v3799, 1.0
      %v3832 = vsub.f32 %v3800, 1.0
      %v3833 = vsub.f32 %v3801, 1.0
      %v3834 = vsub.f32 %v3802, 1.0
      %v3835 = vsub.f32 %v3803, 1.0
      %v3836 = vsub.f32 %v3804, 1.0
      %v3837 = vsub.f32 %v3805, 1.0
      %v3838 = vsub.f32 %v3806, 1.0
      %v3839 = vsub.f32 %v3807, 1.0
      %v3840 = vsub.f32 %v3808, 1.0
      %v3841 = vsub.f32 %v3809, 1.0
      %v3842 = vsub.f32 %v3810, 1.0
      %v3843 = vsub.f32 %v3811, 1.0
      %v3844 = vsub.f32 %v3812, 1.0
      %v3845 = vsub.f32 %v3813, 1.0
      %v3846 = vsub.f32 %v3814, 1.0
      %v3847 = vsub.f32 %v3815, 1.0
      %v3848 = vsub.f32 %v3816, 1.0
      %v3849 = vsub.f32 %v3817, 1.0
      %v3850 = vsub.f32 %v3818, 1.0
      %v3851 = vsub.f32 %v3819, 1.0
      %v3852 = vsub.f32 %v3820, 1.0
      %v3853 = vsub.f32 %v3821, 1.0
      %v3854 = vsub.f32 %v3822, 1.0
      %v3855 = vsub.f32 %v3823, 1.0
      %v3856 = vsub.f32 %v3824, 1.0
      %v3857 = vsub.f32 %v3825, 1.0
      %v3858 = vsub.f32 %v3826, 1.0
      %v3859 = vsub.f32 %v3827, 1.0
      %v3860 = vsub.f32 %v3828, 1.0
      %v3861 = vsub.f32 %v3829, 1.0
      %v3862 = vsub.f32 %v3830, 1.0
      %v3895 = vrot.slane %v3832, 6
      %v3896 = vrot.slane %v3833, 4
      %v3897 = vrot.slane %v3834, 2
      %v3898 = vrot.slane %v3836, 6
      %v3899 = vrot.slane %v3837, 4
      %v3900 = vrot.slane %v3838, 2
      %v3901 = vrot.slane %v3840, 6
      %v3902 = vrot.slane %v3841, 4
      %v3903 = vrot.slane %v3842, 2
      %v3904 = vrot.slane %v3844, 6
      %v3905 = vrot.slane %v3845, 4
      %v3906 = vrot.slane %v3846, 2
      %v3907 = vrot.slane %v3848, 6
      %v3908 = vrot.slane %v3849, 4
      %v3909 = vrot.slane %v3850, 2
      %v3910 = vrot.slane %v3852, 6
      %v3911 = vrot.slane %v3853, 4
      %v3912 = vrot.slane %v3854, 2
      %v3913 = vrot.slane %v3856, 6
      %v3914 = vrot.slane %v3857, 4
      %v3915 = vrot.slane %v3858, 2
      %v3916 = vrot.slane %v3860, 6
      %v3917 = vrot.slane %v3861, 4
      %v3918 = vrot.slane %v3862, 2
      %vm3919 = vcmask 1041408
      %v3920 = vsel %vm3919, %v3831, %v3895
      %vm3921 = vcmask 1045508
      %v3922 = vsel %vm3921, %v3896, %v3897
      %vm3923 = vcmask 1043456
      %v3924 = vsel %vm3923, %v3920, %v3922
      %v3925 = vsel %vm3919, %v3835, %v3898
      %v3926 = vsel %vm3921, %v3899, %v3900
      %v3927 = vsel %vm3923, %v3925, %v3926
      %v3928 = vsel %vm3919, %v3839, %v3901
      %v3929 = vsel %vm3921, %v3902, %v3903
      %v3930 = vsel %vm3923, %v3928, %v3929
      %v3931 = vsel %vm3919, %v3843, %v3904
      %v3932 = vsel %vm3921, %v3905, %v3906
      %v3933 = vsel %vm3923, %v3931, %v3932
      %v3934 = vsel %vm3919, %v3847, %v3907
      %v3935 = vsel %vm3921, %v3908, %v3909
      %v3936 = vsel %vm3923, %v3934, %v3935
      %v3937 = vsel %vm3919, %v3851, %v3910
      %v3938 = vsel %vm3921, %v3911, %v3912
      %v3939 = vsel %vm3923, %v3937, %v3938
      %v3940 = vsel %vm3919, %v3855, %v3913
      %v3941 = vsel %vm3921, %v3914, %v3915
      %v3942 = vsel %vm3923, %v3940, %v3941
      %v3943 = vsel %vm3919, %v3859, %v3916
      %v3944 = vsel %vm3921, %v3917, %v3918
      %v3945 = vsel %vm3923, %v3943, %v3944
      %3954 = vst [vmem:[%s187] sm:$0xff] %v3924
      %3955 = vst [vmem:[%s187 + $0x8] sm:$0xff] %v3927
      %3956 = vst [vmem:[%s187 + $0x10] sm:$0xff] %v3930
      %3957 = vst [vmem:[%s187 + $0x18] sm:$0xff] %v3933
      %3958 = vst [vmem:[%s187 + $0x20] sm:$0xff] %v3936
      %3959 = vst [vmem:[%s187 + $0x28] sm:$0xff] %v3939
      %3960 = vst [vmem:[%s187 + $0x30] sm:$0xff] %v3942
      %3961 = vst [vmem:[%s187 + $0x38] sm:$0xff] %v3945
      %s3962 = smul.u32 32, %s18
      %p3963 = scmp.lt.s32.totalorder %s17, 5
      %s3964 = scalar_select %p3963, %s17, 5
      %p3965 = scmp.lt.s32.totalorder %s3962, 31
      %s3966 = scalar_select %p3965, %s3962, 31
      %s3967 = smul.addr %s3964, 32
      %s3968 = sadd.s32 %s3966, %s3967
      %s3969 = smul.addr %s3968, 2
      %s3970 = scalar_lea.vmem %s2, %s3969
      // Predicated region
      $region29: #{registration_render.1} parent=27 // pred_check
        %p3971 = pneg %p97
      $region30: #{registration_render.1} parent=27 // pred_check_branch
        %3973 = sbr.rel (%p3971) target = $region32
      $region31: #{registration_render.1} parent=27 // pred_region
        %s3974 = smul.u32 32, %s18
      $region32: #{registration_render.1} parent=27 // pred_fallthru
        _
    $region28: #{registration_render.1} parent=5 // pred_fallthru
      _
    %p3975 = scmp.le.s32.totalorder 2, %s8
    // Predicated region
    $region33: #{registration_render.1} parent=5 // pred_check
      %p3976 = pneg %p3975
    $region34: #{registration_render.1} parent=5 // pred_check_branch
      %3978 = sbr.rel (%p3976) target = $region36
    $region35: #{registration_render.1} parent=5 // pred_region
      %s3979 = ssub.s32 %s8, 2
      // Predicated region
      $region37: #{registration_render.1} parent=35 // pred_check
        %p3980 = pneg %p103
      $region38: #{registration_render.1} parent=35 // pred_check_branch
        %3982 = sbr.rel (%p3980) target = $region40
      $region39: #{registration_render.1} parent=35 // pred_region
        %s3983 = smul.u32 32, %s20
        %p3984 = scmp.lt.s32.totalorder %s19, 5
        %s3985 = scalar_select %p3984, %s19, 5
        %p3986 = scmp.lt.s32.totalorder %s3983, 31
        %s3987 = scalar_select %p3986, %s3983, 31
        %s3988 = smul.addr %s3985, 32
        %s3989 = sadd.s32 %s3987, %s3988
        %s3990 = smul.addr %s3989, 2
        %s3991 = scalar_lea.vmem %s2, %s3990
      $region40: #{registration_render.1} parent=35 // pred_fallthru
        _
    $region36: #{registration_render.1} parent=5 // pred_fallthru
      _
  $region6: #{registration_render.1} parent=0 // loop_footer
    %s12 = sadd.s32 1, %s8
  $region7: #{registration_render.1} parent=0 // loop_footer_branch
    %7 = sbr.rel target = $region3
  $region8: #{registration_render.1} parent=0 // loop_exit
    _

</llo_original>
